<compile_context>
chip_gen: v5e
topology: v5e:2x2
jax: 0.10.0
libtpu: 0.0.40
codegen_flags: <defaults>
</compile_context>

<pallas_src>
import jax
import jax.numpy as jnp
from jax.experimental import pallas as pl
from jax.experimental.pallas import tpu as pltpu

# ---- hyperparameters (small, consistent with the module's structure) ----
src_vocab_size = 16
max_seq_len = 16
d_model = 32
d_ff = 64
d_k = d_v = 8
n_heads = 4
n_layers = 2

# slab packing below relies on these identities (true for this config)
assert n_heads * d_k == d_model and n_heads * d_v == d_model
W_COLS = 3 * n_heads * d_k + n_heads * d_v + 2 * d_ff   # 96 + 32 + 64 + 64 = 256
VEC_COLS = 256


def _layer_norm(x, gamma, beta, eps=1e-5):
    mean = jnp.mean(x, axis=-1, keepdims=True)
    var = jnp.mean((x - mean) ** 2, axis=-1, keepdims=True)
    return (x - mean) * jax.lax.rsqrt(var + eps) * gamma + beta


def make_encoder_kernel(N):
    H = n_heads
    scale = 1.0 / (float(d_k) ** 0.5)

    def split_heads(t):                         # [N, H*d] -> [H, N, d]
        return jnp.transpose(t.reshape(N, H, t.shape[-1] // H), (1, 0, 2))

    def kernel(x_ref, mask_ref, w_ref, vec_ref, out_ref, attn_ref):
        x = x_ref[...]                          # [N, D]  whole batch, flattened
        # additive mask (0 / -1e9): block-diagonal batch mask AND key-pad mask,
        # hoisted broadcast reused by both layers
        mask_h = jnp.broadcast_to(mask_ref[...][None], (H, N, N))

        attn_rows = []
        for l in range(n_layers):               # static unroll: both layers fused in VMEM
            w = w_ref[l]                        # [D, 256] fused weight slab
            wqkv = w[:, 0:96]                   # W_Q | W_K | W_V        [D, 3*H*d_k]
            wo = w[:, 96:128]                   # W_O                    [H*d_v, D]
            w1 = w[:, 128:192]                  # FFN conv1 (ks=1)       [D, d_ff]
            w2t = w[:, 192:256]                 # FFN conv2, transposed  [D, d_ff]
            b_row = vec_ref[l, 0]               # [256] packed biases
            ln_row = vec_ref[l, 1]              # [256] packed LayerNorm params
            bqkv = b_row[0:96]
            bo = b_row[96:128]
            b1 = b_row[128:192]
            b2 = b_row[192:224]
            ln1g = ln_row[0:32]
            ln1b = ln_row[32:64]
            ln2g = ln_row[64:96]
            ln2b = ln_row[96:128]

            # --- MultiHeadAttention: fused QKV projection, one lane-dense matmul ---
            qkv = jnp.dot(x, wqkv, preferred_element_type=jnp.float32) + bqkv[None, :]  # [N, 96]
            qh = split_heads(qkv[:, 0:32])      # [H, N, d_k]
            kh = split_heads(qkv[:, 32:64])
            vh = split_heads(qkv[:, 64:96])

            # whole flattened batch at once: [H, N, N] scores + additive mask
            scores = jnp.einsum('hqc,hkc->hqk', qh, kh,
                                preferred_element_type=jnp.float32) * scale + mask_h
            scores = scores - jnp.max(scores, axis=-1, keepdims=True)
            e = jnp.exp(scores)
            attn = e * pl.reciprocal(jnp.sum(e, axis=-1, keepdims=True),
                                     approx=True)                      # softmax(dim=-1)
            attn_rows.append(attn.reshape(H, N * N))                   # lane-dense store layout

            ctx = jnp.einsum('hqk,hkv->hqv', attn, vh,
                             preferred_element_type=jnp.float32)       # [H, N, d_v]
            ctx2 = jnp.transpose(ctx, (1, 0, 2)).reshape(N, H * d_v)   # concat heads -> [N, 32]
            attn_out = jnp.dot(ctx2, wo, preferred_element_type=jnp.float32) + bo[None, :]
            y = _layer_norm(attn_out + x, ln1g[None, :], ln1b[None, :])  # LN(out + residual)

            # --- PoswiseFeedForwardNet: Conv1d(ks=1) == pointwise linear ---
            hdn = jnp.maximum(
                jnp.dot(y, w1, preferred_element_type=jnp.float32) + b1[None, :], 0.0)
            z = jnp.einsum('nf,df->nd', hdn, w2t,
                           preferred_element_type=jnp.float32) + b2[None, :]
            x = _layer_norm(z + y, ln2g[None, :], ln2b[None, :])         # LN(out + residual)

        out_ref[...] = x
        # single fused, lane-dense (256-lane) store of all attention probs
        attn_ref[...] = jnp.stack(attn_rows, axis=0)   # [L, H, N*N]

    return kernel


def make_encoder_call(N):
    D, L, H = d_model, n_layers, n_heads

    def full(shape):
        nd = len(shape)
        return pl.BlockSpec(shape, lambda i, _nd=nd: (0,) * _nd)

    # TODO(synk): at realistic N, add a leading "parallel" grid axis over
    # (8,128)-aligned row blocks so v7x's two TensorCores are both used and
    # DMA/compute pipeline; at this toy size a single grid step is optimal.
    return pl.pallas_call(
        make_encoder_kernel(N),
        grid=(1,),   # single grid step: whole batch + both layers fused in VMEM
        in_specs=[
            full((N, D)),               # activations (flattened B*S rows)
            full((N, N)),               # additive attention mask (block-diag + key-pad)
            full((L, D, W_COLS)),       # fused weight slab: Wqkv | W_O | W1 | W2^T
            full((L, 2, VEC_COLS)),     # packed biases (row 0) + LayerNorm params (row 1)
        ],
        out_specs=(
            full((N, D)),
            full((L, H, N * N)),        # attention probs, lane-dense last dim
        ),
        out_shape=(
            jax.ShapeDtypeStruct((N, D), jnp.float32),
            jax.ShapeDtypeStruct((L, H, N * N), jnp.float32),
        ),
        compiler_params=pltpu.CompilerParams(dimension_semantics=("arbitrary",)),
    )


def init_params(key):
    def dense(k, shape, fan_in):
        return jax.random.normal(k, shape, jnp.float32) / jnp.sqrt(jnp.float32(fan_in))

    keys = jax.random.split(key, 2 + n_layers)
    params = {
        "src_emb": jax.random.normal(keys[0], (src_vocab_size, d_model), jnp.float32) * 0.02,
        "pos_emb": jax.random.normal(keys[1], (max_seq_len, d_model), jnp.float32) * 0.02,
    }
    wq, wk, wv, wo, w1, w2 = [], [], [], [], [], []
    for li in range(n_layers):
        lk = jax.random.split(keys[2 + li], 6)
        wq.append(dense(lk[0], (n_heads, d_model, d_k), d_model))
        wk.append(dense(lk[1], (n_heads, d_model, d_k), d_model))
        wv.append(dense(lk[2], (n_heads, d_model, d_v), d_model))
        wo.append(dense(lk[3], (n_heads, d_v, d_model), n_heads * d_v))
        w1.append(dense(lk[4], (d_model, d_ff), d_model))
        w2.append(dense(lk[5], (d_ff, d_model), d_ff))
    params.update(
        wq=jnp.stack(wq), wk=jnp.stack(wk), wv=jnp.stack(wv), wo=jnp.stack(wo),
        w1=jnp.stack(w1), w2=jnp.stack(w2),
        # nn.Linear / Conv1d biases (zero-init) and LayerNorm affine params
        bq=jnp.zeros((n_layers, n_heads * d_k), jnp.float32),
        bk=jnp.zeros((n_layers, n_heads * d_k), jnp.float32),
        bv=jnp.zeros((n_layers, n_heads * d_v), jnp.float32),
        bo=jnp.zeros((n_layers, d_model), jnp.float32),
        b1=jnp.zeros((n_layers, d_ff), jnp.float32),
        b2=jnp.zeros((n_layers, d_model), jnp.float32),
        ln1g=jnp.ones((n_layers, d_model), jnp.float32),
        ln1b=jnp.zeros((n_layers, d_model), jnp.float32),
        ln2g=jnp.ones((n_layers, d_model), jnp.float32),
        ln2b=jnp.zeros((n_layers, d_model), jnp.float32),
    )
    return params


def pack_params(params):
    """Pack per-layer weights / biases into two lane-dense slabs (cuts DMA count)."""
    w_layers, v_layers = [], []
    for l in range(n_layers):
        # [H, D, d] -> [D, H*d] with (head, channel) column order
        wq = jnp.transpose(params["wq"][l], (1, 0, 2)).reshape(d_model, n_heads * d_k)
        wk = jnp.transpose(params["wk"][l], (1, 0, 2)).reshape(d_model, n_heads * d_k)
        wv = jnp.transpose(params["wv"][l], (1, 0, 2)).reshape(d_model, n_heads * d_v)
        wo = params["wo"][l].reshape(n_heads * d_v, d_model)    # rows = concat of heads
        w1 = params["w1"][l]                                    # [D, d_ff]
        w2t = params["w2"][l].T                                 # [D, d_ff]
        w_layers.append(jnp.concatenate([wq, wk, wv, wo, w1, w2t], axis=1))   # [D, 256]

        row0 = jnp.concatenate([params["bq"][l], params["bk"][l], params["bv"][l],
                                params["bo"][l], params["b1"][l], params["b2"][l],
                                jnp.zeros((32,), jnp.float32)])               # [256]
        row1 = jnp.concatenate([params["ln1g"][l], params["ln1b"][l],
                                params["ln2g"][l], params["ln2b"][l],
                                jnp.zeros((128,), jnp.float32)])              # [256]
        v_layers.append(jnp.stack([row0, row1], axis=0))                      # [2, 256]
    return jnp.stack(w_layers, axis=0), jnp.stack(v_layers, axis=0)


def encoder_forward(enc_inputs, params):
    B, S = enc_inputs.shape
    N = B * S
    # Embedding lookups are gather glue; kept in plain JAX.
    x = params["src_emb"][enc_inputs]                                    # [B, S, D]
    # TODO(synk): reference forward feeds float activations into nn.Embedding
    # (undefined in PyTorch); interpreted as the standard positional-embedding add.
    x = x + params["pos_emb"][jnp.arange(S)][None, :, :]
    x_flat = x.reshape(N, d_model)

    # get_attn_pad_mask + batch block-diagonal, precomputed as ONE additive mask.
    # TODO(synk): an all-PAD sequence gives uniform attention over S keys in the
    # PyTorch reference; the additive-mask formulation degrades differently
    # (case not exercised here, every sequence has non-PAD tokens).
    key_pad = (enc_inputs == 0).reshape(N)                               # key is PAD (id 0)
    batch_ids = jnp.repeat(jnp.arange(B), S)
    allowed = (batch_ids[:, None] == batch_ids[None, :]) & (~key_pad)[None, :]
    mask_add = jnp.where(allowed, 0.0, -1e9).astype(jnp.float32)         # [N, N]

    w_slab, vec_slab = pack_params(params)
    out_flat, attn_packed = make_encoder_call(N)(x_flat, mask_add, w_slab, vec_slab)

    enc_outputs = out_flat.reshape(B, S, d_model)
    # unpack lane-dense [L, H, N*N] -> block-diagonal blocks [L, B, H, S, S]
    a6 = attn_packed.reshape(n_layers, n_heads, B, S, B, S)
    diag = a6[:, :, jnp.arange(B), :, jnp.arange(B), :]                  # [B, L, H, S, S]
    attn_lbhss = jnp.transpose(diag, (1, 0, 2, 3, 4))                    # [L, B, H, S, S]
    enc_self_attns = [attn_lbhss[l] for l in range(n_layers)]
    return enc_outputs, enc_self_attns


if __name__ == "__main__":
    key = jax.random.PRNGKey(0)
    pkey, ikey = jax.random.split(key)
    params = init_params(pkey)

    B, S = 2, 8
    enc_inputs = jax.random.randint(ikey, (B, S), 1, src_vocab_size, dtype=jnp.int32)
    # introduce PAD tokens (id 0) to exercise get_attn_pad_mask
    enc_inputs = enc_inputs.at[0, -2:].set(0)
    enc_inputs = enc_inputs.at[1, -1:].set(0)

    enc_outputs, enc_self_attns = encoder_forward(enc_inputs, params)
    jax.block_until_ready(enc_outputs)
    for a in enc_self_attns:
        jax.block_until_ready(a)

    assert enc_outputs.shape == (B, S, d_model)
    assert len(enc_self_attns) == n_layers
    assert enc_self_attns[0].shape == (B, n_heads, S, S)
    assert bool(jnp.all(jnp.isfinite(enc_outputs)))
    # attention rows (over same-batch keys) should sum to ~1 (approx reciprocal in softmax)
    assert bool(jnp.all(jnp.abs(jnp.sum(enc_self_attns[0], axis=-1) - 1.0) < 1e-2))
    print("KERNEL_OK")
</pallas_src>

<mosaic_0001>
module attributes {stable_mosaic.version = 11 : i64} {
  func.func @kernel(%arg0: i32, %arg1: memref<16x32xf32, #tpu.memory_space<vmem>>, %arg2: memref<16x16xf32, #tpu.memory_space<vmem>>, %arg3: memref<2x32x256xf32, #tpu.memory_space<vmem>>, %arg4: memref<2x2x256xf32, #tpu.memory_space<vmem>>, %arg5: memref<16x32xf32, #tpu.memory_space<vmem>>, %arg6: memref<2x4x256xf32, #tpu.memory_space<vmem>>) attributes {dimension_semantics = [#tpu.dimension_semantics<arbitrary>], iteration_bounds = array<i64: 1>, scalar_prefetch = 0 : i64, scratch_operands = 0 : i64, tpu.core_type = #tpu.core_type<tc>, window_params = [{pipeline_mode = #tpu.pipeline_mode<synchronous>, transform_indices = @transform_0, window_bounds = array<i64: 16, 32>}, {pipeline_mode = #tpu.pipeline_mode<synchronous>, transform_indices = @transform_1, window_bounds = array<i64: 16, 16>}, {pipeline_mode = #tpu.pipeline_mode<synchronous>, transform_indices = @transform_2, window_bounds = array<i64: 2, 32, 256>}, {pipeline_mode = #tpu.pipeline_mode<synchronous>, transform_indices = @transform_3, window_bounds = array<i64: 2, 2, 256>}, {pipeline_mode = #tpu.pipeline_mode<synchronous>, transform_indices = @transform_4, window_bounds = array<i64: 16, 32>}, {pipeline_mode = #tpu.pipeline_mode<synchronous>, transform_indices = @transform_5, window_bounds = array<i64: 2, 4, 256>}]} {
    %c0 = arith.constant 0 : index
    %c0_0 = arith.constant 0 : index
    %0 = vector.load %arg1[%c0, %c0_0] : memref<16x32xf32, #tpu.memory_space<vmem>>, vector<16x32xf32>
    %c0_1 = arith.constant 0 : index
    %c0_2 = arith.constant 0 : index
    %1 = vector.load %arg2[%c0_1, %c0_2] : memref<16x16xf32, #tpu.memory_space<vmem>>, vector<16x16xf32>
    %2 = vector.shape_cast %1 : vector<16x16xf32> to vector<1x16x16xf32>
    %3 = vector.shape_cast %2 : vector<1x16x16xf32> to vector<1x16x16xf32>
    %4 = vector.broadcast %3 : vector<1x16x16xf32> to vector<4x16x16xf32>
    %c0_3 = arith.constant 0 : index
    %c0_4 = arith.constant 0 : index
    %c0_5 = arith.constant 0 : index
    %5 = vector.load %arg3[%c0_3, %c0_4, %c0_5] : memref<2x32x256xf32, #tpu.memory_space<vmem>>, vector<1x32x256xf32>
    %6 = vector.shape_cast %5 : vector<1x32x256xf32> to vector<32x256xf32>
    %7 = vector.extract_strided_slice %6 {offsets = [0, 0], sizes = [32, 96], strides = [1, 1]} : vector<32x256xf32> to vector<32x96xf32>
    %8 = vector.extract_strided_slice %6 {offsets = [0, 96], sizes = [32, 32], strides = [1, 1]} : vector<32x256xf32> to vector<32x32xf32>
    %9 = vector.extract_strided_slice %6 {offsets = [0, 128], sizes = [32, 64], strides = [1, 1]} : vector<32x256xf32> to vector<32x64xf32>
    %10 = vector.extract_strided_slice %6 {offsets = [0, 192], sizes = [32, 64], strides = [1, 1]} : vector<32x256xf32> to vector<32x64xf32>
    %c0_6 = arith.constant 0 : index
    %c0_7 = arith.constant 0 : index
    %c0_8 = arith.constant 0 : index
    %11 = vector.load %arg4[%c0_6, %c0_7, %c0_8] : memref<2x2x256xf32, #tpu.memory_space<vmem>>, vector<1x1x256xf32>
    %12 = vector.shape_cast %11 : vector<1x1x256xf32> to vector<256xf32>
    %c0_9 = arith.constant 0 : index
    %c1 = arith.constant 1 : index
    %c0_10 = arith.constant 0 : index
    %13 = vector.load %arg4[%c0_9, %c1, %c0_10] : memref<2x2x256xf32, #tpu.memory_space<vmem>>, vector<1x1x256xf32>
    %14 = vector.shape_cast %13 : vector<1x1x256xf32> to vector<256xf32>
    %15 = vector.extract_strided_slice %12 {offsets = [0], sizes = [96], strides = [1]} : vector<256xf32> to vector<96xf32>
    %16 = vector.extract_strided_slice %12 {offsets = [96], sizes = [32], strides = [1]} : vector<256xf32> to vector<32xf32>
    %17 = vector.extract_strided_slice %12 {offsets = [128], sizes = [64], strides = [1]} : vector<256xf32> to vector<64xf32>
    %18 = vector.extract_strided_slice %12 {offsets = [192], sizes = [32], strides = [1]} : vector<256xf32> to vector<32xf32>
    %19 = vector.extract_strided_slice %14 {offsets = [0], sizes = [32], strides = [1]} : vector<256xf32> to vector<32xf32>
    %20 = vector.extract_strided_slice %14 {offsets = [32], sizes = [32], strides = [1]} : vector<256xf32> to vector<32xf32>
    %21 = vector.extract_strided_slice %14 {offsets = [64], sizes = [32], strides = [1]} : vector<256xf32> to vector<32xf32>
    %22 = vector.extract_strided_slice %14 {offsets = [96], sizes = [32], strides = [1]} : vector<256xf32> to vector<32xf32>
    %cst = arith.constant dense<0.000000e+00> : vector<16x96xf32>
    %23 = tpu.matmul %0, %7, %cst {dimension_numbers = #tpu.dot_dimension_numbers<[1], [0], [0], [1], [0, 0, 1, 1], [], []>} : vector<16x32xf32>, vector<32x96xf32>, vector<16x96xf32> -> vector<16x96xf32>
    %24 = vector.shape_cast %15 : vector<96xf32> to vector<1x96xf32>
    %25 = vector.broadcast %24 : vector<1x96xf32> to vector<16x96xf32>
    %26 = arith.addf %23, %25 : vector<16x96xf32>
    %27 = vector.extract_strided_slice %26 {offsets = [0, 0], sizes = [16, 32], strides = [1, 1]} : vector<16x96xf32> to vector<16x32xf32>
    %28 = vector.shape_cast %27 : vector<16x32xf32> to vector<16x4x8xf32>
    %29 = tpu.transpose %28, [1, 0, 2] : vector<16x4x8xf32> -> vector<4x16x8xf32>
    %30 = vector.extract_strided_slice %26 {offsets = [0, 32], sizes = [16, 32], strides = [1, 1]} : vector<16x96xf32> to vector<16x32xf32>
    %31 = vector.shape_cast %30 : vector<16x32xf32> to vector<16x4x8xf32>
    %32 = tpu.transpose %31, [1, 0, 2] : vector<16x4x8xf32> -> vector<4x16x8xf32>
    %33 = vector.extract_strided_slice %26 {offsets = [0, 64], sizes = [16, 32], strides = [1, 1]} : vector<16x96xf32> to vector<16x32xf32>
    %34 = vector.shape_cast %33 : vector<16x32xf32> to vector<16x4x8xf32>
    %35 = tpu.transpose %34, [1, 0, 2] : vector<16x4x8xf32> -> vector<4x16x8xf32>
    "tpu.trace_start"() <{level = 10 : i32, message = "hqc,hkc->hqk"}> : () -> ()
    %cst_11 = arith.constant dense<0.000000e+00> : vector<4x16x16xf32>
    %36 = tpu.matmul %29, %32, %cst_11 {dimension_numbers = #tpu.dot_dimension_numbers<[2], [2], [1], [1], [0, 0, 0, 1, 1, 1], [0], [0]>} : vector<4x16x8xf32>, vector<4x16x8xf32>, vector<4x16x16xf32> -> vector<4x16x16xf32>
    "tpu.trace_stop"() : () -> ()
    %cst_12 = arith.constant 0.353553385 : f32
    %37 = vector.broadcast %cst_12 : f32 to vector<4x16x16xf32>
    %38 = arith.mulf %36, %37 : vector<4x16x16xf32>
    %39 = arith.addf %38, %4 : vector<4x16x16xf32>
    %cst_13 = arith.constant dense<0xFF800000> : vector<4x16xf32>
    %40 = vector.multi_reduction <maximumf>, %39, %cst_13 [2] : vector<4x16x16xf32> to vector<4x16xf32>
    %41 = vector.shape_cast %40 : vector<4x16xf32> to vector<4x16x1xf32>
    %42 = vector.broadcast %41 : vector<4x16x1xf32> to vector<4x16x16xf32>
    %43 = arith.subf %39, %42 : vector<4x16x16xf32>
    %44 = math.exp %43 : vector<4x16x16xf32>
    %cst_14 = arith.constant dense<0.000000e+00> : vector<4x16xf32>
    %45 = vector.multi_reduction <add>, %44, %cst_14 [2] : vector<4x16x16xf32> to vector<4x16xf32>
    %46 = vector.shape_cast %45 : vector<4x16xf32> to vector<4x16x1xf32>
    %47 = tpu.reciprocal %46 {approx = true} : vector<4x16x1xf32> -> vector<4x16x1xf32>
    %48 = vector.broadcast %47 : vector<4x16x1xf32> to vector<4x16x16xf32>
    %49 = arith.mulf %44, %48 : vector<4x16x16xf32>
    %50 = vector.shape_cast %49 : vector<4x16x16xf32> to vector<4x256xf32>
    "tpu.trace_start"() <{level = 10 : i32, message = "hqk,hkv->hqv"}> : () -> ()
    %cst_15 = arith.constant dense<0.000000e+00> : vector<4x16x8xf32>
    %51 = tpu.matmul %49, %35, %cst_15 {dimension_numbers = #tpu.dot_dimension_numbers<[2], [1], [1], [2], [0, 0, 0, 1, 1, 2], [0], [0]>} : vector<4x16x16xf32>, vector<4x16x8xf32>, vector<4x16x8xf32> -> vector<4x16x8xf32>
    "tpu.trace_stop"() : () -> ()
    %52 = tpu.transpose %51, [1, 0, 2] : vector<4x16x8xf32> -> vector<16x4x8xf32>
    %53 = vector.shape_cast %52 : vector<16x4x8xf32> to vector<16x32xf32>
    %cst_16 = arith.constant dense<0.000000e+00> : vector<16x32xf32>
    %54 = tpu.matmul %53, %8, %cst_16 {dimension_numbers = #tpu.dot_dimension_numbers<[1], [0], [0], [1], [0, 0, 1, 1], [], []>} : vector<16x32xf32>, vector<32x32xf32>, vector<16x32xf32> -> vector<16x32xf32>
    %55 = vector.shape_cast %16 : vector<32xf32> to vector<1x32xf32>
    %56 = vector.broadcast %55 : vector<1x32xf32> to vector<16x32xf32>
    %57 = arith.addf %54, %56 : vector<16x32xf32>
    %58 = arith.addf %57, %0 : vector<16x32xf32>
    %59 = vector.shape_cast %19 : vector<32xf32> to vector<1x32xf32>
    %60 = vector.shape_cast %20 : vector<32xf32> to vector<1x32xf32>
    %cst_17 = arith.constant dense<0.000000e+00> : vector<16xf32>
    %61 = vector.multi_reduction <add>, %58, %cst_17 [1] : vector<16x32xf32> to vector<16xf32>
    %62 = vector.shape_cast %61 : vector<16xf32> to vector<16x1xf32>
    %cst_18 = arith.constant 3.200000e+01 : f32
    %63 = vector.broadcast %cst_18 : f32 to vector<16x1xf32>
    %64 = arith.divf %62, %63 : vector<16x1xf32>
    %65 = vector.broadcast %64 : vector<16x1xf32> to vector<16x32xf32>
    %66 = arith.subf %58, %65 : vector<16x32xf32>
    %67 = arith.mulf %66, %66 : vector<16x32xf32>
    %cst_19 = arith.constant dense<0.000000e+00> : vector<16xf32>
    %68 = vector.multi_reduction <add>, %67, %cst_19 [1] : vector<16x32xf32> to vector<16xf32>
    %69 = vector.shape_cast %68 : vector<16xf32> to vector<16x1xf32>
    %cst_20 = arith.constant 3.200000e+01 : f32
    %70 = vector.broadcast %cst_20 : f32 to vector<16x1xf32>
    %71 = arith.divf %69, %70 : vector<16x1xf32>
    %72 = vector.broadcast %64 : vector<16x1xf32> to vector<16x32xf32>
    %73 = arith.subf %58, %72 : vector<16x32xf32>
    %cst_21 = arith.constant 9.99999974E-6 : f32
    %74 = vector.broadcast %cst_21 : f32 to vector<16x1xf32>
    %75 = arith.addf %71, %74 : vector<16x1xf32>
    %76 = math.rsqrt %75 : vector<16x1xf32>
    %77 = vector.broadcast %76 : vector<16x1xf32> to vector<16x32xf32>
    %78 = arith.mulf %73, %77 : vector<16x32xf32>
    %79 = vector.broadcast %59 : vector<1x32xf32> to vector<16x32xf32>
    %80 = arith.mulf %78, %79 : vector<16x32xf32>
    %81 = vector.broadcast %60 : vector<1x32xf32> to vector<16x32xf32>
    %82 = arith.addf %80, %81 : vector<16x32xf32>
    %cst_22 = arith.constant dense<0.000000e+00> : vector<16x64xf32>
    %83 = tpu.matmul %82, %9, %cst_22 {dimension_numbers = #tpu.dot_dimension_numbers<[1], [0], [0], [1], [0, 0, 1, 1], [], []>} : vector<16x32xf32>, vector<32x64xf32>, vector<16x64xf32> -> vector<16x64xf32>
    %84 = vector.shape_cast %17 : vector<64xf32> to vector<1x64xf32>
    %85 = vector.broadcast %84 : vector<1x64xf32> to vector<16x64xf32>
    %86 = arith.addf %83, %85 : vector<16x64xf32>
    %cst_23 = arith.constant 0.000000e+00 : f32
    %87 = vector.broadcast %cst_23 : f32 to vector<16x64xf32>
    %88 = arith.maximumf %86, %87 : vector<16x64xf32>
    "tpu.trace_start"() <{level = 10 : i32, message = "nf,df->nd"}> : () -> ()
    %cst_24 = arith.constant dense<0.000000e+00> : vector<16x32xf32>
    %89 = tpu.matmul %88, %10, %cst_24 {dimension_numbers = #tpu.dot_dimension_numbers<[1], [1], [0], [0], [0, 0, 1, 0], [], []>} : vector<16x64xf32>, vector<32x64xf32>, vector<16x32xf32> -> vector<16x32xf32>
    "tpu.trace_stop"() : () -> ()
    %90 = vector.shape_cast %18 : vector<32xf32> to vector<1x32xf32>
    %91 = vector.broadcast %90 : vector<1x32xf32> to vector<16x32xf32>
    %92 = arith.addf %89, %91 : vector<16x32xf32>
    %93 = arith.addf %92, %82 : vector<16x32xf32>
    %94 = vector.shape_cast %21 : vector<32xf32> to vector<1x32xf32>
    %95 = vector.shape_cast %22 : vector<32xf32> to vector<1x32xf32>
    %cst_25 = arith.constant dense<0.000000e+00> : vector<16xf32>
    %96 = vector.multi_reduction <add>, %93, %cst_25 [1] : vector<16x32xf32> to vector<16xf32>
    %97 = vector.shape_cast %96 : vector<16xf32> to vector<16x1xf32>
    %cst_26 = arith.constant 3.200000e+01 : f32
    %98 = vector.broadcast %cst_26 : f32 to vector<16x1xf32>
    %99 = arith.divf %97, %98 : vector<16x1xf32>
    %100 = vector.broadcast %99 : vector<16x1xf32> to vector<16x32xf32>
    %101 = arith.subf %93, %100 : vector<16x32xf32>
    %102 = arith.mulf %101, %101 : vector<16x32xf32>
    %cst_27 = arith.constant dense<0.000000e+00> : vector<16xf32>
    %103 = vector.multi_reduction <add>, %102, %cst_27 [1] : vector<16x32xf32> to vector<16xf32>
    %104 = vector.shape_cast %103 : vector<16xf32> to vector<16x1xf32>
    %cst_28 = arith.constant 3.200000e+01 : f32
    %105 = vector.broadcast %cst_28 : f32 to vector<16x1xf32>
    %106 = arith.divf %104, %105 : vector<16x1xf32>
    %107 = vector.broadcast %99 : vector<16x1xf32> to vector<16x32xf32>
    %108 = arith.subf %93, %107 : vector<16x32xf32>
    %cst_29 = arith.constant 9.99999974E-6 : f32
    %109 = vector.broadcast %cst_29 : f32 to vector<16x1xf32>
    %110 = arith.addf %106, %109 : vector<16x1xf32>
    %111 = math.rsqrt %110 : vector<16x1xf32>
    %112 = vector.broadcast %111 : vector<16x1xf32> to vector<16x32xf32>
    %113 = arith.mulf %108, %112 : vector<16x32xf32>
    %114 = vector.broadcast %94 : vector<1x32xf32> to vector<16x32xf32>
    %115 = arith.mulf %113, %114 : vector<16x32xf32>
    %116 = vector.broadcast %95 : vector<1x32xf32> to vector<16x32xf32>
    %117 = arith.addf %115, %116 : vector<16x32xf32>
    %c1_30 = arith.constant 1 : index
    %c0_31 = arith.constant 0 : index
    %c0_32 = arith.constant 0 : index
    %118 = vector.load %arg3[%c1_30, %c0_31, %c0_32] : memref<2x32x256xf32, #tpu.memory_space<vmem>>, vector<1x32x256xf32>
    %119 = vector.shape_cast %118 : vector<1x32x256xf32> to vector<32x256xf32>
    %120 = vector.extract_strided_slice %119 {offsets = [0, 0], sizes = [32, 96], strides = [1, 1]} : vector<32x256xf32> to vector<32x96xf32>
    %121 = vector.extract_strided_slice %119 {offsets = [0, 96], sizes = [32, 32], strides = [1, 1]} : vector<32x256xf32> to vector<32x32xf32>
    %122 = vector.extract_strided_slice %119 {offsets = [0, 128], sizes = [32, 64], strides = [1, 1]} : vector<32x256xf32> to vector<32x64xf32>
    %123 = vector.extract_strided_slice %119 {offsets = [0, 192], sizes = [32, 64], strides = [1, 1]} : vector<32x256xf32> to vector<32x64xf32>
    %c1_33 = arith.constant 1 : index
    %c0_34 = arith.constant 0 : index
    %c0_35 = arith.constant 0 : index
    %124 = vector.load %arg4[%c1_33, %c0_34, %c0_35] : memref<2x2x256xf32, #tpu.memory_space<vmem>>, vector<1x1x256xf32>
    %125 = vector.shape_cast %124 : vector<1x1x256xf32> to vector<256xf32>
    %c1_36 = arith.constant 1 : index
    %c1_37 = arith.constant 1 : index
    %c0_38 = arith.constant 0 : index
    %126 = vector.load %arg4[%c1_36, %c1_37, %c0_38] : memref<2x2x256xf32, #tpu.memory_space<vmem>>, vector<1x1x256xf32>
    %127 = vector.shape_cast %126 : vector<1x1x256xf32> to vector<256xf32>
    %128 = vector.extract_strided_slice %125 {offsets = [0], sizes = [96], strides = [1]} : vector<256xf32> to vector<96xf32>
    %129 = vector.extract_strided_slice %125 {offsets = [96], sizes = [32], strides = [1]} : vector<256xf32> to vector<32xf32>
    %130 = vector.extract_strided_slice %125 {offsets = [128], sizes = [64], strides = [1]} : vector<256xf32> to vector<64xf32>
    %131 = vector.extract_strided_slice %125 {offsets = [192], sizes = [32], strides = [1]} : vector<256xf32> to vector<32xf32>
    %132 = vector.extract_strided_slice %127 {offsets = [0], sizes = [32], strides = [1]} : vector<256xf32> to vector<32xf32>
    %133 = vector.extract_strided_slice %127 {offsets = [32], sizes = [32], strides = [1]} : vector<256xf32> to vector<32xf32>
    %134 = vector.extract_strided_slice %127 {offsets = [64], sizes = [32], strides = [1]} : vector<256xf32> to vector<32xf32>
    %135 = vector.extract_strided_slice %127 {offsets = [96], sizes = [32], strides = [1]} : vector<256xf32> to vector<32xf32>
    %cst_39 = arith.constant dense<0.000000e+00> : vector<16x96xf32>
    %136 = tpu.matmul %117, %120, %cst_39 {dimension_numbers = #tpu.dot_dimension_numbers<[1], [0], [0], [1], [0, 0, 1, 1], [], []>} : vector<16x32xf32>, vector<32x96xf32>, vector<16x96xf32> -> vector<16x96xf32>
    %137 = vector.shape_cast %128 : vector<96xf32> to vector<1x96xf32>
    %138 = vector.broadcast %137 : vector<1x96xf32> to vector<16x96xf32>
    %139 = arith.addf %136, %138 : vector<16x96xf32>
    %140 = vector.extract_strided_slice %139 {offsets = [0, 0], sizes = [16, 32], strides = [1, 1]} : vector<16x96xf32> to vector<16x32xf32>
    %141 = vector.shape_cast %140 : vector<16x32xf32> to vector<16x4x8xf32>
    %142 = tpu.transpose %141, [1, 0, 2] : vector<16x4x8xf32> -> vector<4x16x8xf32>
    %143 = vector.extract_strided_slice %139 {offsets = [0, 32], sizes = [16, 32], strides = [1, 1]} : vector<16x96xf32> to vector<16x32xf32>
    %144 = vector.shape_cast %143 : vector<16x32xf32> to vector<16x4x8xf32>
    %145 = tpu.transpose %144, [1, 0, 2] : vector<16x4x8xf32> -> vector<4x16x8xf32>
    %146 = vector.extract_strided_slice %139 {offsets = [0, 64], sizes = [16, 32], strides = [1, 1]} : vector<16x96xf32> to vector<16x32xf32>
    %147 = vector.shape_cast %146 : vector<16x32xf32> to vector<16x4x8xf32>
    %148 = tpu.transpose %147, [1, 0, 2] : vector<16x4x8xf32> -> vector<4x16x8xf32>
    "tpu.trace_start"() <{level = 10 : i32, message = "hqc,hkc->hqk"}> : () -> ()
    %cst_40 = arith.constant dense<0.000000e+00> : vector<4x16x16xf32>
    %149 = tpu.matmul %142, %145, %cst_40 {dimension_numbers = #tpu.dot_dimension_numbers<[2], [2], [1], [1], [0, 0, 0, 1, 1, 1], [0], [0]>} : vector<4x16x8xf32>, vector<4x16x8xf32>, vector<4x16x16xf32> -> vector<4x16x16xf32>
    "tpu.trace_stop"() : () -> ()
    %cst_41 = arith.constant 0.353553385 : f32
    %150 = vector.broadcast %cst_41 : f32 to vector<4x16x16xf32>
    %151 = arith.mulf %149, %150 : vector<4x16x16xf32>
    %152 = arith.addf %151, %4 : vector<4x16x16xf32>
    %cst_42 = arith.constant dense<0xFF800000> : vector<4x16xf32>
    %153 = vector.multi_reduction <maximumf>, %152, %cst_42 [2] : vector<4x16x16xf32> to vector<4x16xf32>
    %154 = vector.shape_cast %153 : vector<4x16xf32> to vector<4x16x1xf32>
    %155 = vector.broadcast %154 : vector<4x16x1xf32> to vector<4x16x16xf32>
    %156 = arith.subf %152, %155 : vector<4x16x16xf32>
    %157 = math.exp %156 : vector<4x16x16xf32>
    %cst_43 = arith.constant dense<0.000000e+00> : vector<4x16xf32>
    %158 = vector.multi_reduction <add>, %157, %cst_43 [2] : vector<4x16x16xf32> to vector<4x16xf32>
    %159 = vector.shape_cast %158 : vector<4x16xf32> to vector<4x16x1xf32>
    %160 = tpu.reciprocal %159 {approx = true} : vector<4x16x1xf32> -> vector<4x16x1xf32>
    %161 = vector.broadcast %160 : vector<4x16x1xf32> to vector<4x16x16xf32>
    %162 = arith.mulf %157, %161 : vector<4x16x16xf32>
    %163 = vector.shape_cast %162 : vector<4x16x16xf32> to vector<4x256xf32>
    "tpu.trace_start"() <{level = 10 : i32, message = "hqk,hkv->hqv"}> : () -> ()
    %cst_44 = arith.constant dense<0.000000e+00> : vector<4x16x8xf32>
    %164 = tpu.matmul %162, %148, %cst_44 {dimension_numbers = #tpu.dot_dimension_numbers<[2], [1], [1], [2], [0, 0, 0, 1, 1, 2], [0], [0]>} : vector<4x16x16xf32>, vector<4x16x8xf32>, vector<4x16x8xf32> -> vector<4x16x8xf32>
    "tpu.trace_stop"() : () -> ()
    %165 = tpu.transpose %164, [1, 0, 2] : vector<4x16x8xf32> -> vector<16x4x8xf32>
    %166 = vector.shape_cast %165 : vector<16x4x8xf32> to vector<16x32xf32>
    %cst_45 = arith.constant dense<0.000000e+00> : vector<16x32xf32>
    %167 = tpu.matmul %166, %121, %cst_45 {dimension_numbers = #tpu.dot_dimension_numbers<[1], [0], [0], [1], [0, 0, 1, 1], [], []>} : vector<16x32xf32>, vector<32x32xf32>, vector<16x32xf32> -> vector<16x32xf32>
    %168 = vector.shape_cast %129 : vector<32xf32> to vector<1x32xf32>
    %169 = vector.broadcast %168 : vector<1x32xf32> to vector<16x32xf32>
    %170 = arith.addf %167, %169 : vector<16x32xf32>
    %171 = arith.addf %170, %117 : vector<16x32xf32>
    %172 = vector.shape_cast %132 : vector<32xf32> to vector<1x32xf32>
    %173 = vector.shape_cast %133 : vector<32xf32> to vector<1x32xf32>
    %cst_46 = arith.constant dense<0.000000e+00> : vector<16xf32>
    %174 = vector.multi_reduction <add>, %171, %cst_46 [1] : vector<16x32xf32> to vector<16xf32>
    %175 = vector.shape_cast %174 : vector<16xf32> to vector<16x1xf32>
    %cst_47 = arith.constant 3.200000e+01 : f32
    %176 = vector.broadcast %cst_47 : f32 to vector<16x1xf32>
    %177 = arith.divf %175, %176 : vector<16x1xf32>
    %178 = vector.broadcast %177 : vector<16x1xf32> to vector<16x32xf32>
    %179 = arith.subf %171, %178 : vector<16x32xf32>
    %180 = arith.mulf %179, %179 : vector<16x32xf32>
    %cst_48 = arith.constant dense<0.000000e+00> : vector<16xf32>
    %181 = vector.multi_reduction <add>, %180, %cst_48 [1] : vector<16x32xf32> to vector<16xf32>
    %182 = vector.shape_cast %181 : vector<16xf32> to vector<16x1xf32>
    %cst_49 = arith.constant 3.200000e+01 : f32
    %183 = vector.broadcast %cst_49 : f32 to vector<16x1xf32>
    %184 = arith.divf %182, %183 : vector<16x1xf32>
    %185 = vector.broadcast %177 : vector<16x1xf32> to vector<16x32xf32>
    %186 = arith.subf %171, %185 : vector<16x32xf32>
    %cst_50 = arith.constant 9.99999974E-6 : f32
    %187 = vector.broadcast %cst_50 : f32 to vector<16x1xf32>
    %188 = arith.addf %184, %187 : vector<16x1xf32>
    %189 = math.rsqrt %188 : vector<16x1xf32>
    %190 = vector.broadcast %189 : vector<16x1xf32> to vector<16x32xf32>
    %191 = arith.mulf %186, %190 : vector<16x32xf32>
    %192 = vector.broadcast %172 : vector<1x32xf32> to vector<16x32xf32>
    %193 = arith.mulf %191, %192 : vector<16x32xf32>
    %194 = vector.broadcast %173 : vector<1x32xf32> to vector<16x32xf32>
    %195 = arith.addf %193, %194 : vector<16x32xf32>
    %cst_51 = arith.constant dense<0.000000e+00> : vector<16x64xf32>
    %196 = tpu.matmul %195, %122, %cst_51 {dimension_numbers = #tpu.dot_dimension_numbers<[1], [0], [0], [1], [0, 0, 1, 1], [], []>} : vector<16x32xf32>, vector<32x64xf32>, vector<16x64xf32> -> vector<16x64xf32>
    %197 = vector.shape_cast %130 : vector<64xf32> to vector<1x64xf32>
    %198 = vector.broadcast %197 : vector<1x64xf32> to vector<16x64xf32>
    %199 = arith.addf %196, %198 : vector<16x64xf32>
    %cst_52 = arith.constant 0.000000e+00 : f32
    %200 = vector.broadcast %cst_52 : f32 to vector<16x64xf32>
    %201 = arith.maximumf %199, %200 : vector<16x64xf32>
    "tpu.trace_start"() <{level = 10 : i32, message = "nf,df->nd"}> : () -> ()
    %cst_53 = arith.constant dense<0.000000e+00> : vector<16x32xf32>
    %202 = tpu.matmul %201, %123, %cst_53 {dimension_numbers = #tpu.dot_dimension_numbers<[1], [1], [0], [0], [0, 0, 1, 0], [], []>} : vector<16x64xf32>, vector<32x64xf32>, vector<16x32xf32> -> vector<16x32xf32>
    "tpu.trace_stop"() : () -> ()
    %203 = vector.shape_cast %131 : vector<32xf32> to vector<1x32xf32>
    %204 = vector.broadcast %203 : vector<1x32xf32> to vector<16x32xf32>
    %205 = arith.addf %202, %204 : vector<16x32xf32>
    %206 = arith.addf %205, %195 : vector<16x32xf32>
    %207 = vector.shape_cast %134 : vector<32xf32> to vector<1x32xf32>
    %208 = vector.shape_cast %135 : vector<32xf32> to vector<1x32xf32>
    %cst_54 = arith.constant dense<0.000000e+00> : vector<16xf32>
    %209 = vector.multi_reduction <add>, %206, %cst_54 [1] : vector<16x32xf32> to vector<16xf32>
    %210 = vector.shape_cast %209 : vector<16xf32> to vector<16x1xf32>
    %cst_55 = arith.constant 3.200000e+01 : f32
    %211 = vector.broadcast %cst_55 : f32 to vector<16x1xf32>
    %212 = arith.divf %210, %211 : vector<16x1xf32>
    %213 = vector.broadcast %212 : vector<16x1xf32> to vector<16x32xf32>
    %214 = arith.subf %206, %213 : vector<16x32xf32>
    %215 = arith.mulf %214, %214 : vector<16x32xf32>
    %cst_56 = arith.constant dense<0.000000e+00> : vector<16xf32>
    %216 = vector.multi_reduction <add>, %215, %cst_56 [1] : vector<16x32xf32> to vector<16xf32>
    %217 = vector.shape_cast %216 : vector<16xf32> to vector<16x1xf32>
    %cst_57 = arith.constant 3.200000e+01 : f32
    %218 = vector.broadcast %cst_57 : f32 to vector<16x1xf32>
    %219 = arith.divf %217, %218 : vector<16x1xf32>
    %220 = vector.broadcast %212 : vector<16x1xf32> to vector<16x32xf32>
    %221 = arith.subf %206, %220 : vector<16x32xf32>
    %cst_58 = arith.constant 9.99999974E-6 : f32
    %222 = vector.broadcast %cst_58 : f32 to vector<16x1xf32>
    %223 = arith.addf %219, %222 : vector<16x1xf32>
    %224 = math.rsqrt %223 : vector<16x1xf32>
    %225 = vector.broadcast %224 : vector<16x1xf32> to vector<16x32xf32>
    %226 = arith.mulf %221, %225 : vector<16x32xf32>
    %227 = vector.broadcast %207 : vector<1x32xf32> to vector<16x32xf32>
    %228 = arith.mulf %226, %227 : vector<16x32xf32>
    %229 = vector.broadcast %208 : vector<1x32xf32> to vector<16x32xf32>
    %230 = arith.addf %228, %229 : vector<16x32xf32>
    %c0_59 = arith.constant 0 : index
    %c0_60 = arith.constant 0 : index
    %231 = vector.load %arg5[%c0_59, %c0_60] : memref<16x32xf32, #tpu.memory_space<vmem>>, vector<16x32xf32>
    tpu.vector_store %arg5[%c0_59, %c0_60], %230 {strides = array<i32>} : memref<16x32xf32, #tpu.memory_space<vmem>>, vector<16x32xf32>,
    %232 = vector.shape_cast %50 : vector<4x256xf32> to vector<1x4x256xf32>
    %233 = vector.shape_cast %163 : vector<4x256xf32> to vector<1x4x256xf32>
    %234 = tpu.concatenate %232, %233 in 0 : vector<1x4x256xf32>, vector<1x4x256xf32> -> vector<2x4x256xf32>
    %c0_61 = arith.constant 0 : index
    %c0_62 = arith.constant 0 : index
    %c0_63 = arith.constant 0 : index
    %235 = vector.load %arg6[%c0_61, %c0_62, %c0_63] : memref<2x4x256xf32, #tpu.memory_space<vmem>>, vector<2x4x256xf32>
    tpu.vector_store %arg6[%c0_61, %c0_62, %c0_63], %234 {strides = array<i32>} : memref<2x4x256xf32, #tpu.memory_space<vmem>>, vector<2x4x256xf32>,
    return
  }
  func.func @transform_0(%arg0: i32) -> (i32, i32) {
    %c0_i32 = arith.constant 0 : i32
    %c0_i32_0 = arith.constant 0 : i32
    %c0_i32_1 = arith.constant 0 : i32
    return %c0_i32, %c0_i32_0 : i32, i32
  }
  func.func @transform_1(%arg0: i32) -> (i32, i32) {
    %c0_i32 = arith.constant 0 : i32
    %c0_i32_0 = arith.constant 0 : i32
    %c0_i32_1 = arith.constant 0 : i32
    return %c0_i32, %c0_i32_0 : i32, i32
  }
  func.func @transform_2(%arg0: i32) -> (i32, i32, i32) {
    %c0_i32 = arith.constant 0 : i32
    %c0_i32_0 = arith.constant 0 : i32
    %c0_i32_1 = arith.constant 0 : i32
    %c0_i32_2 = arith.constant 0 : i32
    return %c0_i32, %c0_i32_0, %c0_i32_1 : i32, i32, i32
  }
  func.func @transform_3(%arg0: i32) -> (i32, i32, i32) {
    %c0_i32 = arith.constant 0 : i32
    %c0_i32_0 = arith.constant 0 : i32
    %c0_i32_1 = arith.constant 0 : i32
    %c0_i32_2 = arith.constant 0 : i32
    return %c0_i32, %c0_i32_0, %c0_i32_1 : i32, i32, i32
  }
  func.func @transform_4(%arg0: i32) -> (i32, i32) {
    %c0_i32 = arith.constant 0 : i32
    %c0_i32_0 = arith.constant 0 : i32
    %c0_i32_1 = arith.constant 0 : i32
    return %c0_i32, %c0_i32_0 : i32, i32
  }
  func.func @transform_5(%arg0: i32) -> (i32, i32, i32) {
    %c0_i32 = arith.constant 0 : i32
    %c0_i32_0 = arith.constant 0 : i32
    %c0_i32_1 = arith.constant 0 : i32
    %c0_i32_2 = arith.constant 0 : i32
    return %c0_i32, %c0_i32_0, %c0_i32_1 : i32, i32, i32
  }
}

</mosaic_0001>

<llo_original>
// kernel: tpu_custom_call.1
$region0: #{tpu_custom_call.1}
  #allocation0 [shape = 'u32[]', space=smem, size = 0x4, offset = 0x4, fixed_abs, tag = 'smem constant byte address 0x4 - core index']
  #allocation1 [shape = 'u32[72,128]{1,0:T(1,128)}', space=vmem, size = 0x9000, scoped, tag = 'internal scratch']
  %s0 = inlined_call_operand.hbm [shape: f32[16,32], index: 0, kind: input, shape index: {}]
  %s1 = inlined_call_operand.hbm [shape: f32[16,16], index: 1, kind: input, shape index: {}]
  %s2 = inlined_call_operand.hbm [shape: f32[2,32,256], index: 2, kind: input, shape index: {}]
  %s3 = inlined_call_operand.hbm [shape: f32[2,2,256], index: 3, kind: input, shape index: {}]
  %s4 = inlined_call_operand.hbm [shape: f32[16,32], index: 4, kind: output, shape index: {0}]
  %s5 = inlined_call_operand.hbm [shape: f32[2,4,256], index: 5, kind: output, shape index: {1}]
  %6 = xla_tuple %s4, %s5
  %s7 = sld [smem:[#allocation0]]
  $region50: #{tpu_custom_call.1} parent=0
    _
  %s9 = ssub.s32 1, %s7
  %s10 = scalar_select 0, %s9, %s7
  $region1: #{tpu_custom_call.1} parent=0
    #allocation2 [shape = 'u8[8192]{0}', space=vmem, size = 0x2000, scoped, tag = 'input window, operand 0, single buffered']
    #allocation3 [shape = 's32[1]{0}', space=sflag, size = 0x4, scoped, tag = 'scoped memory for tpu_custom_call.1']
    #allocation4 [shape = 's32[1]{0}', space=sflag, size = 0x4, scoped, tag = 'scoped memory for tpu_custom_call.1']
    #allocation5 [shape = 'u8[8192]{0}', space=vmem, size = 0x2000, scoped, tag = 'input window, operand 1, single buffered']
    #allocation6 [shape = 's32[1]{0}', space=sflag, size = 0x4, scoped, tag = 'scoped memory for tpu_custom_call.1']
    #allocation7 [shape = 'u8[65536]{0}', space=vmem, size = 0x10000, scoped, tag = 'input window, operand 2, single buffered']
    #allocation8 [shape = 'u8[4096]{0}', space=vmem, size = 0x1000, scoped, tag = 'input window, operand 3, single buffered']
    #allocation9 [shape = 's32[1]{0}', space=sflag, size = 0x4, scoped, tag = 'scoped memory for tpu_custom_call.1']
    #allocation10 [shape = 'u8[8192]{0}', space=vmem, size = 0x2000, scoped, tag = 'output window, operand 0, single buffered']
    #allocation11 [shape = 'u8[8192]{0}', space=vmem, size = 0x2000, scoped, tag = 'output window, operand 1, single buffered']
    #allocation12 [shape = 's32[1]{0}', space=sflag, size = 0x4, scoped, tag = 'scoped memory for tpu_custom_call.1']
    %11 = vsyncpa [#allocation3], 0
    %12 = vsyncpa [#allocation6], 0
    %13 = vsyncpa [#allocation9], 0
    %14 = vsyncpa [#allocation4], 0
    %15 = vsyncpa [#allocation12], 0
    // Predicated region
    $region2: #{tpu_custom_call.1} parent=1 // pred_check
      _
    $region3: #{tpu_custom_call.1} parent=1 // pred_check_branch
      %17 = sbr.rel (0) target = $region5
    $region4: #{tpu_custom_call.1} parent=1 // pred_region
      %19 = vsyncadd [#allocation3], 0
      %s20 = sshll.u32 %s0, 4
      %s21 = int_to_ptr.hbm [resolvable:$true] %s20
      %s22 = sshll.u32 [#allocation2], 4
      %s23 = int_to_ptr.vmem [resolvable:$true] %s22
      %28 = dma.hbm_to_vmem [thread:$0]  %s21, 256, %s23, [#allocation3], 128, 128, 8
    $region5: #{tpu_custom_call.1} parent=1 // pred_fallthru
      _
    // Predicated region
    $region6: #{tpu_custom_call.1} parent=1 // pred_check
      _
    $region7: #{tpu_custom_call.1} parent=1 // pred_check_branch
      %30 = sbr.rel (0) target = $region9
    $region8: #{tpu_custom_call.1} parent=1 // pred_region
      %32 = vsyncadd [#allocation6], 0
      %s33 = sshll.u32 %s1, 4
      %s34 = int_to_ptr.hbm [resolvable:$true] %s33
      %s35 = sshll.u32 [#allocation5], 4
      %s36 = int_to_ptr.vmem [resolvable:$true] %s35
      %41 = dma.hbm_to_vmem [thread:$0]  %s34, 256, %s36, [#allocation6], 128, 128, 8
    $region9: #{tpu_custom_call.1} parent=1 // pred_fallthru
      _
    // Predicated region
    $region10: #{tpu_custom_call.1} parent=1 // pred_check
      _
    $region11: #{tpu_custom_call.1} parent=1 // pred_check_branch
      %43 = sbr.rel (0) target = $region13
    $region12: #{tpu_custom_call.1} parent=1 // pred_region
      %45 = vsyncadd [#allocation6], 0
      %s46 = sshll.u32 %s2, 4
      %s47 = int_to_ptr.hbm [resolvable:$true] %s46
      %s48 = sshll.u32 [#allocation7], 4
      %s49 = int_to_ptr.vmem [resolvable:$true] %s48
      %54 = dma.hbm_to_vmem [thread:$0]  %s47, 2048, %s49, [#allocation6], 256, 256, 16
    $region13: #{tpu_custom_call.1} parent=1 // pred_fallthru
      _
    // Predicated region
    $region14: #{tpu_custom_call.1} parent=1 // pred_check
      _
    $region15: #{tpu_custom_call.1} parent=1 // pred_check_branch
      %56 = sbr.rel (0) target = $region17
    $region16: #{tpu_custom_call.1} parent=1 // pred_region
      %58 = vsyncadd [#allocation9], 0
      %s59 = sshll.u32 %s3, 4
      %s60 = int_to_ptr.hbm [resolvable:$true] %s59
      %s61 = sshll.u32 [#allocation8], 4
      %s62 = int_to_ptr.vmem [resolvable:$true] %s61
      %67 = dma.hbm_to_vmem [thread:$0]  %s60, 128, %s62, [#allocation9], 64, 64, 4
    $region17: #{tpu_custom_call.1} parent=1 // pred_fallthru
      _
    // Predicated region
    $region18: #{tpu_custom_call.1} parent=1 // pred_check
      _
    $region19: #{tpu_custom_call.1} parent=1 // pred_check_branch
      %69 = sbr.rel (0) target = $region21
    $region20: #{tpu_custom_call.1} parent=1 // pred_region
      %71 = dma.done [#allocation3], 256
    $region21: #{tpu_custom_call.1} parent=1 // pred_fallthru
      _
    // Predicated region
    $region22: #{tpu_custom_call.1} parent=1 // pred_check
      _
    $region23: #{tpu_custom_call.1} parent=1 // pred_check_branch
      %73 = sbr.rel (0) target = $region25
    $region24: #{tpu_custom_call.1} parent=1 // pred_region
      %75 = dma.done [#allocation6], 256
    $region25: #{tpu_custom_call.1} parent=1 // pred_fallthru
      _
    // Predicated region
    $region26: #{tpu_custom_call.1} parent=1 // pred_check
      _
    $region27: #{tpu_custom_call.1} parent=1 // pred_check_branch
      %77 = sbr.rel (0) target = $region29
    $region28: #{tpu_custom_call.1} parent=1 // pred_region
      %79 = dma.done [#allocation6], 2048
    $region29: #{tpu_custom_call.1} parent=1 // pred_fallthru
      _
    // Predicated region
    $region30: #{tpu_custom_call.1} parent=1 // pred_check
      _
    $region31: #{tpu_custom_call.1} parent=1 // pred_check_branch
      %81 = sbr.rel (0) target = $region33
    $region32: #{tpu_custom_call.1} parent=1 // pred_region
      %83 = dma.done [#allocation9], 128
    $region33: #{tpu_custom_call.1} parent=1 // pred_fallthru
      _
    %v84 = vld [vmem:[#allocation2] sm:$0xff]
    %v85 = vld [vmem:[#allocation2 + $0x8] sm:$0xff]
    %v86 = vld [vmem:[#allocation5] sm:$0xff]
    %v87 = vld [vmem:[#allocation5 + $0x8] sm:$0xff]
    %v88 = vld [vmem:[#allocation7] sm:$0xff]
    %v89 = vld [vmem:[#allocation7 + $0x8] sm:$0xff]
    %v90 = vld [vmem:[#allocation7 + $0x10] sm:$0xff]
    %v91 = vld [vmem:[#allocation7 + $0x18] sm:$0xff]
    %v92 = vld [vmem:[#allocation7 + $0x20] sm:$0xff]
    %v93 = vld [vmem:[#allocation7 + $0x28] sm:$0xff]
    %v94 = vld [vmem:[#allocation7 + $0x30] sm:$0xff]
    %v95 = vld [vmem:[#allocation7 + $0x38] sm:$0xff]
    %v96 = vld [vmem:[#allocation8] ss:$2 sm:$0x3]
    %s97 = scalar_lea.vmem [#allocation8], 1
    %v98 = vld [vmem:[%s97] ss:$2 sm:$0x3]
    %v100 = vperm.slane %v96, 0
    %vm102 = vcmask 261120
    %v104 = vsel %vm102, %v84, 0
    %v107 = vsel %vm102, %v85, 0
    %109 = vmatpush.msra.mxu0 0.0
    %110 = vmatpush.msra.mxu0 0.0
    %111 = vmatpush.msra.mxu0 0.0
    %112 = vmatpush.msra.mxu0 0.0
    %113 = vmatpush.msra.mxu0 0.0
    %114 = vmatpush.msra.mxu0 0.0
    %115 = vmatpush.msra.mxu0 0.0
    %116 = vmatpush.msra.mxu0 0.0
    %117 = vmatpush.msra.mxu0 0.0
    %118 = vmatpush.msra.mxu0 0.0
    %119 = vmatpush.msra.mxu0 0.0
    %120 = vmatpush.msra.mxu0 0.0
    %121 = vmatpush.msra.mxu0 %v94
    %122 = vmatpush.msra.mxu0 %v92
    %123 = vmatpush.msra.mxu0 %v90
    %124 = vmatpush.msra.mxu0 %v88
    %125 = vmatmul.f32.gmra.mxu0 %v104
    %v126 = vpop.f32.mrf.mxu0
    %v127 = vadd.f32 %v100, %v126
    %128 = vmatmul.f32.gmra.mxu0 %v107
    %v129 = vpop.f32.mrf.mxu0
    %v130 = vadd.f32 %v100, %v129
    %131 = vdwg.mxu0
    %134 = vrot.lane.b32.xlu0 %v127, 120
    %v135 = vpop.permute.xlu0 %134
    %136 = vrot.lane.b32.xlu0 %v130, 120
    %v137 = vpop.permute.xlu0 %136
    %140 = vrot.lane.b32.xlu0 %v127, 112
    %v141 = vpop.permute.xlu0 %140
    %142 = vrot.lane.b32.xlu0 %v130, 112
    %v143 = vpop.permute.xlu0 %142
    %146 = vrot.lane.b32.xlu0 %v127, 104
    %v147 = vpop.permute.xlu0 %146
    %148 = vrot.lane.b32.xlu0 %v130, 104
    %v149 = vpop.permute.xlu0 %148
    %v152 = vrot.slane %v141, 4
    %vm153 = vcmask 1047556
    %v154 = vsel %vm153, %v152, %v127
    %v155 = vrot.slane %v127, 4
    %v156 = vsel %vm153, %v141, %v155
    %v158 = vunpack.c.l.s4 1983009808
    %v159 = vunpack.c.0.s8 %v158
    %v160 = vperm.slane %v154, %v159
    %v162 = vunpack.c.l.s4 1983009808
    %v163 = vunpack.c.0.s8 %v162
    %v164 = vperm.slane %v156, %v163
    %v165 = vrot.slane %v147, 4
    %v166 = vsel %vm153, %v165, %v135
    %v167 = vrot.slane %v135, 4
    %v168 = vsel %vm153, %v147, %v167
    %v170 = vunpack.c.l.s4 1983009808
    %v171 = vunpack.c.0.s8 %v170
    %v172 = vperm.slane %v166, %v171
    %v174 = vunpack.c.l.s4 1983009808
    %v175 = vunpack.c.0.s8 %v174
    %v176 = vperm.slane %v168, %v175
    %v177 = vrot.slane %v172, 4
    %v178 = vsel %vm153, %v177, %v160
    %v179 = vrot.slane %v160, 4
    %v180 = vsel %vm153, %v172, %v179
    %v182 = vunpack.c.l.s4 1934713408
    %v183 = vunpack.c.0.s8 %v182
    %v184 = vperm.slane %v178, %v183
    %v186 = vunpack.c.l.s4 1934713408
    %v187 = vunpack.c.0.s8 %v186
    %v188 = vperm.slane %v180, %v187
    %v189 = vrot.slane %v176, 4
    %v190 = vsel %vm153, %v189, %v164
    %v191 = vrot.slane %v164, 4
    %v192 = vsel %vm153, %v176, %v191
    %v194 = vunpack.c.l.s4 1934713408
    %v195 = vunpack.c.0.s8 %v194
    %v196 = vperm.slane %v190, %v195
    %v198 = vunpack.c.l.s4 1934713408
    %v199 = vunpack.c.0.s8 %v198
    %v200 = vperm.slane %v192, %v199
    %v201 = vrot.slane %v184, 4
    %v202 = vsel %vm153, 0.0, %v201
    %v203 = vrot.slane %v188, 4
    %v204 = vsel %vm153, 0.0, %v203
    %v205 = vrot.slane %v196, 4
    %v206 = vsel %vm153, 0.0, %v205
    %v207 = vrot.slane %v200, 4
    %v208 = vsel %vm153, 0.0, %v207
    %v209 = vrot.slane %v143, 4
    %v210 = vsel %vm153, %v209, %v130
    %v211 = vrot.slane %v130, 4
    %v212 = vsel %vm153, %v143, %v211
    %v214 = vunpack.c.l.s4 1983009808
    %v215 = vunpack.c.0.s8 %v214
    %v216 = vperm.slane %v210, %v215
    %v218 = vunpack.c.l.s4 1983009808
    %v219 = vunpack.c.0.s8 %v218
    %v220 = vperm.slane %v212, %v219
    %v221 = vrot.slane %v149, 4
    %v222 = vsel %vm153, %v221, %v137
    %v223 = vrot.slane %v137, 4
    %v224 = vsel %vm153, %v149, %v223
    %v226 = vunpack.c.l.s4 1983009808
    %v227 = vunpack.c.0.s8 %v226
    %v228 = vperm.slane %v222, %v227
    %v230 = vunpack.c.l.s4 1983009808
    %v231 = vunpack.c.0.s8 %v230
    %v232 = vperm.slane %v224, %v231
    %v233 = vrot.slane %v228, 4
    %v234 = vsel %vm153, %v233, %v216
    %v235 = vrot.slane %v216, 4
    %v236 = vsel %vm153, %v228, %v235
    %v238 = vunpack.c.l.s4 1934713408
    %v239 = vunpack.c.0.s8 %v238
    %v240 = vperm.slane %v234, %v239
    %v242 = vunpack.c.l.s4 1934713408
    %v243 = vunpack.c.0.s8 %v242
    %v244 = vperm.slane %v236, %v243
    %v245 = vrot.slane %v232, 4
    %v246 = vsel %vm153, %v245, %v220
    %v247 = vrot.slane %v220, 4
    %v248 = vsel %vm153, %v232, %v247
    %v250 = vunpack.c.l.s4 1934713408
    %v251 = vunpack.c.0.s8 %v250
    %v252 = vperm.slane %v246, %v251
    %v254 = vunpack.c.l.s4 1934713408
    %v255 = vunpack.c.0.s8 %v254
    %v256 = vperm.slane %v248, %v255
    %v257 = vrot.slane %v240, 4
    %v258 = vsel %vm153, 0.0, %v257
    %v259 = vrot.slane %v244, 4
    %v260 = vsel %vm153, 0.0, %v259
    %v261 = vrot.slane %v252, 4
    %v262 = vsel %vm153, 0.0, %v261
    %v263 = vrot.slane %v256, 4
    %v264 = vsel %vm153, 0.0, %v263
    %v265 = vsel %vm153, %v203, %v184
    %v267 = vunpack.c.l.s4 1983009808
    %v268 = vunpack.c.0.s8 %v267
    %v269 = vperm.slane %v265, %v268
    %v270 = vrot.slane %v204, 4
    %v271 = vsel %vm153, %v270, %v202
    %v273 = vunpack.c.l.s4 1983009808
    %v274 = vunpack.c.0.s8 %v273
    %v275 = vperm.slane %v271, %v274
    %v276 = vsel %vm153, %v207, %v196
    %v278 = vunpack.c.l.s4 1983009808
    %v279 = vunpack.c.0.s8 %v278
    %v280 = vperm.slane %v276, %v279
    %v281 = vrot.slane %v208, 4
    %v282 = vsel %vm153, %v281, %v206
    %v284 = vunpack.c.l.s4 1983009808
    %v285 = vunpack.c.0.s8 %v284
    %v286 = vperm.slane %v282, %v285
    %v287 = vrot.slane %v275, 4
    %v288 = vsel %vm153, %v287, %v269
    %v289 = vrot.slane %v269, 4
    %v290 = vsel %vm153, %v275, %v289
    %v292 = vunpack.c.l.s4 1934713408
    %v293 = vunpack.c.0.s8 %v292
    %v294 = vperm.slane %v288, %v293
    %v296 = vunpack.c.l.s4 1934713408
    %v297 = vunpack.c.0.s8 %v296
    %v298 = vperm.slane %v290, %v297
    %v299 = vrot.slane %v286, 4
    %v300 = vsel %vm153, %v299, %v280
    %v301 = vrot.slane %v280, 4
    %v302 = vsel %vm153, %v286, %v301
    %v304 = vunpack.c.l.s4 1934713408
    %v305 = vunpack.c.0.s8 %v304
    %v306 = vperm.slane %v300, %v305
    %v308 = vunpack.c.l.s4 1934713408
    %v309 = vunpack.c.0.s8 %v308
    %v310 = vperm.slane %v302, %v309
    %v311 = vrot.slane %v306, 4
    %v312 = vsel %vm153, %v311, %v294
    %v313 = vrot.slane %v294, 4
    %v314 = vsel %vm153, %v306, %v313
    %v315 = vrot.slane %v310, 4
    %v316 = vsel %vm153, %v315, %v298
    %v317 = vrot.slane %v298, 4
    %v318 = vsel %vm153, %v310, %v317
    %v319 = vsel %vm153, %v259, %v240
    %v321 = vunpack.c.l.s4 1983009808
    %v322 = vunpack.c.0.s8 %v321
    %v323 = vperm.slane %v319, %v322
    %v324 = vrot.slane %v260, 4
    %v325 = vsel %vm153, %v324, %v258
    %v327 = vunpack.c.l.s4 1983009808
    %v328 = vunpack.c.0.s8 %v327
    %v329 = vperm.slane %v325, %v328
    %v330 = vsel %vm153, %v263, %v252
    %v332 = vunpack.c.l.s4 1983009808
    %v333 = vunpack.c.0.s8 %v332
    %v334 = vperm.slane %v330, %v333
    %v335 = vrot.slane %v264, 4
    %v336 = vsel %vm153, %v335, %v262
    %v338 = vunpack.c.l.s4 1983009808
    %v339 = vunpack.c.0.s8 %v338
    %v340 = vperm.slane %v336, %v339
    %v341 = vrot.slane %v329, 4
    %v342 = vsel %vm153, %v341, %v323
    %v343 = vrot.slane %v323, 4
    %v344 = vsel %vm153, %v329, %v343
    %v346 = vunpack.c.l.s4 1934713408
    %v347 = vunpack.c.0.s8 %v346
    %v348 = vperm.slane %v342, %v347
    %v350 = vunpack.c.l.s4 1934713408
    %v351 = vunpack.c.0.s8 %v350
    %v352 = vperm.slane %v344, %v351
    %v353 = vrot.slane %v340, 4
    %v354 = vsel %vm153, %v353, %v334
    %v355 = vrot.slane %v334, 4
    %v356 = vsel %vm153, %v340, %v355
    %v358 = vunpack.c.l.s4 1934713408
    %v359 = vunpack.c.0.s8 %v358
    %v360 = vperm.slane %v354, %v359
    %v362 = vunpack.c.l.s4 1934713408
    %v363 = vunpack.c.0.s8 %v362
    %v364 = vperm.slane %v356, %v363
    %v365 = vrot.slane %v360, 4
    %v366 = vsel %vm153, %v365, %v348
    %v367 = vrot.slane %v348, 4
    %v368 = vsel %vm153, %v360, %v367
    %v369 = vrot.slane %v364, 4
    %v370 = vsel %vm153, %v369, %v352
    %v371 = vrot.slane %v352, 4
    %v372 = vsel %vm153, %v364, %v371
    %373 = vrot.lane.b32.xlu0 %v127, 96
    %v374 = vpop.permute.xlu0 %373
    %375 = vrot.lane.b32.xlu0 %v130, 96
    %v376 = vpop.permute.xlu0 %375
    %377 = vrot.lane.b32.xlu0 %v135, 96
    %v378 = vpop.permute.xlu0 %377
    %379 = vrot.lane.b32.xlu0 %v137, 96
    %v380 = vpop.permute.xlu0 %379
    %381 = vrot.lane.b32.xlu0 %v141, 96
    %v382 = vpop.permute.xlu0 %381
    %383 = vrot.lane.b32.xlu0 %v143, 96
    %v384 = vpop.permute.xlu0 %383
    %385 = vrot.lane.b32.xlu0 %v147, 96
    %v386 = vpop.permute.xlu0 %385
    %387 = vrot.lane.b32.xlu0 %v149, 96
    %v388 = vpop.permute.xlu0 %387
    %v397 = vrot.slane %v382, 4
    %v398 = vsel %vm153, %v397, %v374
    %v399 = vrot.slane %v374, 4
    %v400 = vsel %vm153, %v382, %v399
    %v402 = vunpack.c.l.s4 1983009808
    %v403 = vunpack.c.0.s8 %v402
    %v404 = vperm.slane %v398, %v403
    %v406 = vunpack.c.l.s4 1983009808
    %v407 = vunpack.c.0.s8 %v406
    %v408 = vperm.slane %v400, %v407
    %v409 = vrot.slane %v386, 4
    %v410 = vsel %vm153, %v409, %v378
    %v411 = vrot.slane %v378, 4
    %v412 = vsel %vm153, %v386, %v411
    %v414 = vunpack.c.l.s4 1983009808
    %v415 = vunpack.c.0.s8 %v414
    %v416 = vperm.slane %v410, %v415
    %v418 = vunpack.c.l.s4 1983009808
    %v419 = vunpack.c.0.s8 %v418
    %v420 = vperm.slane %v412, %v419
    %v421 = vrot.slane %v416, 4
    %v422 = vsel %vm153, %v421, %v404
    %v423 = vrot.slane %v404, 4
    %v424 = vsel %vm153, %v416, %v423
    %v426 = vunpack.c.l.s4 1934713408
    %v427 = vunpack.c.0.s8 %v426
    %v428 = vperm.slane %v422, %v427
    %v430 = vunpack.c.l.s4 1934713408
    %v431 = vunpack.c.0.s8 %v430
    %v432 = vperm.slane %v424, %v431
    %v433 = vrot.slane %v420, 4
    %v434 = vsel %vm153, %v433, %v408
    %v435 = vrot.slane %v408, 4
    %v436 = vsel %vm153, %v420, %v435
    %v438 = vunpack.c.l.s4 1934713408
    %v439 = vunpack.c.0.s8 %v438
    %v440 = vperm.slane %v434, %v439
    %v442 = vunpack.c.l.s4 1934713408
    %v443 = vunpack.c.0.s8 %v442
    %v444 = vperm.slane %v436, %v443
    %v445 = vrot.slane %v428, 4
    %v446 = vsel %vm153, 0.0, %v445
    %v447 = vrot.slane %v432, 4
    %v448 = vsel %vm153, 0.0, %v447
    %v449 = vrot.slane %v440, 4
    %v450 = vsel %vm153, 0.0, %v449
    %v451 = vrot.slane %v444, 4
    %v452 = vsel %vm153, 0.0, %v451
    %v453 = vrot.slane %v384, 4
    %v454 = vsel %vm153, %v453, %v376
    %v455 = vrot.slane %v376, 4
    %v456 = vsel %vm153, %v384, %v455
    %v458 = vunpack.c.l.s4 1983009808
    %v459 = vunpack.c.0.s8 %v458
    %v460 = vperm.slane %v454, %v459
    %v462 = vunpack.c.l.s4 1983009808
    %v463 = vunpack.c.0.s8 %v462
    %v464 = vperm.slane %v456, %v463
    %v465 = vrot.slane %v388, 4
    %v466 = vsel %vm153, %v465, %v380
    %v467 = vrot.slane %v380, 4
    %v468 = vsel %vm153, %v388, %v467
    %v470 = vunpack.c.l.s4 1983009808
    %v471 = vunpack.c.0.s8 %v470
    %v472 = vperm.slane %v466, %v471
    %v474 = vunpack.c.l.s4 1983009808
    %v475 = vunpack.c.0.s8 %v474
    %v476 = vperm.slane %v468, %v475
    %v477 = vrot.slane %v472, 4
    %v478 = vsel %vm153, %v477, %v460
    %v479 = vrot.slane %v460, 4
    %v480 = vsel %vm153, %v472, %v479
    %v482 = vunpack.c.l.s4 1934713408
    %v483 = vunpack.c.0.s8 %v482
    %v484 = vperm.slane %v478, %v483
    %v486 = vunpack.c.l.s4 1934713408
    %v487 = vunpack.c.0.s8 %v486
    %v488 = vperm.slane %v480, %v487
    %v489 = vrot.slane %v476, 4
    %v490 = vsel %vm153, %v489, %v464
    %v491 = vrot.slane %v464, 4
    %v492 = vsel %vm153, %v476, %v491
    %v494 = vunpack.c.l.s4 1934713408
    %v495 = vunpack.c.0.s8 %v494
    %v496 = vperm.slane %v490, %v495
    %v498 = vunpack.c.l.s4 1934713408
    %v499 = vunpack.c.0.s8 %v498
    %v500 = vperm.slane %v492, %v499
    %v501 = vrot.slane %v484, 4
    %v502 = vsel %vm153, 0.0, %v501
    %v503 = vrot.slane %v488, 4
    %v504 = vsel %vm153, 0.0, %v503
    %v505 = vrot.slane %v496, 4
    %v506 = vsel %vm153, 0.0, %v505
    %v507 = vrot.slane %v500, 4
    %v508 = vsel %vm153, 0.0, %v507
    %v509 = vsel %vm153, %v447, %v428
    %v511 = vunpack.c.l.s4 1983009808
    %v512 = vunpack.c.0.s8 %v511
    %v513 = vperm.slane %v509, %v512
    %v514 = vrot.slane %v448, 4
    %v515 = vsel %vm153, %v514, %v446
    %v517 = vunpack.c.l.s4 1983009808
    %v518 = vunpack.c.0.s8 %v517
    %v519 = vperm.slane %v515, %v518
    %v520 = vsel %vm153, %v451, %v440
    %v522 = vunpack.c.l.s4 1983009808
    %v523 = vunpack.c.0.s8 %v522
    %v524 = vperm.slane %v520, %v523
    %v525 = vrot.slane %v452, 4
    %v526 = vsel %vm153, %v525, %v450
    %v528 = vunpack.c.l.s4 1983009808
    %v529 = vunpack.c.0.s8 %v528
    %v530 = vperm.slane %v526, %v529
    %v531 = vrot.slane %v519, 4
    %v532 = vsel %vm153, %v531, %v513
    %v533 = vrot.slane %v513, 4
    %v534 = vsel %vm153, %v519, %v533
    %v536 = vunpack.c.l.s4 1934713408
    %v537 = vunpack.c.0.s8 %v536
    %v538 = vperm.slane %v532, %v537
    %v540 = vunpack.c.l.s4 1934713408
    %v541 = vunpack.c.0.s8 %v540
    %v542 = vperm.slane %v534, %v541
    %v543 = vrot.slane %v530, 4
    %v544 = vsel %vm153, %v543, %v524
    %v545 = vrot.slane %v524, 4
    %v546 = vsel %vm153, %v530, %v545
    %v548 = vunpack.c.l.s4 1934713408
    %v549 = vunpack.c.0.s8 %v548
    %v550 = vperm.slane %v544, %v549
    %v552 = vunpack.c.l.s4 1934713408
    %v553 = vunpack.c.0.s8 %v552
    %v554 = vperm.slane %v546, %v553
    %v555 = vrot.slane %v550, 4
    %v556 = vsel %vm153, %v555, %v538
    %v557 = vrot.slane %v538, 4
    %v558 = vsel %vm153, %v550, %v557
    %v559 = vrot.slane %v554, 4
    %v560 = vsel %vm153, %v559, %v542
    %v561 = vrot.slane %v542, 4
    %v562 = vsel %vm153, %v554, %v561
    %v563 = vsel %vm153, %v503, %v484
    %v565 = vunpack.c.l.s4 1983009808
    %v566 = vunpack.c.0.s8 %v565
    %v567 = vperm.slane %v563, %v566
    %v568 = vrot.slane %v504, 4
    %v569 = vsel %vm153, %v568, %v502
    %v571 = vunpack.c.l.s4 1983009808
    %v572 = vunpack.c.0.s8 %v571
    %v573 = vperm.slane %v569, %v572
    %v574 = vsel %vm153, %v507, %v496
    %v576 = vunpack.c.l.s4 1983009808
    %v577 = vunpack.c.0.s8 %v576
    %v578 = vperm.slane %v574, %v577
    %v579 = vrot.slane %v508, 4
    %v580 = vsel %vm153, %v579, %v506
    %v582 = vunpack.c.l.s4 1983009808
    %v583 = vunpack.c.0.s8 %v582
    %v584 = vperm.slane %v580, %v583
    %v585 = vrot.slane %v573, 4
    %v586 = vsel %vm153, %v585, %v567
    %v587 = vrot.slane %v567, 4
    %v588 = vsel %vm153, %v573, %v587
    %v590 = vunpack.c.l.s4 1934713408
    %v591 = vunpack.c.0.s8 %v590
    %v592 = vperm.slane %v586, %v591
    %v594 = vunpack.c.l.s4 1934713408
    %v595 = vunpack.c.0.s8 %v594
    %v596 = vperm.slane %v588, %v595
    %v597 = vrot.slane %v584, 4
    %v598 = vsel %vm153, %v597, %v578
    %v599 = vrot.slane %v578, 4
    %v600 = vsel %vm153, %v584, %v599
    %v602 = vunpack.c.l.s4 1934713408
    %v603 = vunpack.c.0.s8 %v602
    %v604 = vperm.slane %v598, %v603
    %v606 = vunpack.c.l.s4 1934713408
    %v607 = vunpack.c.0.s8 %v606
    %v608 = vperm.slane %v600, %v607
    %v609 = vrot.slane %v604, 4
    %v610 = vsel %vm153, %v609, %v592
    %v611 = vrot.slane %v592, 4
    %v612 = vsel %vm153, %v604, %v611
    %v613 = vrot.slane %v608, 4
    %v614 = vsel %vm153, %v613, %v596
    %v615 = vrot.slane %v596, 4
    %v616 = vsel %vm153, %v608, %v615
    %617 = vrot.lane.b32.xlu0 %v127, 64
    %v618 = vpop.permute.xlu0 %617
    %619 = vrot.lane.b32.xlu0 %v130, 64
    %v620 = vpop.permute.xlu0 %619
    %621 = vrot.lane.b32.xlu0 %v135, 64
    %v622 = vpop.permute.xlu0 %621
    %623 = vrot.lane.b32.xlu0 %v137, 64
    %v624 = vpop.permute.xlu0 %623
    %625 = vrot.lane.b32.xlu0 %v141, 64
    %v626 = vpop.permute.xlu0 %625
    %627 = vrot.lane.b32.xlu0 %v143, 64
    %v628 = vpop.permute.xlu0 %627
    %629 = vrot.lane.b32.xlu0 %v147, 64
    %v630 = vpop.permute.xlu0 %629
    %631 = vrot.lane.b32.xlu0 %v149, 64
    %v632 = vpop.permute.xlu0 %631
    %v641 = vrot.slane %v626, 4
    %v642 = vsel %vm153, %v641, %v618
    %v643 = vrot.slane %v618, 4
    %v644 = vsel %vm153, %v626, %v643
    %v646 = vunpack.c.l.s4 1983009808
    %v647 = vunpack.c.0.s8 %v646
    %v648 = vperm.slane %v642, %v647
    %v650 = vunpack.c.l.s4 1983009808
    %v651 = vunpack.c.0.s8 %v650
    %v652 = vperm.slane %v644, %v651
    %v653 = vrot.slane %v630, 4
    %v654 = vsel %vm153, %v653, %v622
    %v655 = vrot.slane %v622, 4
    %v656 = vsel %vm153, %v630, %v655
    %v658 = vunpack.c.l.s4 1983009808
    %v659 = vunpack.c.0.s8 %v658
    %v660 = vperm.slane %v654, %v659
    %v662 = vunpack.c.l.s4 1983009808
    %v663 = vunpack.c.0.s8 %v662
    %v664 = vperm.slane %v656, %v663
    %v665 = vrot.slane %v660, 4
    %v666 = vsel %vm153, %v665, %v648
    %v667 = vrot.slane %v648, 4
    %v668 = vsel %vm153, %v660, %v667
    %v670 = vunpack.c.l.s4 1934713408
    %v671 = vunpack.c.0.s8 %v670
    %v672 = vperm.slane %v666, %v671
    %v674 = vunpack.c.l.s4 1934713408
    %v675 = vunpack.c.0.s8 %v674
    %v676 = vperm.slane %v668, %v675
    %v677 = vrot.slane %v664, 4
    %v678 = vsel %vm153, %v677, %v652
    %v679 = vrot.slane %v652, 4
    %v680 = vsel %vm153, %v664, %v679
    %v682 = vunpack.c.l.s4 1934713408
    %v683 = vunpack.c.0.s8 %v682
    %v684 = vperm.slane %v678, %v683
    %v686 = vunpack.c.l.s4 1934713408
    %v687 = vunpack.c.0.s8 %v686
    %v688 = vperm.slane %v680, %v687
    %v689 = vrot.slane %v672, 4
    %v690 = vsel %vm153, 0.0, %v689
    %v691 = vrot.slane %v676, 4
    %v692 = vsel %vm153, 0.0, %v691
    %v693 = vrot.slane %v684, 4
    %v694 = vsel %vm153, 0.0, %v693
    %v695 = vrot.slane %v688, 4
    %v696 = vsel %vm153, 0.0, %v695
    %v697 = vrot.slane %v628, 4
    %v698 = vsel %vm153, %v697, %v620
    %v699 = vrot.slane %v620, 4
    %v700 = vsel %vm153, %v628, %v699
    %v702 = vunpack.c.l.s4 1983009808
    %v703 = vunpack.c.0.s8 %v702
    %v704 = vperm.slane %v698, %v703
    %v706 = vunpack.c.l.s4 1983009808
    %v707 = vunpack.c.0.s8 %v706
    %v708 = vperm.slane %v700, %v707
    %v709 = vrot.slane %v632, 4
    %v710 = vsel %vm153, %v709, %v624
    %v711 = vrot.slane %v624, 4
    %v712 = vsel %vm153, %v632, %v711
    %v714 = vunpack.c.l.s4 1983009808
    %v715 = vunpack.c.0.s8 %v714
    %v716 = vperm.slane %v710, %v715
    %v718 = vunpack.c.l.s4 1983009808
    %v719 = vunpack.c.0.s8 %v718
    %v720 = vperm.slane %v712, %v719
    %v721 = vrot.slane %v716, 4
    %v722 = vsel %vm153, %v721, %v704
    %v723 = vrot.slane %v704, 4
    %v724 = vsel %vm153, %v716, %v723
    %v726 = vunpack.c.l.s4 1934713408
    %v727 = vunpack.c.0.s8 %v726
    %v728 = vperm.slane %v722, %v727
    %v730 = vunpack.c.l.s4 1934713408
    %v731 = vunpack.c.0.s8 %v730
    %v732 = vperm.slane %v724, %v731
    %v733 = vrot.slane %v720, 4
    %v734 = vsel %vm153, %v733, %v708
    %v735 = vrot.slane %v708, 4
    %v736 = vsel %vm153, %v720, %v735
    %v738 = vunpack.c.l.s4 1934713408
    %v739 = vunpack.c.0.s8 %v738
    %v740 = vperm.slane %v734, %v739
    %v742 = vunpack.c.l.s4 1934713408
    %v743 = vunpack.c.0.s8 %v742
    %v744 = vperm.slane %v736, %v743
    %v745 = vrot.slane %v728, 4
    %v746 = vsel %vm153, 0.0, %v745
    %v747 = vrot.slane %v732, 4
    %v748 = vsel %vm153, 0.0, %v747
    %v749 = vrot.slane %v740, 4
    %v750 = vsel %vm153, 0.0, %v749
    %v751 = vrot.slane %v744, 4
    %v752 = vsel %vm153, 0.0, %v751
    %v753 = vsel %vm153, %v691, %v672
    %v755 = vunpack.c.l.s4 1983009808
    %v756 = vunpack.c.0.s8 %v755
    %v757 = vperm.slane %v753, %v756
    %v758 = vrot.slane %v692, 4
    %v759 = vsel %vm153, %v758, %v690
    %v761 = vunpack.c.l.s4 1983009808
    %v762 = vunpack.c.0.s8 %v761
    %v763 = vperm.slane %v759, %v762
    %v764 = vsel %vm153, %v695, %v684
    %v766 = vunpack.c.l.s4 1983009808
    %v767 = vunpack.c.0.s8 %v766
    %v768 = vperm.slane %v764, %v767
    %v769 = vrot.slane %v696, 4
    %v770 = vsel %vm153, %v769, %v694
    %v772 = vunpack.c.l.s4 1983009808
    %v773 = vunpack.c.0.s8 %v772
    %v774 = vperm.slane %v770, %v773
    %v775 = vrot.slane %v763, 4
    %v776 = vsel %vm153, %v775, %v757
    %v777 = vrot.slane %v757, 4
    %v778 = vsel %vm153, %v763, %v777
    %v780 = vunpack.c.l.s4 1934713408
    %v781 = vunpack.c.0.s8 %v780
    %v782 = vperm.slane %v776, %v781
    %v784 = vunpack.c.l.s4 1934713408
    %v785 = vunpack.c.0.s8 %v784
    %v786 = vperm.slane %v778, %v785
    %v787 = vrot.slane %v774, 4
    %v788 = vsel %vm153, %v787, %v768
    %v789 = vrot.slane %v768, 4
    %v790 = vsel %vm153, %v774, %v789
    %v792 = vunpack.c.l.s4 1934713408
    %v793 = vunpack.c.0.s8 %v792
    %v794 = vperm.slane %v788, %v793
    %v796 = vunpack.c.l.s4 1934713408
    %v797 = vunpack.c.0.s8 %v796
    %v798 = vperm.slane %v790, %v797
    %v799 = vrot.slane %v794, 4
    %v800 = vsel %vm153, %v799, %v782
    %v801 = vrot.slane %v782, 4
    %v802 = vsel %vm153, %v794, %v801
    %v803 = vrot.slane %v798, 4
    %v804 = vsel %vm153, %v803, %v786
    %v805 = vrot.slane %v786, 4
    %v806 = vsel %vm153, %v798, %v805
    %v807 = vsel %vm153, %v747, %v728
    %v809 = vunpack.c.l.s4 1983009808
    %v810 = vunpack.c.0.s8 %v809
    %v811 = vperm.slane %v807, %v810
    %v812 = vrot.slane %v748, 4
    %v813 = vsel %vm153, %v812, %v746
    %v815 = vunpack.c.l.s4 1983009808
    %v816 = vunpack.c.0.s8 %v815
    %v817 = vperm.slane %v813, %v816
    %v818 = vsel %vm153, %v751, %v740
    %v820 = vunpack.c.l.s4 1983009808
    %v821 = vunpack.c.0.s8 %v820
    %v822 = vperm.slane %v818, %v821
    %v823 = vrot.slane %v752, 4
    %v824 = vsel %vm153, %v823, %v750
    %v826 = vunpack.c.l.s4 1983009808
    %v827 = vunpack.c.0.s8 %v826
    %v828 = vperm.slane %v824, %v827
    %v829 = vrot.slane %v817, 4
    %v830 = vsel %vm153, %v829, %v811
    %v831 = vrot.slane %v811, 4
    %v832 = vsel %vm153, %v817, %v831
    %v834 = vunpack.c.l.s4 1934713408
    %v835 = vunpack.c.0.s8 %v834
    %v836 = vperm.slane %v830, %v835
    %v838 = vunpack.c.l.s4 1934713408
    %v839 = vunpack.c.0.s8 %v838
    %v840 = vperm.slane %v832, %v839
    %v841 = vrot.slane %v828, 4
    %v842 = vsel %vm153, %v841, %v822
    %v843 = vrot.slane %v822, 4
    %v844 = vsel %vm153, %v828, %v843
    %v846 = vunpack.c.l.s4 1934713408
    %v847 = vunpack.c.0.s8 %v846
    %v848 = vperm.slane %v842, %v847
    %v850 = vunpack.c.l.s4 1934713408
    %v851 = vunpack.c.0.s8 %v850
    %v852 = vperm.slane %v844, %v851
    %v853 = vrot.slane %v848, 4
    %v854 = vsel %vm153, %v853, %v836
    %v855 = vrot.slane %v836, 4
    %v856 = vsel %vm153, %v848, %v855
    %v857 = vrot.slane %v852, 4
    %v858 = vsel %vm153, %v857, %v840
    %v859 = vrot.slane %v840, 4
    %v860 = vsel %vm153, %v852, %v859
    %vm861 = vcmask 64512
    %v863 = vsel %vm861, %v312, 0
    %v866 = vsel %vm861, %v366, 0
    %v869 = vsel %vm861, %v556, 0
    %v872 = vsel %vm861, %v610, 0
    %874 = vmatpush.xpose.msra.mxu0 0.0
    %875 = vmatpush.xpose.msra.mxu0 0.0
    %876 = vmatpush.xpose.msra.mxu0 0.0
    %877 = vmatpush.xpose.msra.mxu0 0.0
    %878 = vmatpush.xpose.msra.mxu0 0.0
    %879 = vmatpush.xpose.msra.mxu0 0.0
    %880 = vmatpush.xpose.msra.mxu0 0.0
    %881 = vmatpush.xpose.msra.mxu0 0.0
    %882 = vmatpush.xpose.msra.mxu0 0.0
    %883 = vmatpush.xpose.msra.mxu0 0.0
    %884 = vmatpush.xpose.msra.mxu0 0.0
    %885 = vmatpush.xpose.msra.mxu0 0.0
    %886 = vmatpush.xpose.msra.mxu0 0.0
    %887 = vmatpush.xpose.msra.mxu0 0.0
    %888 = vmatpush.xpose.msra.mxu0 %v872
    %889 = vmatpush.xpose.msra.mxu0 %v869
    %890 = vmatmul.f32.gmra.mxu0 %v863
    %v891 = vpop.f32.mrf.mxu0
    %v892 = vadd.f32 0.0, %v891
    %893 = vmatmul.f32.gmra.mxu0 %v866
    %v894 = vpop.f32.mrf.mxu0
    %v895 = vadd.f32 0.0, %v894
    %896 = vdwg.mxu0
    %v898 = vsel %vm861, %v314, 0
    %v901 = vsel %vm861, %v368, 0
    %v904 = vsel %vm861, %v558, 0
    %v907 = vsel %vm861, %v612, 0
    %909 = vmatpush.xpose.msra.mxu0 0.0
    %910 = vmatpush.xpose.msra.mxu0 0.0
    %911 = vmatpush.xpose.msra.mxu0 0.0
    %912 = vmatpush.xpose.msra.mxu0 0.0
    %913 = vmatpush.xpose.msra.mxu0 0.0
    %914 = vmatpush.xpose.msra.mxu0 0.0
    %915 = vmatpush.xpose.msra.mxu0 0.0
    %916 = vmatpush.xpose.msra.mxu0 0.0
    %917 = vmatpush.xpose.msra.mxu0 0.0
    %918 = vmatpush.xpose.msra.mxu0 0.0
    %919 = vmatpush.xpose.msra.mxu0 0.0
    %920 = vmatpush.xpose.msra.mxu0 0.0
    %921 = vmatpush.xpose.msra.mxu0 0.0
    %922 = vmatpush.xpose.msra.mxu0 0.0
    %923 = vmatpush.xpose.msra.mxu0 %v907
    %924 = vmatpush.xpose.msra.mxu0 %v904
    %925 = vmatmul.f32.gmra.mxu0 %v898
    %v926 = vpop.f32.mrf.mxu0
    %v927 = vadd.f32 0.0, %v926
    %928 = vmatmul.f32.gmra.mxu0 %v901
    %v929 = vpop.f32.mrf.mxu0
    %v930 = vadd.f32 0.0, %v929
    %931 = vdwg.mxu0
    %v933 = vsel %vm861, %v316, 0
    %v936 = vsel %vm861, %v370, 0
    %v939 = vsel %vm861, %v560, 0
    %v942 = vsel %vm861, %v614, 0
    %944 = vmatpush.xpose.msra.mxu0 0.0
    %945 = vmatpush.xpose.msra.mxu0 0.0
    %946 = vmatpush.xpose.msra.mxu0 0.0
    %947 = vmatpush.xpose.msra.mxu0 0.0
    %948 = vmatpush.xpose.msra.mxu0 0.0
    %949 = vmatpush.xpose.msra.mxu0 0.0
    %950 = vmatpush.xpose.msra.mxu0 0.0
    %951 = vmatpush.xpose.msra.mxu0 0.0
    %952 = vmatpush.xpose.msra.mxu0 0.0
    %953 = vmatpush.xpose.msra.mxu0 0.0
    %954 = vmatpush.xpose.msra.mxu0 0.0
    %955 = vmatpush.xpose.msra.mxu0 0.0
    %956 = vmatpush.xpose.msra.mxu0 0.0
    %957 = vmatpush.xpose.msra.mxu0 0.0
    %958 = vmatpush.xpose.msra.mxu0 %v942
    %959 = vmatpush.xpose.msra.mxu0 %v939
    %960 = vmatmul.f32.gmra.mxu0 %v933
    %v961 = vpop.f32.mrf.mxu0
    %v962 = vadd.f32 0.0, %v961
    %963 = vmatmul.f32.gmra.mxu0 %v936
    %v964 = vpop.f32.mrf.mxu0
    %v965 = vadd.f32 0.0, %v964
    %966 = vdwg.mxu0
    %v968 = vsel %vm861, %v318, 0
    %v971 = vsel %vm861, %v372, 0
    %v974 = vsel %vm861, %v562, 0
    %v977 = vsel %vm861, %v616, 0
    %979 = vmatpush.xpose.msra.mxu0 0.0
    %980 = vmatpush.xpose.msra.mxu0 0.0
    %981 = vmatpush.xpose.msra.mxu0 0.0
    %982 = vmatpush.xpose.msra.mxu0 0.0
    %983 = vmatpush.xpose.msra.mxu0 0.0
    %984 = vmatpush.xpose.msra.mxu0 0.0
    %985 = vmatpush.xpose.msra.mxu0 0.0
    %986 = vmatpush.xpose.msra.mxu0 0.0
    %987 = vmatpush.xpose.msra.mxu0 0.0
    %988 = vmatpush.xpose.msra.mxu0 0.0
    %989 = vmatpush.xpose.msra.mxu0 0.0
    %990 = vmatpush.xpose.msra.mxu0 0.0
    %991 = vmatpush.xpose.msra.mxu0 0.0
    %992 = vmatpush.xpose.msra.mxu0 0.0
    %993 = vmatpush.xpose.msra.mxu0 %v977
    %994 = vmatpush.xpose.msra.mxu0 %v974
    %995 = vmatmul.f32.gmra.mxu0 %v968
    %v996 = vpop.f32.mrf.mxu0
    %v997 = vadd.f32 0.0, %v996
    %998 = vmatmul.f32.gmra.mxu0 %v971
    %v999 = vpop.f32.mrf.mxu0
    %v1000 = vadd.f32 0.0, %v999
    %1001 = vdwg.mxu0
    %v1002 = vmul.f32 %v892, 0.35355338
    %v1003 = vmul.f32 %v895, 0.35355338
    %v1004 = vmul.f32 %v927, 0.35355338
    %v1005 = vmul.f32 %v930, 0.35355338
    %v1006 = vmul.f32 %v962, 0.35355338
    %v1007 = vmul.f32 %v965, 0.35355338
    %v1008 = vmul.f32 %v997, 0.35355338
    %v1009 = vmul.f32 %v1000, 0.35355338
    %v1010 = vadd.f32 %v1002, %v86
    %v1011 = vadd.f32 %v1003, %v87
    %v1012 = vadd.f32 %v1004, %v86
    %v1013 = vadd.f32 %v1005, %v87
    %v1014 = vadd.f32 %v1006, %v86
    %v1015 = vadd.f32 %v1007, %v87
    %v1016 = vadd.f32 %v1008, %v86
    %v1017 = vadd.f32 %v1009, %v87
    %vm1018 = vcmask 130048
    %v1019 = vsel %vm1018, %v1010, -inf
    %1020 = vmax.xlane.f32.xlu0 %v1019
    %v1021 = vpop.xlane.xlu0 %1020
    %v1022 = vsel %vm1018, %v1011, -inf
    %1023 = vmax.xlane.f32.xlu0 %v1022
    %v1024 = vpop.xlane.xlu0 %1023
    %v1025 = vsel %vm1018, %v1012, -inf
    %1026 = vmax.xlane.f32.xlu0 %v1025
    %v1027 = vpop.xlane.xlu0 %1026
    %v1028 = vsel %vm1018, %v1013, -inf
    %1029 = vmax.xlane.f32.xlu0 %v1028
    %v1030 = vpop.xlane.xlu0 %1029
    %v1031 = vsel %vm1018, %v1014, -inf
    %1032 = vmax.xlane.f32.xlu0 %v1031
    %v1033 = vpop.xlane.xlu0 %1032
    %v1034 = vsel %vm1018, %v1015, -inf
    %1035 = vmax.xlane.f32.xlu0 %v1034
    %v1036 = vpop.xlane.xlu0 %1035
    %v1037 = vsel %vm1018, %v1016, -inf
    %1038 = vmax.xlane.f32.xlu0 %v1037
    %v1039 = vpop.xlane.xlu0 %1038
    %v1040 = vsel %vm1018, %v1017, -inf
    %1041 = vmax.xlane.f32.xlu0 %v1040
    %v1042 = vpop.xlane.xlu0 %1041
    %v1043 = vsub.f32 %v1010, %v1021
    %v1044 = vsub.f32 %v1011, %v1024
    %v1045 = vsub.f32 %v1012, %v1027
    %v1046 = vsub.f32 %v1013, %v1030
    %v1047 = vsub.f32 %v1014, %v1033
    %v1048 = vsub.f32 %v1015, %v1036
    %v1049 = vsub.f32 %v1016, %v1039
    %v1050 = vsub.f32 %v1017, %v1042
    %v1051 = vmul.f32 %v1043, 1.442695
    %v1052 = vpow.pop %v1051
    %v1053 = vmul.f32 %v1044, 1.442695
    %v1054 = vpow.pop %v1053
    %v1055 = vmul.f32 %v1045, 1.442695
    %v1056 = vpow.pop %v1055
    %v1057 = vmul.f32 %v1046, 1.442695
    %v1058 = vpow.pop %v1057
    %v1059 = vmul.f32 %v1047, 1.442695
    %v1060 = vpow.pop %v1059
    %v1061 = vmul.f32 %v1048, 1.442695
    %v1062 = vpow.pop %v1061
    %v1063 = vmul.f32 %v1049, 1.442695
    %v1064 = vpow.pop %v1063
    %v1065 = vmul.f32 %v1050, 1.442695
    %v1066 = vpow.pop %v1065
    %v1067 = vsel %vm1018, %v1052, 0.0
    %1068 = vadd.xlane.f32.xlu0 %v1067
    %v1069 = vpop.xlane.xlu0 %1068
    %v1070 = vsel %vm1018, %v1054, 0.0
    %1071 = vadd.xlane.f32.xlu0 %v1070
    %v1072 = vpop.xlane.xlu0 %1071
    %v1073 = vsel %vm1018, %v1056, 0.0
    %1074 = vadd.xlane.f32.xlu0 %v1073
    %v1075 = vpop.xlane.xlu0 %1074
    %v1076 = vsel %vm1018, %v1058, 0.0
    %1077 = vadd.xlane.f32.xlu0 %v1076
    %v1078 = vpop.xlane.xlu0 %1077
    %v1079 = vsel %vm1018, %v1060, 0.0
    %1080 = vadd.xlane.f32.xlu0 %v1079
    %v1081 = vpop.xlane.xlu0 %1080
    %v1082 = vsel %vm1018, %v1062, 0.0
    %1083 = vadd.xlane.f32.xlu0 %v1082
    %v1084 = vpop.xlane.xlu0 %1083
    %v1085 = vsel %vm1018, %v1064, 0.0
    %1086 = vadd.xlane.f32.xlu0 %v1085
    %v1087 = vpop.xlane.xlu0 %1086
    %v1088 = vsel %vm1018, %v1066, 0.0
    %1089 = vadd.xlane.f32.xlu0 %v1088
    %v1090 = vpop.xlane.xlu0 %1089
    %v1091 = vrcp.pop %v1069
    %v1092 = vrcp.pop %v1072
    %v1093 = vrcp.pop %v1075
    %v1094 = vrcp.pop %v1078
    %v1095 = vrcp.pop %v1081
    %v1096 = vrcp.pop %v1084
    %v1097 = vrcp.pop %v1087
    %v1098 = vrcp.pop %v1090
    %v1099 = vmul.f32 %v1052, %v1091
    %v1100 = vmul.f32 %v1054, %v1092
    %v1101 = vmul.f32 %v1056, %v1093
    %v1102 = vmul.f32 %v1058, %v1094
    %v1103 = vmul.f32 %v1060, %v1095
    %v1104 = vmul.f32 %v1062, %v1096
    %v1105 = vmul.f32 %v1064, %v1097
    %v1106 = vmul.f32 %v1066, %v1098
    %v1108 = vsel %vm1018, %v1099, 0
    %v1111 = vsel %vm1018, %v1100, 0
    %1113 = vmatpush.msra.mxu0 0.0
    %1114 = vmatpush.msra.mxu0 0.0
    %1115 = vmatpush.msra.mxu0 0.0
    %1116 = vmatpush.msra.mxu0 0.0
    %1117 = vmatpush.msra.mxu0 0.0
    %1118 = vmatpush.msra.mxu0 0.0
    %1119 = vmatpush.msra.mxu0 0.0
    %1120 = vmatpush.msra.mxu0 0.0
    %1121 = vmatpush.msra.mxu0 0.0
    %1122 = vmatpush.msra.mxu0 0.0
    %1123 = vmatpush.msra.mxu0 0.0
    %1124 = vmatpush.msra.mxu0 0.0
    %1125 = vmatpush.msra.mxu0 0.0
    %1126 = vmatpush.msra.mxu0 0.0
    %1127 = vmatpush.msra.mxu0 %v854
    %1128 = vmatpush.msra.mxu0 %v800
    %1129 = vmatmul.f32.gmra.mxu0 %v1108
    %v1130 = vpop.f32.mrf.mxu0
    %v1131 = vadd.f32 0.0, %v1130
    %1132 = vmatmul.f32.gmra.mxu0 %v1111
    %v1133 = vpop.f32.mrf.mxu0
    %v1134 = vadd.f32 0.0, %v1133
    %1135 = vdwg.mxu0
    %v1137 = vsel %vm1018, %v1101, 0
    %v1140 = vsel %vm1018, %v1102, 0
    %1142 = vmatpush.msra.mxu0 0.0
    %1143 = vmatpush.msra.mxu0 0.0
    %1144 = vmatpush.msra.mxu0 0.0
    %1145 = vmatpush.msra.mxu0 0.0
    %1146 = vmatpush.msra.mxu0 0.0
    %1147 = vmatpush.msra.mxu0 0.0
    %1148 = vmatpush.msra.mxu0 0.0
    %1149 = vmatpush.msra.mxu0 0.0
    %1150 = vmatpush.msra.mxu0 0.0
    %1151 = vmatpush.msra.mxu0 0.0
    %1152 = vmatpush.msra.mxu0 0.0
    %1153 = vmatpush.msra.mxu0 0.0
    %1154 = vmatpush.msra.mxu0 0.0
    %1155 = vmatpush.msra.mxu0 0.0
    %1156 = vmatpush.msra.mxu0 %v856
    %1157 = vmatpush.msra.mxu0 %v802
    %1158 = vmatmul.f32.gmra.mxu0 %v1137
    %v1159 = vpop.f32.mrf.mxu0
    %v1160 = vadd.f32 0.0, %v1159
    %1161 = vmatmul.f32.gmra.mxu0 %v1140
    %v1162 = vpop.f32.mrf.mxu0
    %v1163 = vadd.f32 0.0, %v1162
    %1164 = vdwg.mxu0
    %v1166 = vsel %vm1018, %v1103, 0
    %v1169 = vsel %vm1018, %v1104, 0
    %1171 = vmatpush.msra.mxu0 0.0
    %1172 = vmatpush.msra.mxu0 0.0
    %1173 = vmatpush.msra.mxu0 0.0
    %1174 = vmatpush.msra.mxu0 0.0
    %1175 = vmatpush.msra.mxu0 0.0
    %1176 = vmatpush.msra.mxu0 0.0
    %1177 = vmatpush.msra.mxu0 0.0
    %1178 = vmatpush.msra.mxu0 0.0
    %1179 = vmatpush.msra.mxu0 0.0
    %1180 = vmatpush.msra.mxu0 0.0
    %1181 = vmatpush.msra.mxu0 0.0
    %1182 = vmatpush.msra.mxu0 0.0
    %1183 = vmatpush.msra.mxu0 0.0
    %1184 = vmatpush.msra.mxu0 0.0
    %1185 = vmatpush.msra.mxu0 %v858
    %1186 = vmatpush.msra.mxu0 %v804
    %1187 = vmatmul.f32.gmra.mxu0 %v1166
    %v1188 = vpop.f32.mrf.mxu0
    %v1189 = vadd.f32 0.0, %v1188
    %1190 = vmatmul.f32.gmra.mxu0 %v1169
    %v1191 = vpop.f32.mrf.mxu0
    %v1192 = vadd.f32 0.0, %v1191
    %1193 = vdwg.mxu0
    %v1195 = vsel %vm1018, %v1105, 0
    %v1198 = vsel %vm1018, %v1106, 0
    %1200 = vmatpush.msra.mxu0 0.0
    %1201 = vmatpush.msra.mxu0 0.0
    %1202 = vmatpush.msra.mxu0 0.0
    %1203 = vmatpush.msra.mxu0 0.0
    %1204 = vmatpush.msra.mxu0 0.0
    %1205 = vmatpush.msra.mxu0 0.0
    %1206 = vmatpush.msra.mxu0 0.0
    %1207 = vmatpush.msra.mxu0 0.0
    %1208 = vmatpush.msra.mxu0 0.0
    %1209 = vmatpush.msra.mxu0 0.0
    %1210 = vmatpush.msra.mxu0 0.0
    %1211 = vmatpush.msra.mxu0 0.0
    %1212 = vmatpush.msra.mxu0 0.0
    %1213 = vmatpush.msra.mxu0 0.0
    %1214 = vmatpush.msra.mxu0 %v860
    %1215 = vmatpush.msra.mxu0 %v806
    %1216 = vmatmul.f32.gmra.mxu0 %v1195
    %v1217 = vpop.f32.mrf.mxu0
    %v1218 = vadd.f32 0.0, %v1217
    %1219 = vmatmul.f32.gmra.mxu0 %v1198
    %v1220 = vpop.f32.mrf.mxu0
    %v1221 = vadd.f32 0.0, %v1220
    %1222 = vdwg.mxu0
    %v1223 = vrot.slane %v1189, 4
    %v1224 = vsel %vm153, %v1223, %v1131
    %v1225 = vrot.slane %v1131, 4
    %v1226 = vsel %vm153, %v1189, %v1225
    %v1228 = vunpack.c.l.s4 1983009808
    %v1229 = vunpack.c.0.s8 %v1228
    %v1230 = vperm.slane %v1224, %v1229
    %v1232 = vunpack.c.l.s4 1983009808
    %v1233 = vunpack.c.0.s8 %v1232
    %v1234 = vperm.slane %v1226, %v1233
    %v1235 = vrot.slane %v1218, 4
    %v1236 = vsel %vm153, %v1235, %v1160
    %v1237 = vrot.slane %v1160, 4
    %v1238 = vsel %vm153, %v1218, %v1237
    %v1240 = vunpack.c.l.s4 1983009808
    %v1241 = vunpack.c.0.s8 %v1240
    %v1242 = vperm.slane %v1236, %v1241
    %v1244 = vunpack.c.l.s4 1983009808
    %v1245 = vunpack.c.0.s8 %v1244
    %v1246 = vperm.slane %v1238, %v1245
    %v1247 = vrot.slane %v1242, 4
    %v1248 = vsel %vm153, %v1247, %v1230
    %v1249 = vrot.slane %v1230, 4
    %v1250 = vsel %vm153, %v1242, %v1249
    %v1252 = vunpack.c.l.s4 1934713408
    %v1253 = vunpack.c.0.s8 %v1252
    %v1254 = vperm.slane %v1248, %v1253
    %v1256 = vunpack.c.l.s4 1934713408
    %v1257 = vunpack.c.0.s8 %v1256
    %v1258 = vperm.slane %v1250, %v1257
    %v1259 = vrot.slane %v1246, 4
    %v1260 = vsel %vm153, %v1259, %v1234
    %v1261 = vrot.slane %v1234, 4
    %v1262 = vsel %vm153, %v1246, %v1261
    %v1264 = vunpack.c.l.s4 1934713408
    %v1265 = vunpack.c.0.s8 %v1264
    %v1266 = vperm.slane %v1260, %v1265
    %v1268 = vunpack.c.l.s4 1934713408
    %v1269 = vunpack.c.0.s8 %v1268
    %v1270 = vperm.slane %v1262, %v1269
    %v1271 = vrot.slane %v1254, 4
    %v1272 = vsel %vm153, 0.0, %v1271
    %v1273 = vrot.slane %v1258, 4
    %v1274 = vsel %vm153, 0.0, %v1273
    %v1275 = vrot.slane %v1266, 4
    %v1276 = vsel %vm153, 0.0, %v1275
    %v1277 = vrot.slane %v1270, 4
    %v1278 = vsel %vm153, 0.0, %v1277
    %v1279 = vrot.slane %v1192, 4
    %v1280 = vsel %vm153, %v1279, %v1134
    %v1281 = vrot.slane %v1134, 4
    %v1282 = vsel %vm153, %v1192, %v1281
    %v1284 = vunpack.c.l.s4 1983009808
    %v1285 = vunpack.c.0.s8 %v1284
    %v1286 = vperm.slane %v1280, %v1285
    %v1288 = vunpack.c.l.s4 1983009808
    %v1289 = vunpack.c.0.s8 %v1288
    %v1290 = vperm.slane %v1282, %v1289
    %v1291 = vrot.slane %v1221, 4
    %v1292 = vsel %vm153, %v1291, %v1163
    %v1293 = vrot.slane %v1163, 4
    %v1294 = vsel %vm153, %v1221, %v1293
    %v1296 = vunpack.c.l.s4 1983009808
    %v1297 = vunpack.c.0.s8 %v1296
    %v1298 = vperm.slane %v1292, %v1297
    %v1300 = vunpack.c.l.s4 1983009808
    %v1301 = vunpack.c.0.s8 %v1300
    %v1302 = vperm.slane %v1294, %v1301
    %v1303 = vrot.slane %v1298, 4
    %v1304 = vsel %vm153, %v1303, %v1286
    %v1305 = vrot.slane %v1286, 4
    %v1306 = vsel %vm153, %v1298, %v1305
    %v1308 = vunpack.c.l.s4 1934713408
    %v1309 = vunpack.c.0.s8 %v1308
    %v1310 = vperm.slane %v1304, %v1309
    %v1312 = vunpack.c.l.s4 1934713408
    %v1313 = vunpack.c.0.s8 %v1312
    %v1314 = vperm.slane %v1306, %v1313
    %v1315 = vrot.slane %v1302, 4
    %v1316 = vsel %vm153, %v1315, %v1290
    %v1317 = vrot.slane %v1290, 4
    %v1318 = vsel %vm153, %v1302, %v1317
    %v1320 = vunpack.c.l.s4 1934713408
    %v1321 = vunpack.c.0.s8 %v1320
    %v1322 = vperm.slane %v1316, %v1321
    %v1324 = vunpack.c.l.s4 1934713408
    %v1325 = vunpack.c.0.s8 %v1324
    %v1326 = vperm.slane %v1318, %v1325
    %v1327 = vrot.slane %v1310, 4
    %v1328 = vsel %vm153, 0.0, %v1327
    %v1329 = vrot.slane %v1314, 4
    %v1330 = vsel %vm153, 0.0, %v1329
    %v1331 = vrot.slane %v1322, 4
    %v1332 = vsel %vm153, 0.0, %v1331
    %v1333 = vrot.slane %v1326, 4
    %v1334 = vsel %vm153, 0.0, %v1333
    %v1335 = vsel %vm153, %v1273, %v1254
    %v1337 = vunpack.c.l.s4 1983009808
    %v1338 = vunpack.c.0.s8 %v1337
    %v1339 = vperm.slane %v1335, %v1338
    %v1340 = vrot.slane %v1274, 4
    %v1341 = vsel %vm153, %v1340, %v1272
    %v1343 = vunpack.c.l.s4 1983009808
    %v1344 = vunpack.c.0.s8 %v1343
    %v1345 = vperm.slane %v1341, %v1344
    %v1346 = vsel %vm153, %v1277, %v1266
    %v1348 = vunpack.c.l.s4 1983009808
    %v1349 = vunpack.c.0.s8 %v1348
    %v1350 = vperm.slane %v1346, %v1349
    %v1351 = vrot.slane %v1278, 4
    %v1352 = vsel %vm153, %v1351, %v1276
    %v1354 = vunpack.c.l.s4 1983009808
    %v1355 = vunpack.c.0.s8 %v1354
    %v1356 = vperm.slane %v1352, %v1355
    %v1357 = vrot.slane %v1345, 4
    %v1358 = vsel %vm153, %v1357, %v1339
    %v1359 = vrot.slane %v1339, 4
    %v1360 = vsel %vm153, %v1345, %v1359
    %v1362 = vunpack.c.l.s4 1934713408
    %v1363 = vunpack.c.0.s8 %v1362
    %v1364 = vperm.slane %v1358, %v1363
    %v1366 = vunpack.c.l.s4 1934713408
    %v1367 = vunpack.c.0.s8 %v1366
    %v1368 = vperm.slane %v1360, %v1367
    %v1369 = vrot.slane %v1356, 4
    %v1370 = vsel %vm153, %v1369, %v1350
    %v1371 = vrot.slane %v1350, 4
    %v1372 = vsel %vm153, %v1356, %v1371
    %v1374 = vunpack.c.l.s4 1934713408
    %v1375 = vunpack.c.0.s8 %v1374
    %v1376 = vperm.slane %v1370, %v1375
    %v1378 = vunpack.c.l.s4 1934713408
    %v1379 = vunpack.c.0.s8 %v1378
    %v1380 = vperm.slane %v1372, %v1379
    %v1381 = vrot.slane %v1376, 4
    %v1382 = vsel %vm153, %v1381, %v1364
    %v1383 = vrot.slane %v1364, 4
    %v1384 = vsel %vm153, %v1376, %v1383
    %v1385 = vrot.slane %v1380, 4
    %v1386 = vsel %vm153, %v1385, %v1368
    %v1387 = vrot.slane %v1368, 4
    %v1388 = vsel %vm153, %v1380, %v1387
    %v1389 = vsel %vm153, %v1329, %v1310
    %v1391 = vunpack.c.l.s4 1983009808
    %v1392 = vunpack.c.0.s8 %v1391
    %v1393 = vperm.slane %v1389, %v1392
    %v1394 = vrot.slane %v1330, 4
    %v1395 = vsel %vm153, %v1394, %v1328
    %v1397 = vunpack.c.l.s4 1983009808
    %v1398 = vunpack.c.0.s8 %v1397
    %v1399 = vperm.slane %v1395, %v1398
    %v1400 = vsel %vm153, %v1333, %v1322
    %v1402 = vunpack.c.l.s4 1983009808
    %v1403 = vunpack.c.0.s8 %v1402
    %v1404 = vperm.slane %v1400, %v1403
    %v1405 = vrot.slane %v1334, 4
    %v1406 = vsel %vm153, %v1405, %v1332
    %v1408 = vunpack.c.l.s4 1983009808
    %v1409 = vunpack.c.0.s8 %v1408
    %v1410 = vperm.slane %v1406, %v1409
    %v1411 = vrot.slane %v1399, 4
    %v1412 = vsel %vm153, %v1411, %v1393
    %v1413 = vrot.slane %v1393, 4
    %v1414 = vsel %vm153, %v1399, %v1413
    %v1416 = vunpack.c.l.s4 1934713408
    %v1417 = vunpack.c.0.s8 %v1416
    %v1418 = vperm.slane %v1412, %v1417
    %v1420 = vunpack.c.l.s4 1934713408
    %v1421 = vunpack.c.0.s8 %v1420
    %v1422 = vperm.slane %v1414, %v1421
    %v1423 = vrot.slane %v1410, 4
    %v1424 = vsel %vm153, %v1423, %v1404
    %v1425 = vrot.slane %v1404, 4
    %v1426 = vsel %vm153, %v1410, %v1425
    %v1428 = vunpack.c.l.s4 1934713408
    %v1429 = vunpack.c.0.s8 %v1428
    %v1430 = vperm.slane %v1424, %v1429
    %v1432 = vunpack.c.l.s4 1934713408
    %v1433 = vunpack.c.0.s8 %v1432
    %v1434 = vperm.slane %v1426, %v1433
    %v1435 = vrot.slane %v1430, 4
    %v1436 = vsel %vm153, %v1435, %v1418
    %v1437 = vrot.slane %v1418, 4
    %v1438 = vsel %vm153, %v1430, %v1437
    %v1439 = vrot.slane %v1434, 4
    %v1440 = vsel %vm153, %v1439, %v1422
    %v1441 = vrot.slane %v1422, 4
    %v1442 = vsel %vm153, %v1434, %v1441
    %1445 = vrot.lane.b32.xlu0 %v1384, 8
    %v1446 = vpop.permute.xlu0 %1445
    %1447 = vrot.lane.b32.xlu0 %v1438, 8
    %v1448 = vpop.permute.xlu0 %1447
    %1453 = vrot.lane.b32.xlu0 %v1386, 16
    %v1454 = vpop.permute.xlu0 %1453
    %1455 = vrot.lane.b32.xlu0 %v1440, 16
    %v1456 = vpop.permute.xlu0 %1455
    %1461 = vrot.lane.b32.xlu0 %v1388, 24
    %v1462 = vpop.permute.xlu0 %1461
    %1463 = vrot.lane.b32.xlu0 %v1442, 24
    %v1464 = vpop.permute.xlu0 %1463
    %v1467 = vsel %vm861, %v1382, %v1446
    %v1468 = vsel %vm861, %v1436, %v1448
    %v1469 = vsel %vm1018, %v1467, %v1454
    %v1470 = vsel %vm1018, %v1468, %v1456
    %vm1471 = vcmask 195584
    %v1472 = vsel %vm1471, %v1469, %v1462
    %v1473 = vsel %vm1471, %v1470, %v1464
    %1478 = vrot.lane.b32.xlu0 %v88, 32
    %v1479 = vpop.permute.xlu0 %1478
    %1480 = vrot.lane.b32.xlu0 %v90, 32
    %v1481 = vpop.permute.xlu0 %1480
    %1482 = vrot.lane.b32.xlu0 %v92, 32
    %v1483 = vpop.permute.xlu0 %1482
    %1484 = vrot.lane.b32.xlu0 %v94, 32
    %v1485 = vpop.permute.xlu0 %1484
    %1490 = vrot.lane.b32.xlu0 %v100, 32
    %v1491 = vpop.permute.xlu0 %1490
    %v1494 = vsel %vm102, %v1472, 0
    %v1497 = vsel %vm102, %v1473, 0
    %1499 = vmatpush.msra.mxu0 0.0
    %1500 = vmatpush.msra.mxu0 0.0
    %1501 = vmatpush.msra.mxu0 0.0
    %1502 = vmatpush.msra.mxu0 0.0
    %1503 = vmatpush.msra.mxu0 0.0
    %1504 = vmatpush.msra.mxu0 0.0
    %1505 = vmatpush.msra.mxu0 0.0
    %1506 = vmatpush.msra.mxu0 0.0
    %1507 = vmatpush.msra.mxu0 0.0
    %1508 = vmatpush.msra.mxu0 0.0
    %1509 = vmatpush.msra.mxu0 0.0
    %1510 = vmatpush.msra.mxu0 0.0
    %1511 = vmatpush.msra.mxu0 %v1485
    %1512 = vmatpush.msra.mxu0 %v1483
    %1513 = vmatpush.msra.mxu0 %v1481
    %1514 = vmatpush.msra.mxu0 %v1479
    %1515 = vmatmul.f32.gmra.mxu0 %v1494
    %v1516 = vpop.f32.mrf.mxu0
    %v1517 = vadd.f32 %v1491, %v1516
    %1518 = vmatmul.f32.gmra.mxu0 %v1497
    %v1519 = vpop.f32.mrf.mxu0
    %v1520 = vadd.f32 %v1491, %v1519
    %1521 = vdwg.mxu0
    %v1522 = vadd.f32 %v1517, %v84
    %v1523 = vadd.f32 %v1520, %v85
    %v1524 = vsel %vm102, %v1522, 0.0
    %1525 = vadd.xlane.f32.xlu0 %v1524
    %v1526 = vpop.xlane.xlu0 %1525
    %v1527 = vsel %vm102, %v1523, 0.0
    %1528 = vadd.xlane.f32.xlu0 %v1527
    %v1529 = vpop.xlane.xlu0 %1528
    %v1530 = vrcp.pop 32.0
    %v1531 = vmul.f32 32.0, %v1530
    %v1532 = vsub.f32 1.0, %v1531
    %v1533 = vmul.f32 %v1530, %v1532
    %v1534 = vadd.f32 %v1530, %v1533
    %vm1535 = vweird.f32 %v1530
    %v1536 = vsel %vm1535, %v1530, %v1534
    %v1537 = vmul.f32 %v1526, %v1536
    %v1538 = vmul.f32 %v1529, %v1536
    %v1539 = vsub.f32 %v1522, %v1537
    %v1540 = vsub.f32 %v1523, %v1538
    %v1541 = vmul.f32 %v1539, %v1539
    %v1542 = vmul.f32 %v1540, %v1540
    %v1543 = vsel %vm102, %v1541, 0.0
    %1544 = vadd.xlane.f32.xlu0 %v1543
    %v1545 = vpop.xlane.xlu0 %1544
    %v1546 = vsel %vm102, %v1542, 0.0
    %1547 = vadd.xlane.f32.xlu0 %v1546
    %v1548 = vpop.xlane.xlu0 %1547
    %v1549 = vmul.f32 %v1545, %v1536
    %v1550 = vmul.f32 %v1548, %v1536
    %v1551 = vadd.f32 %v1549, 1e-05
    %v1552 = vadd.f32 %v1550, 1e-05
    %v1553 = vrsqrt.pop %v1551
    %v1554 = vmul.f32 %v1553, %v1551
    %v1555 = vmul.f32 %v1554, %v1553
    %v1556 = vmul.f32 0.5, %v1555
    %v1557 = vsub.f32 1.5, %v1556
    %v1558 = vmul.f32 %v1553, %v1557
    %vm1559 = vweird.f32 %v1551
    %vm1560 = vweird.f32 %v1553
    %vm1561 = vmor %vm1559, %vm1560
    %v1562 = vsel %vm1561, %v1553, %v1558
    %v1563 = vrsqrt.pop %v1552
    %v1564 = vmul.f32 %v1563, %v1552
    %v1565 = vmul.f32 %v1564, %v1563
    %v1566 = vmul.f32 0.5, %v1565
    %v1567 = vsub.f32 1.5, %v1566
    %v1568 = vmul.f32 %v1563, %v1567
    %vm1569 = vweird.f32 %v1552
    %vm1570 = vweird.f32 %v1563
    %vm1571 = vmor %vm1569, %vm1570
    %v1572 = vsel %vm1571, %v1563, %v1568
    %v1573 = vmul.f32 %v1539, %v1562
    %v1574 = vmul.f32 %v1540, %v1572
    %v1576 = vperm.slane %v98, 0
    %v1578 = vmul.f32 %v1573, %v1576
    %v1579 = vmul.f32 %v1574, %v1576
    %1580 = vrot.lane.b32.xlu0 %v1576, 96
    %v1581 = vpop.permute.xlu0 %1580
    %v1583 = vadd.f32 %v1578, %v1581
    %v1584 = vadd.f32 %v1579, %v1581
    %v1585 = vrot.slane %v96, 1
    %v1586 = vperm.slane %v1585, 0
    %v1589 = vsel %vm102, %v1583, 0
    %v1592 = vsel %vm102, %v1584, 0
    %1594 = vmatpush.msra.mxu0 0.0
    %1595 = vmatpush.msra.mxu0 0.0
    %1596 = vmatpush.msra.mxu0 0.0
    %1597 = vmatpush.msra.mxu0 0.0
    %1598 = vmatpush.msra.mxu0 0.0
    %1599 = vmatpush.msra.mxu0 0.0
    %1600 = vmatpush.msra.mxu0 0.0
    %1601 = vmatpush.msra.mxu0 0.0
    %1602 = vmatpush.msra.mxu0 0.0
    %1603 = vmatpush.msra.mxu0 0.0
    %1604 = vmatpush.msra.mxu0 0.0
    %1605 = vmatpush.msra.mxu0 0.0
    %1606 = vmatpush.msra.mxu0 %v95
    %1607 = vmatpush.msra.mxu0 %v93
    %1608 = vmatpush.msra.mxu0 %v91
    %1609 = vmatpush.msra.mxu0 %v89
    %1610 = vmatmul.f32.gmra.mxu0 %v1589
    %v1611 = vpop.f32.mrf.mxu0
    %v1612 = vadd.f32 %v1586, %v1611
    %1613 = vmatmul.f32.gmra.mxu0 %v1592
    %v1614 = vpop.f32.mrf.mxu0
    %v1615 = vadd.f32 %v1586, %v1614
    %1616 = vdwg.mxu0
    %v1617 = vmax.f32 %v1612, 0.0
    %v1618 = vmax.f32 %v1615, 0.0
    %1619 = vrot.lane.b32.xlu0 %v96, 64
    %v1620 = vpop.permute.xlu0 %1619
    %v1621 = vrot.slane %v1620, 1
    %v1622 = vperm.slane %v1621, 0
    %1628 = vrot.lane.b32.xlu0 %v89, 64
    %v1629 = vpop.permute.xlu0 %1628
    %1630 = vrot.lane.b32.xlu0 %v91, 64
    %v1631 = vpop.permute.xlu0 %1630
    %1632 = vrot.lane.b32.xlu0 %v93, 64
    %v1633 = vpop.permute.xlu0 %1632
    %1634 = vrot.lane.b32.xlu0 %v95, 64
    %v1635 = vpop.permute.xlu0 %1634
    %vm1636 = vcmask 523264
    %v1638 = vsel %vm1636, %v1617, 0
    %v1641 = vsel %vm1636, %v1618, 0
    %v1643 = vsel %vm1636, %v1629, 0
    %v1645 = vsel %vm1636, %v1631, 0
    %v1647 = vsel %vm1636, %v1633, 0
    %v1649 = vsel %vm1636, %v1635, 0
    %1651 = vmatpush.xpose.msra.mxu0 0.0
    %1652 = vmatpush.xpose.msra.mxu0 0.0
    %1653 = vmatpush.xpose.msra.mxu0 0.0
    %1654 = vmatpush.xpose.msra.mxu0 0.0
    %1655 = vmatpush.xpose.msra.mxu0 0.0
    %1656 = vmatpush.xpose.msra.mxu0 0.0
    %1657 = vmatpush.xpose.msra.mxu0 0.0
    %1658 = vmatpush.xpose.msra.mxu0 0.0
    %1659 = vmatpush.xpose.msra.mxu0 0.0
    %1660 = vmatpush.xpose.msra.mxu0 0.0
    %1661 = vmatpush.xpose.msra.mxu0 0.0
    %1662 = vmatpush.xpose.msra.mxu0 0.0
    %1663 = vmatpush.xpose.msra.mxu0 %v1649
    %1664 = vmatpush.xpose.msra.mxu0 %v1647
    %1665 = vmatpush.xpose.msra.mxu0 %v1645
    %1666 = vmatpush.xpose.msra.mxu0 %v1643
    %1667 = vmatmul.f32.gmra.mxu0 %v1638
    %v1668 = vpop.f32.mrf.mxu0
    %v1669 = vadd.f32 %v1622, %v1668
    %1670 = vmatmul.f32.gmra.mxu0 %v1641
    %v1671 = vpop.f32.mrf.mxu0
    %v1672 = vadd.f32 %v1622, %v1671
    %1673 = vdwg.mxu0
    %v1674 = vadd.f32 %v1669, %v1583
    %v1675 = vadd.f32 %v1672, %v1584
    %v1676 = vsel %vm102, %v1674, 0.0
    %1677 = vadd.xlane.f32.xlu0 %v1676
    %v1678 = vpop.xlane.xlu0 %1677
    %v1679 = vsel %vm102, %v1675, 0.0
    %1680 = vadd.xlane.f32.xlu0 %v1679
    %v1681 = vpop.xlane.xlu0 %1680
    %v1682 = vmul.f32 %v1678, %v1536
    %v1683 = vmul.f32 %v1681, %v1536
    %v1684 = vsub.f32 %v1674, %v1682
    %v1685 = vsub.f32 %v1675, %v1683
    %v1686 = vmul.f32 %v1684, %v1684
    %v1687 = vmul.f32 %v1685, %v1685
    %v1688 = vsel %vm102, %v1686, 0.0
    %1689 = vadd.xlane.f32.xlu0 %v1688
    %v1690 = vpop.xlane.xlu0 %1689
    %v1691 = vsel %vm102, %v1687, 0.0
    %1692 = vadd.xlane.f32.xlu0 %v1691
    %v1693 = vpop.xlane.xlu0 %1692
    %v1694 = vmul.f32 %v1690, %v1536
    %v1695 = vmul.f32 %v1693, %v1536
    %v1696 = vadd.f32 %v1694, 1e-05
    %v1697 = vadd.f32 %v1695, 1e-05
    %v1698 = vrsqrt.pop %v1696
    %v1699 = vmul.f32 %v1698, %v1696
    %v1700 = vmul.f32 %v1699, %v1698
    %v1701 = vmul.f32 0.5, %v1700
    %v1702 = vsub.f32 1.5, %v1701
    %v1703 = vmul.f32 %v1698, %v1702
    %vm1704 = vweird.f32 %v1696
    %vm1705 = vweird.f32 %v1698
    %vm1706 = vmor %vm1704, %vm1705
    %v1707 = vsel %vm1706, %v1698, %v1703
    %v1708 = vrsqrt.pop %v1697
    %v1709 = vmul.f32 %v1708, %v1697
    %v1710 = vmul.f32 %v1709, %v1708
    %v1711 = vmul.f32 0.5, %v1710
    %v1712 = vsub.f32 1.5, %v1711
    %v1713 = vmul.f32 %v1708, %v1712
    %vm1714 = vweird.f32 %v1697
    %vm1715 = vweird.f32 %v1708
    %vm1716 = vmor %vm1714, %vm1715
    %v1717 = vsel %vm1716, %v1708, %v1713
    %v1718 = vmul.f32 %v1684, %v1707
    %v1719 = vmul.f32 %v1685, %v1717
    %1720 = vrot.lane.b32.xlu0 %v1576, 64
    %v1721 = vpop.permute.xlu0 %1720
    %v1723 = vmul.f32 %v1718, %v1721
    %v1724 = vmul.f32 %v1719, %v1721
    %1725 = vrot.lane.b32.xlu0 %v1576, 32
    %v1726 = vpop.permute.xlu0 %1725
    %v1728 = vadd.f32 %v1723, %v1726
    %v1729 = vadd.f32 %v1724, %v1726
    %s1730 = scalar_lea.vmem [#allocation7], 64
    %v1731 = vld [vmem:[%s1730] sm:$0xff]
    %v1732 = vld [vmem:[%s1730 + $0x8] sm:$0xff]
    %v1733 = vld [vmem:[%s1730 + $0x10] sm:$0xff]
    %v1734 = vld [vmem:[%s1730 + $0x18] sm:$0xff]
    %v1735 = vld [vmem:[%s1730 + $0x20] sm:$0xff]
    %v1736 = vld [vmem:[%s1730 + $0x28] sm:$0xff]
    %v1737 = vld [vmem:[%s1730 + $0x30] sm:$0xff]
    %v1738 = vld [vmem:[%s1730 + $0x38] sm:$0xff]
    %s1739 = scalar_lea.vmem [#allocation8], 4
    %v1740 = vld [vmem:[%s1739] ss:$2 sm:$0x3]
    %s1741 = scalar_lea.vmem %s1739, 1 [#allocation8]
    %v1742 = vld [vmem:[%s1741] ss:$2 sm:$0x3]
    %v1744 = vperm.slane %v1740, 0
    %v1747 = vsel %vm102, %v1728, 0
    %v1750 = vsel %vm102, %v1729, 0
    %1752 = vmatpush.msra.mxu0 0.0
    %1753 = vmatpush.msra.mxu0 0.0
    %1754 = vmatpush.msra.mxu0 0.0
    %1755 = vmatpush.msra.mxu0 0.0
    %1756 = vmatpush.msra.mxu0 0.0
    %1757 = vmatpush.msra.mxu0 0.0
    %1758 = vmatpush.msra.mxu0 0.0
    %1759 = vmatpush.msra.mxu0 0.0
    %1760 = vmatpush.msra.mxu0 0.0
    %1761 = vmatpush.msra.mxu0 0.0
    %1762 = vmatpush.msra.mxu0 0.0
    %1763 = vmatpush.msra.mxu0 0.0
    %1764 = vmatpush.msra.mxu0 %v1737
    %1765 = vmatpush.msra.mxu0 %v1735
    %1766 = vmatpush.msra.mxu0 %v1733
    %1767 = vmatpush.msra.mxu0 %v1731
    %1768 = vmatmul.f32.gmra.mxu0 %v1747
    %v1769 = vpop.f32.mrf.mxu0
    %v1770 = vadd.f32 %v1744, %v1769
    %1771 = vmatmul.f32.gmra.mxu0 %v1750
    %v1772 = vpop.f32.mrf.mxu0
    %v1773 = vadd.f32 %v1744, %v1772
    %1774 = vdwg.mxu0
    %1777 = vrot.lane.b32.xlu0 %v1770, 120
    %v1778 = vpop.permute.xlu0 %1777
    %1779 = vrot.lane.b32.xlu0 %v1773, 120
    %v1780 = vpop.permute.xlu0 %1779
    %1783 = vrot.lane.b32.xlu0 %v1770, 112
    %v1784 = vpop.permute.xlu0 %1783
    %1785 = vrot.lane.b32.xlu0 %v1773, 112
    %v1786 = vpop.permute.xlu0 %1785
    %1789 = vrot.lane.b32.xlu0 %v1770, 104
    %v1790 = vpop.permute.xlu0 %1789
    %1791 = vrot.lane.b32.xlu0 %v1773, 104
    %v1792 = vpop.permute.xlu0 %1791
    %v1795 = vrot.slane %v1784, 4
    %v1796 = vsel %vm153, %v1795, %v1770
    %v1797 = vrot.slane %v1770, 4
    %v1798 = vsel %vm153, %v1784, %v1797
    %v1800 = vunpack.c.l.s4 1983009808
    %v1801 = vunpack.c.0.s8 %v1800
    %v1802 = vperm.slane %v1796, %v1801
    %v1804 = vunpack.c.l.s4 1983009808
    %v1805 = vunpack.c.0.s8 %v1804
    %v1806 = vperm.slane %v1798, %v1805
    %v1807 = vrot.slane %v1790, 4
    %v1808 = vsel %vm153, %v1807, %v1778
    %v1809 = vrot.slane %v1778, 4
    %v1810 = vsel %vm153, %v1790, %v1809
    %v1812 = vunpack.c.l.s4 1983009808
    %v1813 = vunpack.c.0.s8 %v1812
    %v1814 = vperm.slane %v1808, %v1813
    %v1816 = vunpack.c.l.s4 1983009808
    %v1817 = vunpack.c.0.s8 %v1816
    %v1818 = vperm.slane %v1810, %v1817
    %v1819 = vrot.slane %v1814, 4
    %v1820 = vsel %vm153, %v1819, %v1802
    %v1821 = vrot.slane %v1802, 4
    %v1822 = vsel %vm153, %v1814, %v1821
    %v1824 = vunpack.c.l.s4 1934713408
    %v1825 = vunpack.c.0.s8 %v1824
    %v1826 = vperm.slane %v1820, %v1825
    %v1828 = vunpack.c.l.s4 1934713408
    %v1829 = vunpack.c.0.s8 %v1828
    %v1830 = vperm.slane %v1822, %v1829
    %v1831 = vrot.slane %v1818, 4
    %v1832 = vsel %vm153, %v1831, %v1806
    %v1833 = vrot.slane %v1806, 4
    %v1834 = vsel %vm153, %v1818, %v1833
    %v1836 = vunpack.c.l.s4 1934713408
    %v1837 = vunpack.c.0.s8 %v1836
    %v1838 = vperm.slane %v1832, %v1837
    %v1840 = vunpack.c.l.s4 1934713408
    %v1841 = vunpack.c.0.s8 %v1840
    %v1842 = vperm.slane %v1834, %v1841
    %v1843 = vrot.slane %v1826, 4
    %v1844 = vsel %vm153, 0.0, %v1843
    %v1845 = vrot.slane %v1830, 4
    %v1846 = vsel %vm153, 0.0, %v1845
    %v1847 = vrot.slane %v1838, 4
    %v1848 = vsel %vm153, 0.0, %v1847
    %v1849 = vrot.slane %v1842, 4
    %v1850 = vsel %vm153, 0.0, %v1849
    %v1851 = vrot.slane %v1786, 4
    %v1852 = vsel %vm153, %v1851, %v1773
    %v1853 = vrot.slane %v1773, 4
    %v1854 = vsel %vm153, %v1786, %v1853
    %v1856 = vunpack.c.l.s4 1983009808
    %v1857 = vunpack.c.0.s8 %v1856
    %v1858 = vperm.slane %v1852, %v1857
    %v1860 = vunpack.c.l.s4 1983009808
    %v1861 = vunpack.c.0.s8 %v1860
    %v1862 = vperm.slane %v1854, %v1861
    %v1863 = vrot.slane %v1792, 4
    %v1864 = vsel %vm153, %v1863, %v1780
    %v1865 = vrot.slane %v1780, 4
    %v1866 = vsel %vm153, %v1792, %v1865
    %v1868 = vunpack.c.l.s4 1983009808
    %v1869 = vunpack.c.0.s8 %v1868
    %v1870 = vperm.slane %v1864, %v1869
    %v1872 = vunpack.c.l.s4 1983009808
    %v1873 = vunpack.c.0.s8 %v1872
    %v1874 = vperm.slane %v1866, %v1873
    %v1875 = vrot.slane %v1870, 4
    %v1876 = vsel %vm153, %v1875, %v1858
    %v1877 = vrot.slane %v1858, 4
    %v1878 = vsel %vm153, %v1870, %v1877
    %v1880 = vunpack.c.l.s4 1934713408
    %v1881 = vunpack.c.0.s8 %v1880
    %v1882 = vperm.slane %v1876, %v1881
    %v1884 = vunpack.c.l.s4 1934713408
    %v1885 = vunpack.c.0.s8 %v1884
    %v1886 = vperm.slane %v1878, %v1885
    %v1887 = vrot.slane %v1874, 4
    %v1888 = vsel %vm153, %v1887, %v1862
    %v1889 = vrot.slane %v1862, 4
    %v1890 = vsel %vm153, %v1874, %v1889
    %v1892 = vunpack.c.l.s4 1934713408
    %v1893 = vunpack.c.0.s8 %v1892
    %v1894 = vperm.slane %v1888, %v1893
    %v1896 = vunpack.c.l.s4 1934713408
    %v1897 = vunpack.c.0.s8 %v1896
    %v1898 = vperm.slane %v1890, %v1897
    %v1899 = vrot.slane %v1882, 4
    %v1900 = vsel %vm153, 0.0, %v1899
    %v1901 = vrot.slane %v1886, 4
    %v1902 = vsel %vm153, 0.0, %v1901
    %v1903 = vrot.slane %v1894, 4
    %v1904 = vsel %vm153, 0.0, %v1903
    %v1905 = vrot.slane %v1898, 4
    %v1906 = vsel %vm153, 0.0, %v1905
    %v1907 = vsel %vm153, %v1845, %v1826
    %v1909 = vunpack.c.l.s4 1983009808
    %v1910 = vunpack.c.0.s8 %v1909
    %v1911 = vperm.slane %v1907, %v1910
    %v1912 = vrot.slane %v1846, 4
    %v1913 = vsel %vm153, %v1912, %v1844
    %v1915 = vunpack.c.l.s4 1983009808
    %v1916 = vunpack.c.0.s8 %v1915
    %v1917 = vperm.slane %v1913, %v1916
    %v1918 = vsel %vm153, %v1849, %v1838
    %v1920 = vunpack.c.l.s4 1983009808
    %v1921 = vunpack.c.0.s8 %v1920
    %v1922 = vperm.slane %v1918, %v1921
    %v1923 = vrot.slane %v1850, 4
    %v1924 = vsel %vm153, %v1923, %v1848
    %v1926 = vunpack.c.l.s4 1983009808
    %v1927 = vunpack.c.0.s8 %v1926
    %v1928 = vperm.slane %v1924, %v1927
    %v1929 = vrot.slane %v1917, 4
    %v1930 = vsel %vm153, %v1929, %v1911
    %v1931 = vrot.slane %v1911, 4
    %v1932 = vsel %vm153, %v1917, %v1931
    %v1934 = vunpack.c.l.s4 1934713408
    %v1935 = vunpack.c.0.s8 %v1934
    %v1936 = vperm.slane %v1930, %v1935
    %v1938 = vunpack.c.l.s4 1934713408
    %v1939 = vunpack.c.0.s8 %v1938
    %v1940 = vperm.slane %v1932, %v1939
    %v1941 = vrot.slane %v1928, 4
    %v1942 = vsel %vm153, %v1941, %v1922
    %v1943 = vrot.slane %v1922, 4
    %v1944 = vsel %vm153, %v1928, %v1943
    %v1946 = vunpack.c.l.s4 1934713408
    %v1947 = vunpack.c.0.s8 %v1946
    %v1948 = vperm.slane %v1942, %v1947
    %v1950 = vunpack.c.l.s4 1934713408
    %v1951 = vunpack.c.0.s8 %v1950
    %v1952 = vperm.slane %v1944, %v1951
    %v1953 = vrot.slane %v1948, 4
    %v1954 = vsel %vm153, %v1953, %v1936
    %v1955 = vrot.slane %v1936, 4
    %v1956 = vsel %vm153, %v1948, %v1955
    %v1957 = vrot.slane %v1952, 4
    %v1958 = vsel %vm153, %v1957, %v1940
    %v1959 = vrot.slane %v1940, 4
    %v1960 = vsel %vm153, %v1952, %v1959
    %v1961 = vsel %vm153, %v1901, %v1882
    %v1963 = vunpack.c.l.s4 1983009808
    %v1964 = vunpack.c.0.s8 %v1963
    %v1965 = vperm.slane %v1961, %v1964
    %v1966 = vrot.slane %v1902, 4
    %v1967 = vsel %vm153, %v1966, %v1900
    %v1969 = vunpack.c.l.s4 1983009808
    %v1970 = vunpack.c.0.s8 %v1969
    %v1971 = vperm.slane %v1967, %v1970
    %v1972 = vsel %vm153, %v1905, %v1894
    %v1974 = vunpack.c.l.s4 1983009808
    %v1975 = vunpack.c.0.s8 %v1974
    %v1976 = vperm.slane %v1972, %v1975
    %v1977 = vrot.slane %v1906, 4
    %v1978 = vsel %vm153, %v1977, %v1904
    %v1980 = vunpack.c.l.s4 1983009808
    %v1981 = vunpack.c.0.s8 %v1980
    %v1982 = vperm.slane %v1978, %v1981
    %v1983 = vrot.slane %v1971, 4
    %v1984 = vsel %vm153, %v1983, %v1965
    %v1985 = vrot.slane %v1965, 4
    %v1986 = vsel %vm153, %v1971, %v1985
    %v1988 = vunpack.c.l.s4 1934713408
    %v1989 = vunpack.c.0.s8 %v1988
    %v1990 = vperm.slane %v1984, %v1989
    %v1992 = vunpack.c.l.s4 1934713408
    %v1993 = vunpack.c.0.s8 %v1992
    %v1994 = vperm.slane %v1986, %v1993
    %v1995 = vrot.slane %v1982, 4
    %v1996 = vsel %vm153, %v1995, %v1976
    %v1997 = vrot.slane %v1976, 4
    %v1998 = vsel %vm153, %v1982, %v1997
    %v2000 = vunpack.c.l.s4 1934713408
    %v2001 = vunpack.c.0.s8 %v2000
    %v2002 = vperm.slane %v1996, %v2001
    %v2004 = vunpack.c.l.s4 1934713408
    %v2005 = vunpack.c.0.s8 %v2004
    %v2006 = vperm.slane %v1998, %v2005
    %v2007 = vrot.slane %v2002, 4
    %v2008 = vsel %vm153, %v2007, %v1990
    %v2009 = vrot.slane %v1990, 4
    %v2010 = vsel %vm153, %v2002, %v2009
    %v2011 = vrot.slane %v2006, 4
    %v2012 = vsel %vm153, %v2011, %v1994
    %v2013 = vrot.slane %v1994, 4
    %v2014 = vsel %vm153, %v2006, %v2013
    %2015 = vrot.lane.b32.xlu0 %v1770, 96
    %v2016 = vpop.permute.xlu0 %2015
    %2017 = vrot.lane.b32.xlu0 %v1773, 96
    %v2018 = vpop.permute.xlu0 %2017
    %2019 = vrot.lane.b32.xlu0 %v1778, 96
    %v2020 = vpop.permute.xlu0 %2019
    %2021 = vrot.lane.b32.xlu0 %v1780, 96
    %v2022 = vpop.permute.xlu0 %2021
    %2023 = vrot.lane.b32.xlu0 %v1784, 96
    %v2024 = vpop.permute.xlu0 %2023
    %2025 = vrot.lane.b32.xlu0 %v1786, 96
    %v2026 = vpop.permute.xlu0 %2025
    %2027 = vrot.lane.b32.xlu0 %v1790, 96
    %v2028 = vpop.permute.xlu0 %2027
    %2029 = vrot.lane.b32.xlu0 %v1792, 96
    %v2030 = vpop.permute.xlu0 %2029
    %v2039 = vrot.slane %v2024, 4
    %v2040 = vsel %vm153, %v2039, %v2016
    %v2041 = vrot.slane %v2016, 4
    %v2042 = vsel %vm153, %v2024, %v2041
    %v2044 = vunpack.c.l.s4 1983009808
    %v2045 = vunpack.c.0.s8 %v2044
    %v2046 = vperm.slane %v2040, %v2045
    %v2048 = vunpack.c.l.s4 1983009808
    %v2049 = vunpack.c.0.s8 %v2048
    %v2050 = vperm.slane %v2042, %v2049
    %v2051 = vrot.slane %v2028, 4
    %v2052 = vsel %vm153, %v2051, %v2020
    %v2053 = vrot.slane %v2020, 4
    %v2054 = vsel %vm153, %v2028, %v2053
    %v2056 = vunpack.c.l.s4 1983009808
    %v2057 = vunpack.c.0.s8 %v2056
    %v2058 = vperm.slane %v2052, %v2057
    %v2060 = vunpack.c.l.s4 1983009808
    %v2061 = vunpack.c.0.s8 %v2060
    %v2062 = vperm.slane %v2054, %v2061
    %v2063 = vrot.slane %v2058, 4
    %v2064 = vsel %vm153, %v2063, %v2046
    %v2065 = vrot.slane %v2046, 4
    %v2066 = vsel %vm153, %v2058, %v2065
    %v2068 = vunpack.c.l.s4 1934713408
    %v2069 = vunpack.c.0.s8 %v2068
    %v2070 = vperm.slane %v2064, %v2069
    %v2072 = vunpack.c.l.s4 1934713408
    %v2073 = vunpack.c.0.s8 %v2072
    %v2074 = vperm.slane %v2066, %v2073
    %v2075 = vrot.slane %v2062, 4
    %v2076 = vsel %vm153, %v2075, %v2050
    %v2077 = vrot.slane %v2050, 4
    %v2078 = vsel %vm153, %v2062, %v2077
    %v2080 = vunpack.c.l.s4 1934713408
    %v2081 = vunpack.c.0.s8 %v2080
    %v2082 = vperm.slane %v2076, %v2081
    %v2084 = vunpack.c.l.s4 1934713408
    %v2085 = vunpack.c.0.s8 %v2084
    %v2086 = vperm.slane %v2078, %v2085
    %v2087 = vrot.slane %v2070, 4
    %v2088 = vsel %vm153, 0.0, %v2087
    %v2089 = vrot.slane %v2074, 4
    %v2090 = vsel %vm153, 0.0, %v2089
    %v2091 = vrot.slane %v2082, 4
    %v2092 = vsel %vm153, 0.0, %v2091
    %v2093 = vrot.slane %v2086, 4
    %v2094 = vsel %vm153, 0.0, %v2093
    %v2095 = vrot.slane %v2026, 4
    %v2096 = vsel %vm153, %v2095, %v2018
    %v2097 = vrot.slane %v2018, 4
    %v2098 = vsel %vm153, %v2026, %v2097
    %v2100 = vunpack.c.l.s4 1983009808
    %v2101 = vunpack.c.0.s8 %v2100
    %v2102 = vperm.slane %v2096, %v2101
    %v2104 = vunpack.c.l.s4 1983009808
    %v2105 = vunpack.c.0.s8 %v2104
    %v2106 = vperm.slane %v2098, %v2105
    %v2107 = vrot.slane %v2030, 4
    %v2108 = vsel %vm153, %v2107, %v2022
    %v2109 = vrot.slane %v2022, 4
    %v2110 = vsel %vm153, %v2030, %v2109
    %v2112 = vunpack.c.l.s4 1983009808
    %v2113 = vunpack.c.0.s8 %v2112
    %v2114 = vperm.slane %v2108, %v2113
    %v2116 = vunpack.c.l.s4 1983009808
    %v2117 = vunpack.c.0.s8 %v2116
    %v2118 = vperm.slane %v2110, %v2117
    %v2119 = vrot.slane %v2114, 4
    %v2120 = vsel %vm153, %v2119, %v2102
    %v2121 = vrot.slane %v2102, 4
    %v2122 = vsel %vm153, %v2114, %v2121
    %v2124 = vunpack.c.l.s4 1934713408
    %v2125 = vunpack.c.0.s8 %v2124
    %v2126 = vperm.slane %v2120, %v2125
    %v2128 = vunpack.c.l.s4 1934713408
    %v2129 = vunpack.c.0.s8 %v2128
    %v2130 = vperm.slane %v2122, %v2129
    %v2131 = vrot.slane %v2118, 4
    %v2132 = vsel %vm153, %v2131, %v2106
    %v2133 = vrot.slane %v2106, 4
    %v2134 = vsel %vm153, %v2118, %v2133
    %v2136 = vunpack.c.l.s4 1934713408
    %v2137 = vunpack.c.0.s8 %v2136
    %v2138 = vperm.slane %v2132, %v2137
    %v2140 = vunpack.c.l.s4 1934713408
    %v2141 = vunpack.c.0.s8 %v2140
    %v2142 = vperm.slane %v2134, %v2141
    %v2143 = vrot.slane %v2126, 4
    %v2144 = vsel %vm153, 0.0, %v2143
    %v2145 = vrot.slane %v2130, 4
    %v2146 = vsel %vm153, 0.0, %v2145
    %v2147 = vrot.slane %v2138, 4
    %v2148 = vsel %vm153, 0.0, %v2147
    %v2149 = vrot.slane %v2142, 4
    %v2150 = vsel %vm153, 0.0, %v2149
    %v2151 = vsel %vm153, %v2089, %v2070
    %v2153 = vunpack.c.l.s4 1983009808
    %v2154 = vunpack.c.0.s8 %v2153
    %v2155 = vperm.slane %v2151, %v2154
    %v2156 = vrot.slane %v2090, 4
    %v2157 = vsel %vm153, %v2156, %v2088
    %v2159 = vunpack.c.l.s4 1983009808
    %v2160 = vunpack.c.0.s8 %v2159
    %v2161 = vperm.slane %v2157, %v2160
    %v2162 = vsel %vm153, %v2093, %v2082
    %v2164 = vunpack.c.l.s4 1983009808
    %v2165 = vunpack.c.0.s8 %v2164
    %v2166 = vperm.slane %v2162, %v2165
    %v2167 = vrot.slane %v2094, 4
    %v2168 = vsel %vm153, %v2167, %v2092
    %v2170 = vunpack.c.l.s4 1983009808
    %v2171 = vunpack.c.0.s8 %v2170
    %v2172 = vperm.slane %v2168, %v2171
    %v2173 = vrot.slane %v2161, 4
    %v2174 = vsel %vm153, %v2173, %v2155
    %v2175 = vrot.slane %v2155, 4
    %v2176 = vsel %vm153, %v2161, %v2175
    %v2178 = vunpack.c.l.s4 1934713408
    %v2179 = vunpack.c.0.s8 %v2178
    %v2180 = vperm.slane %v2174, %v2179
    %v2182 = vunpack.c.l.s4 1934713408
    %v2183 = vunpack.c.0.s8 %v2182
    %v2184 = vperm.slane %v2176, %v2183
    %v2185 = vrot.slane %v2172, 4
    %v2186 = vsel %vm153, %v2185, %v2166
    %v2187 = vrot.slane %v2166, 4
    %v2188 = vsel %vm153, %v2172, %v2187
    %v2190 = vunpack.c.l.s4 1934713408
    %v2191 = vunpack.c.0.s8 %v2190
    %v2192 = vperm.slane %v2186, %v2191
    %v2194 = vunpack.c.l.s4 1934713408
    %v2195 = vunpack.c.0.s8 %v2194
    %v2196 = vperm.slane %v2188, %v2195
    %v2197 = vrot.slane %v2192, 4
    %v2198 = vsel %vm153, %v2197, %v2180
    %v2199 = vrot.slane %v2180, 4
    %v2200 = vsel %vm153, %v2192, %v2199
    %v2201 = vrot.slane %v2196, 4
    %v2202 = vsel %vm153, %v2201, %v2184
    %v2203 = vrot.slane %v2184, 4
    %v2204 = vsel %vm153, %v2196, %v2203
    %v2205 = vsel %vm153, %v2145, %v2126
    %v2207 = vunpack.c.l.s4 1983009808
    %v2208 = vunpack.c.0.s8 %v2207
    %v2209 = vperm.slane %v2205, %v2208
    %v2210 = vrot.slane %v2146, 4
    %v2211 = vsel %vm153, %v2210, %v2144
    %v2213 = vunpack.c.l.s4 1983009808
    %v2214 = vunpack.c.0.s8 %v2213
    %v2215 = vperm.slane %v2211, %v2214
    %v2216 = vsel %vm153, %v2149, %v2138
    %v2218 = vunpack.c.l.s4 1983009808
    %v2219 = vunpack.c.0.s8 %v2218
    %v2220 = vperm.slane %v2216, %v2219
    %v2221 = vrot.slane %v2150, 4
    %v2222 = vsel %vm153, %v2221, %v2148
    %v2224 = vunpack.c.l.s4 1983009808
    %v2225 = vunpack.c.0.s8 %v2224
    %v2226 = vperm.slane %v2222, %v2225
    %v2227 = vrot.slane %v2215, 4
    %v2228 = vsel %vm153, %v2227, %v2209
    %v2229 = vrot.slane %v2209, 4
    %v2230 = vsel %vm153, %v2215, %v2229
    %v2232 = vunpack.c.l.s4 1934713408
    %v2233 = vunpack.c.0.s8 %v2232
    %v2234 = vperm.slane %v2228, %v2233
    %v2236 = vunpack.c.l.s4 1934713408
    %v2237 = vunpack.c.0.s8 %v2236
    %v2238 = vperm.slane %v2230, %v2237
    %v2239 = vrot.slane %v2226, 4
    %v2240 = vsel %vm153, %v2239, %v2220
    %v2241 = vrot.slane %v2220, 4
    %v2242 = vsel %vm153, %v2226, %v2241
    %v2244 = vunpack.c.l.s4 1934713408
    %v2245 = vunpack.c.0.s8 %v2244
    %v2246 = vperm.slane %v2240, %v2245
    %v2248 = vunpack.c.l.s4 1934713408
    %v2249 = vunpack.c.0.s8 %v2248
    %v2250 = vperm.slane %v2242, %v2249
    %v2251 = vrot.slane %v2246, 4
    %v2252 = vsel %vm153, %v2251, %v2234
    %v2253 = vrot.slane %v2234, 4
    %v2254 = vsel %vm153, %v2246, %v2253
    %v2255 = vrot.slane %v2250, 4
    %v2256 = vsel %vm153, %v2255, %v2238
    %v2257 = vrot.slane %v2238, 4
    %v2258 = vsel %vm153, %v2250, %v2257
    %2259 = vrot.lane.b32.xlu0 %v1770, 64
    %v2260 = vpop.permute.xlu0 %2259
    %2261 = vrot.lane.b32.xlu0 %v1773, 64
    %v2262 = vpop.permute.xlu0 %2261
    %2263 = vrot.lane.b32.xlu0 %v1778, 64
    %v2264 = vpop.permute.xlu0 %2263
    %2265 = vrot.lane.b32.xlu0 %v1780, 64
    %v2266 = vpop.permute.xlu0 %2265
    %2267 = vrot.lane.b32.xlu0 %v1784, 64
    %v2268 = vpop.permute.xlu0 %2267
    %2269 = vrot.lane.b32.xlu0 %v1786, 64
    %v2270 = vpop.permute.xlu0 %2269
    %2271 = vrot.lane.b32.xlu0 %v1790, 64
    %v2272 = vpop.permute.xlu0 %2271
    %2273 = vrot.lane.b32.xlu0 %v1792, 64
    %v2274 = vpop.permute.xlu0 %2273
    %v2283 = vrot.slane %v2268, 4
    %v2284 = vsel %vm153, %v2283, %v2260
    %v2285 = vrot.slane %v2260, 4
    %v2286 = vsel %vm153, %v2268, %v2285
    %v2288 = vunpack.c.l.s4 1983009808
    %v2289 = vunpack.c.0.s8 %v2288
    %v2290 = vperm.slane %v2284, %v2289
    %v2292 = vunpack.c.l.s4 1983009808
    %v2293 = vunpack.c.0.s8 %v2292
    %v2294 = vperm.slane %v2286, %v2293
    %v2295 = vrot.slane %v2272, 4
    %v2296 = vsel %vm153, %v2295, %v2264
    %v2297 = vrot.slane %v2264, 4
    %v2298 = vsel %vm153, %v2272, %v2297
    %v2300 = vunpack.c.l.s4 1983009808
    %v2301 = vunpack.c.0.s8 %v2300
    %v2302 = vperm.slane %v2296, %v2301
    %v2304 = vunpack.c.l.s4 1983009808
    %v2305 = vunpack.c.0.s8 %v2304
    %v2306 = vperm.slane %v2298, %v2305
    %v2307 = vrot.slane %v2302, 4
    %v2308 = vsel %vm153, %v2307, %v2290
    %v2309 = vrot.slane %v2290, 4
    %v2310 = vsel %vm153, %v2302, %v2309
    %v2312 = vunpack.c.l.s4 1934713408
    %v2313 = vunpack.c.0.s8 %v2312
    %v2314 = vperm.slane %v2308, %v2313
    %v2316 = vunpack.c.l.s4 1934713408
    %v2317 = vunpack.c.0.s8 %v2316
    %v2318 = vperm.slane %v2310, %v2317
    %v2319 = vrot.slane %v2306, 4
    %v2320 = vsel %vm153, %v2319, %v2294
    %v2321 = vrot.slane %v2294, 4
    %v2322 = vsel %vm153, %v2306, %v2321
    %v2324 = vunpack.c.l.s4 1934713408
    %v2325 = vunpack.c.0.s8 %v2324
    %v2326 = vperm.slane %v2320, %v2325
    %v2328 = vunpack.c.l.s4 1934713408
    %v2329 = vunpack.c.0.s8 %v2328
    %v2330 = vperm.slane %v2322, %v2329
    %v2331 = vrot.slane %v2314, 4
    %v2332 = vsel %vm153, 0.0, %v2331
    %v2333 = vrot.slane %v2318, 4
    %v2334 = vsel %vm153, 0.0, %v2333
    %v2335 = vrot.slane %v2326, 4
    %v2336 = vsel %vm153, 0.0, %v2335
    %v2337 = vrot.slane %v2330, 4
    %v2338 = vsel %vm153, 0.0, %v2337
    %v2339 = vrot.slane %v2270, 4
    %v2340 = vsel %vm153, %v2339, %v2262
    %v2341 = vrot.slane %v2262, 4
    %v2342 = vsel %vm153, %v2270, %v2341
    %v2344 = vunpack.c.l.s4 1983009808
    %v2345 = vunpack.c.0.s8 %v2344
    %v2346 = vperm.slane %v2340, %v2345
    %v2348 = vunpack.c.l.s4 1983009808
    %v2349 = vunpack.c.0.s8 %v2348
    %v2350 = vperm.slane %v2342, %v2349
    %v2351 = vrot.slane %v2274, 4
    %v2352 = vsel %vm153, %v2351, %v2266
    %v2353 = vrot.slane %v2266, 4
    %v2354 = vsel %vm153, %v2274, %v2353
    %v2356 = vunpack.c.l.s4 1983009808
    %v2357 = vunpack.c.0.s8 %v2356
    %v2358 = vperm.slane %v2352, %v2357
    %v2360 = vunpack.c.l.s4 1983009808
    %v2361 = vunpack.c.0.s8 %v2360
    %v2362 = vperm.slane %v2354, %v2361
    %v2363 = vrot.slane %v2358, 4
    %v2364 = vsel %vm153, %v2363, %v2346
    %v2365 = vrot.slane %v2346, 4
    %v2366 = vsel %vm153, %v2358, %v2365
    %v2368 = vunpack.c.l.s4 1934713408
    %v2369 = vunpack.c.0.s8 %v2368
    %v2370 = vperm.slane %v2364, %v2369
    %v2372 = vunpack.c.l.s4 1934713408
    %v2373 = vunpack.c.0.s8 %v2372
    %v2374 = vperm.slane %v2366, %v2373
    %v2375 = vrot.slane %v2362, 4
    %v2376 = vsel %vm153, %v2375, %v2350
    %v2377 = vrot.slane %v2350, 4
    %v2378 = vsel %vm153, %v2362, %v2377
    %v2380 = vunpack.c.l.s4 1934713408
    %v2381 = vunpack.c.0.s8 %v2380
    %v2382 = vperm.slane %v2376, %v2381
    %v2384 = vunpack.c.l.s4 1934713408
    %v2385 = vunpack.c.0.s8 %v2384
    %v2386 = vperm.slane %v2378, %v2385
    %v2387 = vrot.slane %v2370, 4
    %v2388 = vsel %vm153, 0.0, %v2387
    %v2389 = vrot.slane %v2374, 4
    %v2390 = vsel %vm153, 0.0, %v2389
    %v2391 = vrot.slane %v2382, 4
    %v2392 = vsel %vm153, 0.0, %v2391
    %v2393 = vrot.slane %v2386, 4
    %v2394 = vsel %vm153, 0.0, %v2393
    %v2395 = vsel %vm153, %v2333, %v2314
    %v2397 = vunpack.c.l.s4 1983009808
    %v2398 = vunpack.c.0.s8 %v2397
    %v2399 = vperm.slane %v2395, %v2398
    %v2400 = vrot.slane %v2334, 4
    %v2401 = vsel %vm153, %v2400, %v2332
    %v2403 = vunpack.c.l.s4 1983009808
    %v2404 = vunpack.c.0.s8 %v2403
    %v2405 = vperm.slane %v2401, %v2404
    %v2406 = vsel %vm153, %v2337, %v2326
    %v2408 = vunpack.c.l.s4 1983009808
    %v2409 = vunpack.c.0.s8 %v2408
    %v2410 = vperm.slane %v2406, %v2409
    %v2411 = vrot.slane %v2338, 4
    %v2412 = vsel %vm153, %v2411, %v2336
    %v2414 = vunpack.c.l.s4 1983009808
    %v2415 = vunpack.c.0.s8 %v2414
    %v2416 = vperm.slane %v2412, %v2415
    %v2417 = vrot.slane %v2405, 4
    %v2418 = vsel %vm153, %v2417, %v2399
    %v2419 = vrot.slane %v2399, 4
    %v2420 = vsel %vm153, %v2405, %v2419
    %v2422 = vunpack.c.l.s4 1934713408
    %v2423 = vunpack.c.0.s8 %v2422
    %v2424 = vperm.slane %v2418, %v2423
    %v2426 = vunpack.c.l.s4 1934713408
    %v2427 = vunpack.c.0.s8 %v2426
    %v2428 = vperm.slane %v2420, %v2427
    %v2429 = vrot.slane %v2416, 4
    %v2430 = vsel %vm153, %v2429, %v2410
    %v2431 = vrot.slane %v2410, 4
    %v2432 = vsel %vm153, %v2416, %v2431
    %v2434 = vunpack.c.l.s4 1934713408
    %v2435 = vunpack.c.0.s8 %v2434
    %v2436 = vperm.slane %v2430, %v2435
    %v2438 = vunpack.c.l.s4 1934713408
    %v2439 = vunpack.c.0.s8 %v2438
    %v2440 = vperm.slane %v2432, %v2439
    %v2441 = vrot.slane %v2436, 4
    %v2442 = vsel %vm153, %v2441, %v2424
    %v2443 = vrot.slane %v2424, 4
    %v2444 = vsel %vm153, %v2436, %v2443
    %v2445 = vrot.slane %v2440, 4
    %v2446 = vsel %vm153, %v2445, %v2428
    %v2447 = vrot.slane %v2428, 4
    %v2448 = vsel %vm153, %v2440, %v2447
    %v2449 = vsel %vm153, %v2389, %v2370
    %v2451 = vunpack.c.l.s4 1983009808
    %v2452 = vunpack.c.0.s8 %v2451
    %v2453 = vperm.slane %v2449, %v2452
    %v2454 = vrot.slane %v2390, 4
    %v2455 = vsel %vm153, %v2454, %v2388
    %v2457 = vunpack.c.l.s4 1983009808
    %v2458 = vunpack.c.0.s8 %v2457
    %v2459 = vperm.slane %v2455, %v2458
    %v2460 = vsel %vm153, %v2393, %v2382
    %v2462 = vunpack.c.l.s4 1983009808
    %v2463 = vunpack.c.0.s8 %v2462
    %v2464 = vperm.slane %v2460, %v2463
    %v2465 = vrot.slane %v2394, 4
    %v2466 = vsel %vm153, %v2465, %v2392
    %v2468 = vunpack.c.l.s4 1983009808
    %v2469 = vunpack.c.0.s8 %v2468
    %v2470 = vperm.slane %v2466, %v2469
    %v2471 = vrot.slane %v2459, 4
    %v2472 = vsel %vm153, %v2471, %v2453
    %v2473 = vrot.slane %v2453, 4
    %v2474 = vsel %vm153, %v2459, %v2473
    %v2476 = vunpack.c.l.s4 1934713408
    %v2477 = vunpack.c.0.s8 %v2476
    %v2478 = vperm.slane %v2472, %v2477
    %v2480 = vunpack.c.l.s4 1934713408
    %v2481 = vunpack.c.0.s8 %v2480
    %v2482 = vperm.slane %v2474, %v2481
    %v2483 = vrot.slane %v2470, 4
    %v2484 = vsel %vm153, %v2483, %v2464
    %v2485 = vrot.slane %v2464, 4
    %v2486 = vsel %vm153, %v2470, %v2485
    %v2488 = vunpack.c.l.s4 1934713408
    %v2489 = vunpack.c.0.s8 %v2488
    %v2490 = vperm.slane %v2484, %v2489
    %v2492 = vunpack.c.l.s4 1934713408
    %v2493 = vunpack.c.0.s8 %v2492
    %v2494 = vperm.slane %v2486, %v2493
    %v2495 = vrot.slane %v2490, 4
    %v2496 = vsel %vm153, %v2495, %v2478
    %v2497 = vrot.slane %v2478, 4
    %v2498 = vsel %vm153, %v2490, %v2497
    %v2499 = vrot.slane %v2494, 4
    %v2500 = vsel %vm153, %v2499, %v2482
    %v2501 = vrot.slane %v2482, 4
    %v2502 = vsel %vm153, %v2494, %v2501
    %v2504 = vsel %vm861, %v1954, 0
    %v2507 = vsel %vm861, %v2008, 0
    %v2510 = vsel %vm861, %v2198, 0
    %v2513 = vsel %vm861, %v2252, 0
    %2515 = vmatpush.xpose.msra.mxu0 0.0
    %2516 = vmatpush.xpose.msra.mxu0 0.0
    %2517 = vmatpush.xpose.msra.mxu0 0.0
    %2518 = vmatpush.xpose.msra.mxu0 0.0
    %2519 = vmatpush.xpose.msra.mxu0 0.0
    %2520 = vmatpush.xpose.msra.mxu0 0.0
    %2521 = vmatpush.xpose.msra.mxu0 0.0
    %2522 = vmatpush.xpose.msra.mxu0 0.0
    %2523 = vmatpush.xpose.msra.mxu0 0.0
    %2524 = vmatpush.xpose.msra.mxu0 0.0
    %2525 = vmatpush.xpose.msra.mxu0 0.0
    %2526 = vmatpush.xpose.msra.mxu0 0.0
    %2527 = vmatpush.xpose.msra.mxu0 0.0
    %2528 = vmatpush.xpose.msra.mxu0 0.0
    %2529 = vmatpush.xpose.msra.mxu0 %v2513
    %2530 = vmatpush.xpose.msra.mxu0 %v2510
    %2531 = vmatmul.f32.gmra.mxu0 %v2504
    %v2532 = vpop.f32.mrf.mxu0
    %v2533 = vadd.f32 0.0, %v2532
    %2534 = vmatmul.f32.gmra.mxu0 %v2507
    %v2535 = vpop.f32.mrf.mxu0
    %v2536 = vadd.f32 0.0, %v2535
    %2537 = vdwg.mxu0
    %v2539 = vsel %vm861, %v1956, 0
    %v2542 = vsel %vm861, %v2010, 0
    %v2545 = vsel %vm861, %v2200, 0
    %v2548 = vsel %vm861, %v2254, 0
    %2550 = vmatpush.xpose.msra.mxu0 0.0
    %2551 = vmatpush.xpose.msra.mxu0 0.0
    %2552 = vmatpush.xpose.msra.mxu0 0.0
    %2553 = vmatpush.xpose.msra.mxu0 0.0
    %2554 = vmatpush.xpose.msra.mxu0 0.0
    %2555 = vmatpush.xpose.msra.mxu0 0.0
    %2556 = vmatpush.xpose.msra.mxu0 0.0
    %2557 = vmatpush.xpose.msra.mxu0 0.0
    %2558 = vmatpush.xpose.msra.mxu0 0.0
    %2559 = vmatpush.xpose.msra.mxu0 0.0
    %2560 = vmatpush.xpose.msra.mxu0 0.0
    %2561 = vmatpush.xpose.msra.mxu0 0.0
    %2562 = vmatpush.xpose.msra.mxu0 0.0
    %2563 = vmatpush.xpose.msra.mxu0 0.0
    %2564 = vmatpush.xpose.msra.mxu0 %v2548
    %2565 = vmatpush.xpose.msra.mxu0 %v2545
    %2566 = vmatmul.f32.gmra.mxu0 %v2539
    %v2567 = vpop.f32.mrf.mxu0
    %v2568 = vadd.f32 0.0, %v2567
    %2569 = vmatmul.f32.gmra.mxu0 %v2542
    %v2570 = vpop.f32.mrf.mxu0
    %v2571 = vadd.f32 0.0, %v2570
    %2572 = vdwg.mxu0
    %v2574 = vsel %vm861, %v1958, 0
    %v2577 = vsel %vm861, %v2012, 0
    %v2580 = vsel %vm861, %v2202, 0
    %v2583 = vsel %vm861, %v2256, 0
    %2585 = vmatpush.xpose.msra.mxu0 0.0
    %2586 = vmatpush.xpose.msra.mxu0 0.0
    %2587 = vmatpush.xpose.msra.mxu0 0.0
    %2588 = vmatpush.xpose.msra.mxu0 0.0
    %2589 = vmatpush.xpose.msra.mxu0 0.0
    %2590 = vmatpush.xpose.msra.mxu0 0.0
    %2591 = vmatpush.xpose.msra.mxu0 0.0
    %2592 = vmatpush.xpose.msra.mxu0 0.0
    %2593 = vmatpush.xpose.msra.mxu0 0.0
    %2594 = vmatpush.xpose.msra.mxu0 0.0
    %2595 = vmatpush.xpose.msra.mxu0 0.0
    %2596 = vmatpush.xpose.msra.mxu0 0.0
    %2597 = vmatpush.xpose.msra.mxu0 0.0
    %2598 = vmatpush.xpose.msra.mxu0 0.0
    %2599 = vmatpush.xpose.msra.mxu0 %v2583
    %2600 = vmatpush.xpose.msra.mxu0 %v2580
    %2601 = vmatmul.f32.gmra.mxu0 %v2574
    %v2602 = vpop.f32.mrf.mxu0
    %v2603 = vadd.f32 0.0, %v2602
    %2604 = vmatmul.f32.gmra.mxu0 %v2577
    %v2605 = vpop.f32.mrf.mxu0
    %v2606 = vadd.f32 0.0, %v2605
    %2607 = vdwg.mxu0
    %v2609 = vsel %vm861, %v1960, 0
    %v2612 = vsel %vm861, %v2014, 0
    %v2615 = vsel %vm861, %v2204, 0
    %v2618 = vsel %vm861, %v2258, 0
    %2620 = vmatpush.xpose.msra.mxu0 0.0
    %2621 = vmatpush.xpose.msra.mxu0 0.0
    %2622 = vmatpush.xpose.msra.mxu0 0.0
    %2623 = vmatpush.xpose.msra.mxu0 0.0
    %2624 = vmatpush.xpose.msra.mxu0 0.0
    %2625 = vmatpush.xpose.msra.mxu0 0.0
    %2626 = vmatpush.xpose.msra.mxu0 0.0
    %2627 = vmatpush.xpose.msra.mxu0 0.0
    %2628 = vmatpush.xpose.msra.mxu0 0.0
    %2629 = vmatpush.xpose.msra.mxu0 0.0
    %2630 = vmatpush.xpose.msra.mxu0 0.0
    %2631 = vmatpush.xpose.msra.mxu0 0.0
    %2632 = vmatpush.xpose.msra.mxu0 0.0
    %2633 = vmatpush.xpose.msra.mxu0 0.0
    %2634 = vmatpush.xpose.msra.mxu0 %v2618
    %2635 = vmatpush.xpose.msra.mxu0 %v2615
    %2636 = vmatmul.f32.gmra.mxu0 %v2609
    %v2637 = vpop.f32.mrf.mxu0
    %v2638 = vadd.f32 0.0, %v2637
    %2639 = vmatmul.f32.gmra.mxu0 %v2612
    %v2640 = vpop.f32.mrf.mxu0
    %v2641 = vadd.f32 0.0, %v2640
    %2642 = vdwg.mxu0
    %v2643 = vmul.f32 %v2533, 0.35355338
    %v2644 = vmul.f32 %v2536, 0.35355338
    %v2645 = vmul.f32 %v2568, 0.35355338
    %v2646 = vmul.f32 %v2571, 0.35355338
    %v2647 = vmul.f32 %v2603, 0.35355338
    %v2648 = vmul.f32 %v2606, 0.35355338
    %v2649 = vmul.f32 %v2638, 0.35355338
    %v2650 = vmul.f32 %v2641, 0.35355338
    %v2651 = vadd.f32 %v2643, %v86
    %v2652 = vadd.f32 %v2644, %v87
    %v2653 = vadd.f32 %v2645, %v86
    %v2654 = vadd.f32 %v2646, %v87
    %v2655 = vadd.f32 %v2647, %v86
    %v2656 = vadd.f32 %v2648, %v87
    %v2657 = vadd.f32 %v2649, %v86
    %v2658 = vadd.f32 %v2650, %v87
    %v2659 = vsel %vm1018, %v2651, -inf
    %2660 = vmax.xlane.f32.xlu0 %v2659
    %v2661 = vpop.xlane.xlu0 %2660
    %v2662 = vsel %vm1018, %v2652, -inf
    %2663 = vmax.xlane.f32.xlu0 %v2662
    %v2664 = vpop.xlane.xlu0 %2663
    %v2665 = vsel %vm1018, %v2653, -inf
    %2666 = vmax.xlane.f32.xlu0 %v2665
    %v2667 = vpop.xlane.xlu0 %2666
    %v2668 = vsel %vm1018, %v2654, -inf
    %2669 = vmax.xlane.f32.xlu0 %v2668
    %v2670 = vpop.xlane.xlu0 %2669
    %v2671 = vsel %vm1018, %v2655, -inf
    %2672 = vmax.xlane.f32.xlu0 %v2671
    %v2673 = vpop.xlane.xlu0 %2672
    %v2674 = vsel %vm1018, %v2656, -inf
    %2675 = vmax.xlane.f32.xlu0 %v2674
    %v2676 = vpop.xlane.xlu0 %2675
    %v2677 = vsel %vm1018, %v2657, -inf
    %2678 = vmax.xlane.f32.xlu0 %v2677
    %v2679 = vpop.xlane.xlu0 %2678
    %v2680 = vsel %vm1018, %v2658, -inf
    %2681 = vmax.xlane.f32.xlu0 %v2680
    %v2682 = vpop.xlane.xlu0 %2681
    %v2683 = vsub.f32 %v2651, %v2661
    %v2684 = vsub.f32 %v2652, %v2664
    %v2685 = vsub.f32 %v2653, %v2667
    %v2686 = vsub.f32 %v2654, %v2670
    %v2687 = vsub.f32 %v2655, %v2673
    %v2688 = vsub.f32 %v2656, %v2676
    %v2689 = vsub.f32 %v2657, %v2679
    %v2690 = vsub.f32 %v2658, %v2682
    %v2691 = vmul.f32 %v2683, 1.442695
    %v2692 = vpow.pop %v2691
    %v2693 = vmul.f32 %v2684, 1.442695
    %v2694 = vpow.pop %v2693
    %v2695 = vmul.f32 %v2685, 1.442695
    %v2696 = vpow.pop %v2695
    %v2697 = vmul.f32 %v2686, 1.442695
    %v2698 = vpow.pop %v2697
    %v2699 = vmul.f32 %v2687, 1.442695
    %v2700 = vpow.pop %v2699
    %v2701 = vmul.f32 %v2688, 1.442695
    %v2702 = vpow.pop %v2701
    %v2703 = vmul.f32 %v2689, 1.442695
    %v2704 = vpow.pop %v2703
    %v2705 = vmul.f32 %v2690, 1.442695
    %v2706 = vpow.pop %v2705
    %v2707 = vsel %vm1018, %v2692, 0.0
    %2708 = vadd.xlane.f32.xlu0 %v2707
    %v2709 = vpop.xlane.xlu0 %2708
    %v2710 = vsel %vm1018, %v2694, 0.0
    %2711 = vadd.xlane.f32.xlu0 %v2710
    %v2712 = vpop.xlane.xlu0 %2711
    %v2713 = vsel %vm1018, %v2696, 0.0
    %2714 = vadd.xlane.f32.xlu0 %v2713
    %v2715 = vpop.xlane.xlu0 %2714
    %v2716 = vsel %vm1018, %v2698, 0.0
    %2717 = vadd.xlane.f32.xlu0 %v2716
    %v2718 = vpop.xlane.xlu0 %2717
    %v2719 = vsel %vm1018, %v2700, 0.0
    %2720 = vadd.xlane.f32.xlu0 %v2719
    %v2721 = vpop.xlane.xlu0 %2720
    %v2722 = vsel %vm1018, %v2702, 0.0
    %2723 = vadd.xlane.f32.xlu0 %v2722
    %v2724 = vpop.xlane.xlu0 %2723
    %v2725 = vsel %vm1018, %v2704, 0.0
    %2726 = vadd.xlane.f32.xlu0 %v2725
    %v2727 = vpop.xlane.xlu0 %2726
    %v2728 = vsel %vm1018, %v2706, 0.0
    %2729 = vadd.xlane.f32.xlu0 %v2728
    %v2730 = vpop.xlane.xlu0 %2729
    %v2731 = vrcp.pop %v2709
    %v2732 = vrcp.pop %v2712
    %v2733 = vrcp.pop %v2715
    %v2734 = vrcp.pop %v2718
    %v2735 = vrcp.pop %v2721
    %v2736 = vrcp.pop %v2724
    %v2737 = vrcp.pop %v2727
    %v2738 = vrcp.pop %v2730
    %v2739 = vmul.f32 %v2692, %v2731
    %v2740 = vmul.f32 %v2694, %v2732
    %v2741 = vmul.f32 %v2696, %v2733
    %v2742 = vmul.f32 %v2698, %v2734
    %v2743 = vmul.f32 %v2700, %v2735
    %v2744 = vmul.f32 %v2702, %v2736
    %v2745 = vmul.f32 %v2704, %v2737
    %v2746 = vmul.f32 %v2706, %v2738
    %v2748 = vsel %vm1018, %v2739, 0
    %v2751 = vsel %vm1018, %v2740, 0
    %2753 = vmatpush.msra.mxu0 0.0
    %2754 = vmatpush.msra.mxu0 0.0
    %2755 = vmatpush.msra.mxu0 0.0
    %2756 = vmatpush.msra.mxu0 0.0
    %2757 = vmatpush.msra.mxu0 0.0
    %2758 = vmatpush.msra.mxu0 0.0
    %2759 = vmatpush.msra.mxu0 0.0
    %2760 = vmatpush.msra.mxu0 0.0
    %2761 = vmatpush.msra.mxu0 0.0
    %2762 = vmatpush.msra.mxu0 0.0
    %2763 = vmatpush.msra.mxu0 0.0
    %2764 = vmatpush.msra.mxu0 0.0
    %2765 = vmatpush.msra.mxu0 0.0
    %2766 = vmatpush.msra.mxu0 0.0
    %2767 = vmatpush.msra.mxu0 %v2496
    %2768 = vmatpush.msra.mxu0 %v2442
    %2769 = vmatmul.f32.gmra.mxu0 %v2748
    %v2770 = vpop.f32.mrf.mxu0
    %v2771 = vadd.f32 0.0, %v2770
    %2772 = vmatmul.f32.gmra.mxu0 %v2751
    %v2773 = vpop.f32.mrf.mxu0
    %v2774 = vadd.f32 0.0, %v2773
    %2775 = vdwg.mxu0
    %v2777 = vsel %vm1018, %v2741, 0
    %v2780 = vsel %vm1018, %v2742, 0
    %2782 = vmatpush.msra.mxu0 0.0
    %2783 = vmatpush.msra.mxu0 0.0
    %2784 = vmatpush.msra.mxu0 0.0
    %2785 = vmatpush.msra.mxu0 0.0
    %2786 = vmatpush.msra.mxu0 0.0
    %2787 = vmatpush.msra.mxu0 0.0
    %2788 = vmatpush.msra.mxu0 0.0
    %2789 = vmatpush.msra.mxu0 0.0
    %2790 = vmatpush.msra.mxu0 0.0
    %2791 = vmatpush.msra.mxu0 0.0
    %2792 = vmatpush.msra.mxu0 0.0
    %2793 = vmatpush.msra.mxu0 0.0
    %2794 = vmatpush.msra.mxu0 0.0
    %2795 = vmatpush.msra.mxu0 0.0
    %2796 = vmatpush.msra.mxu0 %v2498
    %2797 = vmatpush.msra.mxu0 %v2444
    %2798 = vmatmul.f32.gmra.mxu0 %v2777
    %v2799 = vpop.f32.mrf.mxu0
    %v2800 = vadd.f32 0.0, %v2799
    %2801 = vmatmul.f32.gmra.mxu0 %v2780
    %v2802 = vpop.f32.mrf.mxu0
    %v2803 = vadd.f32 0.0, %v2802
    %2804 = vdwg.mxu0
    %v2806 = vsel %vm1018, %v2743, 0
    %v2809 = vsel %vm1018, %v2744, 0
    %2811 = vmatpush.msra.mxu0 0.0
    %2812 = vmatpush.msra.mxu0 0.0
    %2813 = vmatpush.msra.mxu0 0.0
    %2814 = vmatpush.msra.mxu0 0.0
    %2815 = vmatpush.msra.mxu0 0.0
    %2816 = vmatpush.msra.mxu0 0.0
    %2817 = vmatpush.msra.mxu0 0.0
    %2818 = vmatpush.msra.mxu0 0.0
    %2819 = vmatpush.msra.mxu0 0.0
    %2820 = vmatpush.msra.mxu0 0.0
    %2821 = vmatpush.msra.mxu0 0.0
    %2822 = vmatpush.msra.mxu0 0.0
    %2823 = vmatpush.msra.mxu0 0.0
    %2824 = vmatpush.msra.mxu0 0.0
    %2825 = vmatpush.msra.mxu0 %v2500
    %2826 = vmatpush.msra.mxu0 %v2446
    %2827 = vmatmul.f32.gmra.mxu0 %v2806
    %v2828 = vpop.f32.mrf.mxu0
    %v2829 = vadd.f32 0.0, %v2828
    %2830 = vmatmul.f32.gmra.mxu0 %v2809
    %v2831 = vpop.f32.mrf.mxu0
    %v2832 = vadd.f32 0.0, %v2831
    %2833 = vdwg.mxu0
    %v2835 = vsel %vm1018, %v2745, 0
    %v2838 = vsel %vm1018, %v2746, 0
    %2840 = vmatpush.msra.mxu0 0.0
    %2841 = vmatpush.msra.mxu0 0.0
    %2842 = vmatpush.msra.mxu0 0.0
    %2843 = vmatpush.msra.mxu0 0.0
    %2844 = vmatpush.msra.mxu0 0.0
    %2845 = vmatpush.msra.mxu0 0.0
    %2846 = vmatpush.msra.mxu0 0.0
    %2847 = vmatpush.msra.mxu0 0.0
    %2848 = vmatpush.msra.mxu0 0.0
    %2849 = vmatpush.msra.mxu0 0.0
    %2850 = vmatpush.msra.mxu0 0.0
    %2851 = vmatpush.msra.mxu0 0.0
    %2852 = vmatpush.msra.mxu0 0.0
    %2853 = vmatpush.msra.mxu0 0.0
    %2854 = vmatpush.msra.mxu0 %v2502
    %2855 = vmatpush.msra.mxu0 %v2448
    %2856 = vmatmul.f32.gmra.mxu0 %v2835
    %v2857 = vpop.f32.mrf.mxu0
    %v2858 = vadd.f32 0.0, %v2857
    %2859 = vmatmul.f32.gmra.mxu0 %v2838
    %v2860 = vpop.f32.mrf.mxu0
    %v2861 = vadd.f32 0.0, %v2860
    %2862 = vdwg.mxu0
    %v2863 = vrot.slane %v2829, 4
    %v2864 = vsel %vm153, %v2863, %v2771
    %v2865 = vrot.slane %v2771, 4
    %v2866 = vsel %vm153, %v2829, %v2865
    %v2868 = vunpack.c.l.s4 1983009808
    %v2869 = vunpack.c.0.s8 %v2868
    %v2870 = vperm.slane %v2864, %v2869
    %v2872 = vunpack.c.l.s4 1983009808
    %v2873 = vunpack.c.0.s8 %v2872
    %v2874 = vperm.slane %v2866, %v2873
    %v2875 = vrot.slane %v2858, 4
    %v2876 = vsel %vm153, %v2875, %v2800
    %v2877 = vrot.slane %v2800, 4
    %v2878 = vsel %vm153, %v2858, %v2877
    %v2880 = vunpack.c.l.s4 1983009808
    %v2881 = vunpack.c.0.s8 %v2880
    %v2882 = vperm.slane %v2876, %v2881
    %v2884 = vunpack.c.l.s4 1983009808
    %v2885 = vunpack.c.0.s8 %v2884
    %v2886 = vperm.slane %v2878, %v2885
    %v2887 = vrot.slane %v2882, 4
    %v2888 = vsel %vm153, %v2887, %v2870
    %v2889 = vrot.slane %v2870, 4
    %v2890 = vsel %vm153, %v2882, %v2889
    %v2892 = vunpack.c.l.s4 1934713408
    %v2893 = vunpack.c.0.s8 %v2892
    %v2894 = vperm.slane %v2888, %v2893
    %v2896 = vunpack.c.l.s4 1934713408
    %v2897 = vunpack.c.0.s8 %v2896
    %v2898 = vperm.slane %v2890, %v2897
    %v2899 = vrot.slane %v2886, 4
    %v2900 = vsel %vm153, %v2899, %v2874
    %v2901 = vrot.slane %v2874, 4
    %v2902 = vsel %vm153, %v2886, %v2901
    %v2904 = vunpack.c.l.s4 1934713408
    %v2905 = vunpack.c.0.s8 %v2904
    %v2906 = vperm.slane %v2900, %v2905
    %v2908 = vunpack.c.l.s4 1934713408
    %v2909 = vunpack.c.0.s8 %v2908
    %v2910 = vperm.slane %v2902, %v2909
    %v2911 = vrot.slane %v2894, 4
    %v2912 = vsel %vm153, 0.0, %v2911
    %v2913 = vrot.slane %v2898, 4
    %v2914 = vsel %vm153, 0.0, %v2913
    %v2915 = vrot.slane %v2906, 4
    %v2916 = vsel %vm153, 0.0, %v2915
    %v2917 = vrot.slane %v2910, 4
    %v2918 = vsel %vm153, 0.0, %v2917
    %v2919 = vrot.slane %v2832, 4
    %v2920 = vsel %vm153, %v2919, %v2774
    %v2921 = vrot.slane %v2774, 4
    %v2922 = vsel %vm153, %v2832, %v2921
    %v2924 = vunpack.c.l.s4 1983009808
    %v2925 = vunpack.c.0.s8 %v2924
    %v2926 = vperm.slane %v2920, %v2925
    %v2928 = vunpack.c.l.s4 1983009808
    %v2929 = vunpack.c.0.s8 %v2928
    %v2930 = vperm.slane %v2922, %v2929
    %v2931 = vrot.slane %v2861, 4
    %v2932 = vsel %vm153, %v2931, %v2803
    %v2933 = vrot.slane %v2803, 4
    %v2934 = vsel %vm153, %v2861, %v2933
    %v2936 = vunpack.c.l.s4 1983009808
    %v2937 = vunpack.c.0.s8 %v2936
    %v2938 = vperm.slane %v2932, %v2937
    %v2940 = vunpack.c.l.s4 1983009808
    %v2941 = vunpack.c.0.s8 %v2940
    %v2942 = vperm.slane %v2934, %v2941
    %v2943 = vrot.slane %v2938, 4
    %v2944 = vsel %vm153, %v2943, %v2926
    %v2945 = vrot.slane %v2926, 4
    %v2946 = vsel %vm153, %v2938, %v2945
    %v2948 = vunpack.c.l.s4 1934713408
    %v2949 = vunpack.c.0.s8 %v2948
    %v2950 = vperm.slane %v2944, %v2949
    %v2952 = vunpack.c.l.s4 1934713408
    %v2953 = vunpack.c.0.s8 %v2952
    %v2954 = vperm.slane %v2946, %v2953
    %v2955 = vrot.slane %v2942, 4
    %v2956 = vsel %vm153, %v2955, %v2930
    %v2957 = vrot.slane %v2930, 4
    %v2958 = vsel %vm153, %v2942, %v2957
    %v2960 = vunpack.c.l.s4 1934713408
    %v2961 = vunpack.c.0.s8 %v2960
    %v2962 = vperm.slane %v2956, %v2961
    %v2964 = vunpack.c.l.s4 1934713408
    %v2965 = vunpack.c.0.s8 %v2964
    %v2966 = vperm.slane %v2958, %v2965
    %v2967 = vrot.slane %v2950, 4
    %v2968 = vsel %vm153, 0.0, %v2967
    %v2969 = vrot.slane %v2954, 4
    %v2970 = vsel %vm153, 0.0, %v2969
    %v2971 = vrot.slane %v2962, 4
    %v2972 = vsel %vm153, 0.0, %v2971
    %v2973 = vrot.slane %v2966, 4
    %v2974 = vsel %vm153, 0.0, %v2973
    %v2975 = vsel %vm153, %v2913, %v2894
    %v2977 = vunpack.c.l.s4 1983009808
    %v2978 = vunpack.c.0.s8 %v2977
    %v2979 = vperm.slane %v2975, %v2978
    %v2980 = vrot.slane %v2914, 4
    %v2981 = vsel %vm153, %v2980, %v2912
    %v2983 = vunpack.c.l.s4 1983009808
    %v2984 = vunpack.c.0.s8 %v2983
    %v2985 = vperm.slane %v2981, %v2984
    %v2986 = vsel %vm153, %v2917, %v2906
    %v2988 = vunpack.c.l.s4 1983009808
    %v2989 = vunpack.c.0.s8 %v2988
    %v2990 = vperm.slane %v2986, %v2989
    %v2991 = vrot.slane %v2918, 4
    %v2992 = vsel %vm153, %v2991, %v2916
    %v2994 = vunpack.c.l.s4 1983009808
    %v2995 = vunpack.c.0.s8 %v2994
    %v2996 = vperm.slane %v2992, %v2995
    %v2997 = vrot.slane %v2985, 4
    %v2998 = vsel %vm153, %v2997, %v2979
    %v2999 = vrot.slane %v2979, 4
    %v3000 = vsel %vm153, %v2985, %v2999
    %v3002 = vunpack.c.l.s4 1934713408
    %v3003 = vunpack.c.0.s8 %v3002
    %v3004 = vperm.slane %v2998, %v3003
    %v3006 = vunpack.c.l.s4 1934713408
    %v3007 = vunpack.c.0.s8 %v3006
    %v3008 = vperm.slane %v3000, %v3007
    %v3009 = vrot.slane %v2996, 4
    %v3010 = vsel %vm153, %v3009, %v2990
    %v3011 = vrot.slane %v2990, 4
    %v3012 = vsel %vm153, %v2996, %v3011
    %v3014 = vunpack.c.l.s4 1934713408
    %v3015 = vunpack.c.0.s8 %v3014
    %v3016 = vperm.slane %v3010, %v3015
    %v3018 = vunpack.c.l.s4 1934713408
    %v3019 = vunpack.c.0.s8 %v3018
    %v3020 = vperm.slane %v3012, %v3019
    %v3021 = vrot.slane %v3016, 4
    %v3022 = vsel %vm153, %v3021, %v3004
    %v3023 = vrot.slane %v3004, 4
    %v3024 = vsel %vm153, %v3016, %v3023
    %v3025 = vrot.slane %v3020, 4
    %v3026 = vsel %vm153, %v3025, %v3008
    %v3027 = vrot.slane %v3008, 4
    %v3028 = vsel %vm153, %v3020, %v3027
    %v3029 = vsel %vm153, %v2969, %v2950
    %v3031 = vunpack.c.l.s4 1983009808
    %v3032 = vunpack.c.0.s8 %v3031
    %v3033 = vperm.slane %v3029, %v3032
    %v3034 = vrot.slane %v2970, 4
    %v3035 = vsel %vm153, %v3034, %v2968
    %v3037 = vunpack.c.l.s4 1983009808
    %v3038 = vunpack.c.0.s8 %v3037
    %v3039 = vperm.slane %v3035, %v3038
    %v3040 = vsel %vm153, %v2973, %v2962
    %v3042 = vunpack.c.l.s4 1983009808
    %v3043 = vunpack.c.0.s8 %v3042
    %v3044 = vperm.slane %v3040, %v3043
    %v3045 = vrot.slane %v2974, 4
    %v3046 = vsel %vm153, %v3045, %v2972
    %v3048 = vunpack.c.l.s4 1983009808
    %v3049 = vunpack.c.0.s8 %v3048
    %v3050 = vperm.slane %v3046, %v3049
    %v3051 = vrot.slane %v3039, 4
    %v3052 = vsel %vm153, %v3051, %v3033
    %v3053 = vrot.slane %v3033, 4
    %v3054 = vsel %vm153, %v3039, %v3053
    %v3056 = vunpack.c.l.s4 1934713408
    %v3057 = vunpack.c.0.s8 %v3056
    %v3058 = vperm.slane %v3052, %v3057
    %v3060 = vunpack.c.l.s4 1934713408
    %v3061 = vunpack.c.0.s8 %v3060
    %v3062 = vperm.slane %v3054, %v3061
    %v3063 = vrot.slane %v3050, 4
    %v3064 = vsel %vm153, %v3063, %v3044
    %v3065 = vrot.slane %v3044, 4
    %v3066 = vsel %vm153, %v3050, %v3065
    %v3068 = vunpack.c.l.s4 1934713408
    %v3069 = vunpack.c.0.s8 %v3068
    %v3070 = vperm.slane %v3064, %v3069
    %v3072 = vunpack.c.l.s4 1934713408
    %v3073 = vunpack.c.0.s8 %v3072
    %v3074 = vperm.slane %v3066, %v3073
    %v3075 = vrot.slane %v3070, 4
    %v3076 = vsel %vm153, %v3075, %v3058
    %v3077 = vrot.slane %v3058, 4
    %v3078 = vsel %vm153, %v3070, %v3077
    %v3079 = vrot.slane %v3074, 4
    %v3080 = vsel %vm153, %v3079, %v3062
    %v3081 = vrot.slane %v3062, 4
    %v3082 = vsel %vm153, %v3074, %v3081
    %3085 = vrot.lane.b32.xlu0 %v3024, 8
    %v3086 = vpop.permute.xlu0 %3085
    %3087 = vrot.lane.b32.xlu0 %v3078, 8
    %v3088 = vpop.permute.xlu0 %3087
    %3093 = vrot.lane.b32.xlu0 %v3026, 16
    %v3094 = vpop.permute.xlu0 %3093
    %3095 = vrot.lane.b32.xlu0 %v3080, 16
    %v3096 = vpop.permute.xlu0 %3095
    %3101 = vrot.lane.b32.xlu0 %v3028, 24
    %v3102 = vpop.permute.xlu0 %3101
    %3103 = vrot.lane.b32.xlu0 %v3082, 24
    %v3104 = vpop.permute.xlu0 %3103
    %v3107 = vsel %vm861, %v3022, %v3086
    %v3108 = vsel %vm861, %v3076, %v3088
    %v3109 = vsel %vm1018, %v3107, %v3094
    %v3110 = vsel %vm1018, %v3108, %v3096
    %v3111 = vsel %vm1471, %v3109, %v3102
    %v3112 = vsel %vm1471, %v3110, %v3104
    %3117 = vrot.lane.b32.xlu0 %v1731, 32
    %v3118 = vpop.permute.xlu0 %3117
    %3119 = vrot.lane.b32.xlu0 %v1733, 32
    %v3120 = vpop.permute.xlu0 %3119
    %3121 = vrot.lane.b32.xlu0 %v1735, 32
    %v3122 = vpop.permute.xlu0 %3121
    %3123 = vrot.lane.b32.xlu0 %v1737, 32
    %v3124 = vpop.permute.xlu0 %3123
    %3129 = vrot.lane.b32.xlu0 %v1744, 32
    %v3130 = vpop.permute.xlu0 %3129
    %v3133 = vsel %vm102, %v3111, 0
    %v3136 = vsel %vm102, %v3112, 0
    %3138 = vmatpush.msra.mxu0 0.0
    %3139 = vmatpush.msra.mxu0 0.0
    %3140 = vmatpush.msra.mxu0 0.0
    %3141 = vmatpush.msra.mxu0 0.0
    %3142 = vmatpush.msra.mxu0 0.0
    %3143 = vmatpush.msra.mxu0 0.0
    %3144 = vmatpush.msra.mxu0 0.0
    %3145 = vmatpush.msra.mxu0 0.0
    %3146 = vmatpush.msra.mxu0 0.0
    %3147 = vmatpush.msra.mxu0 0.0
    %3148 = vmatpush.msra.mxu0 0.0
    %3149 = vmatpush.msra.mxu0 0.0
    %3150 = vmatpush.msra.mxu0 %v3124
    %3151 = vmatpush.msra.mxu0 %v3122
    %3152 = vmatpush.msra.mxu0 %v3120
    %3153 = vmatpush.msra.mxu0 %v3118
    %3154 = vmatmul.f32.gmra.mxu0 %v3133
    %v3155 = vpop.f32.mrf.mxu0
    %v3156 = vadd.f32 %v3130, %v3155
    %3157 = vmatmul.f32.gmra.mxu0 %v3136
    %v3158 = vpop.f32.mrf.mxu0
    %v3159 = vadd.f32 %v3130, %v3158
    %3160 = vdwg.mxu0
    %v3161 = vadd.f32 %v3156, %v1728
    %v3162 = vadd.f32 %v3159, %v1729
    %v3163 = vsel %vm102, %v3161, 0.0
    %3164 = vadd.xlane.f32.xlu0 %v3163
    %v3165 = vpop.xlane.xlu0 %3164
    %v3166 = vsel %vm102, %v3162, 0.0
    %3167 = vadd.xlane.f32.xlu0 %v3166
    %v3168 = vpop.xlane.xlu0 %3167
    %v3169 = vmul.f32 %v3165, %v1536
    %v3170 = vmul.f32 %v3168, %v1536
    %v3171 = vsub.f32 %v3161, %v3169
    %v3172 = vsub.f32 %v3162, %v3170
    %v3173 = vmul.f32 %v3171, %v3171
    %v3174 = vmul.f32 %v3172, %v3172
    %v3175 = vsel %vm102, %v3173, 0.0
    %3176 = vadd.xlane.f32.xlu0 %v3175
    %v3177 = vpop.xlane.xlu0 %3176
    %v3178 = vsel %vm102, %v3174, 0.0
    %3179 = vadd.xlane.f32.xlu0 %v3178
    %v3180 = vpop.xlane.xlu0 %3179
    %v3181 = vmul.f32 %v3177, %v1536
    %v3182 = vmul.f32 %v3180, %v1536
    %v3183 = vadd.f32 %v3181, 1e-05
    %v3184 = vadd.f32 %v3182, 1e-05
    %v3185 = vrsqrt.pop %v3183
    %v3186 = vmul.f32 %v3185, %v3183
    %v3187 = vmul.f32 %v3186, %v3185
    %v3188 = vmul.f32 0.5, %v3187
    %v3189 = vsub.f32 1.5, %v3188
    %v3190 = vmul.f32 %v3185, %v3189
    %vm3191 = vweird.f32 %v3183
    %vm3192 = vweird.f32 %v3185
    %vm3193 = vmor %vm3191, %vm3192
    %v3194 = vsel %vm3193, %v3185, %v3190
    %v3195 = vrsqrt.pop %v3184
    %v3196 = vmul.f32 %v3195, %v3184
    %v3197 = vmul.f32 %v3196, %v3195
    %v3198 = vmul.f32 0.5, %v3197
    %v3199 = vsub.f32 1.5, %v3198
    %v3200 = vmul.f32 %v3195, %v3199
    %vm3201 = vweird.f32 %v3184
    %vm3202 = vweird.f32 %v3195
    %vm3203 = vmor %vm3201, %vm3202
    %v3204 = vsel %vm3203, %v3195, %v3200
    %v3205 = vmul.f32 %v3171, %v3194
    %v3206 = vmul.f32 %v3172, %v3204
    %v3208 = vperm.slane %v1742, 0
    %v3210 = vmul.f32 %v3205, %v3208
    %v3211 = vmul.f32 %v3206, %v3208
    %3212 = vrot.lane.b32.xlu0 %v3208, 96
    %v3213 = vpop.permute.xlu0 %3212
    %v3215 = vadd.f32 %v3210, %v3213
    %v3216 = vadd.f32 %v3211, %v3213
    %v3217 = vrot.slane %v1740, 1
    %v3218 = vperm.slane %v3217, 0
    %v3221 = vsel %vm102, %v3215, 0
    %v3224 = vsel %vm102, %v3216, 0
    %3226 = vmatpush.msra.mxu0 0.0
    %3227 = vmatpush.msra.mxu0 0.0
    %3228 = vmatpush.msra.mxu0 0.0
    %3229 = vmatpush.msra.mxu0 0.0
    %3230 = vmatpush.msra.mxu0 0.0
    %3231 = vmatpush.msra.mxu0 0.0
    %3232 = vmatpush.msra.mxu0 0.0
    %3233 = vmatpush.msra.mxu0 0.0
    %3234 = vmatpush.msra.mxu0 0.0
    %3235 = vmatpush.msra.mxu0 0.0
    %3236 = vmatpush.msra.mxu0 0.0
    %3237 = vmatpush.msra.mxu0 0.0
    %3238 = vmatpush.msra.mxu0 %v1738
    %3239 = vmatpush.msra.mxu0 %v1736
    %3240 = vmatpush.msra.mxu0 %v1734
    %3241 = vmatpush.msra.mxu0 %v1732
    %3242 = vmatmul.f32.gmra.mxu0 %v3221
    %v3243 = vpop.f32.mrf.mxu0
    %v3244 = vadd.f32 %v3218, %v3243
    %3245 = vmatmul.f32.gmra.mxu0 %v3224
    %v3246 = vpop.f32.mrf.mxu0
    %v3247 = vadd.f32 %v3218, %v3246
    %3248 = vdwg.mxu0
    %v3249 = vmax.f32 %v3244, 0.0
    %v3250 = vmax.f32 %v3247, 0.0
    %3251 = vrot.lane.b32.xlu0 %v1740, 64
    %v3252 = vpop.permute.xlu0 %3251
    %v3253 = vrot.slane %v3252, 1
    %v3254 = vperm.slane %v3253, 0
    %3260 = vrot.lane.b32.xlu0 %v1732, 64
    %v3261 = vpop.permute.xlu0 %3260
    %3262 = vrot.lane.b32.xlu0 %v1734, 64
    %v3263 = vpop.permute.xlu0 %3262
    %3264 = vrot.lane.b32.xlu0 %v1736, 64
    %v3265 = vpop.permute.xlu0 %3264
    %3266 = vrot.lane.b32.xlu0 %v1738, 64
    %v3267 = vpop.permute.xlu0 %3266
    %v3269 = vsel %vm1636, %v3249, 0
    %v3272 = vsel %vm1636, %v3250, 0
    %v3274 = vsel %vm1636, %v3261, 0
    %v3276 = vsel %vm1636, %v3263, 0
    %v3278 = vsel %vm1636, %v3265, 0
    %v3280 = vsel %vm1636, %v3267, 0
    %3282 = vmatpush.xpose.msra.mxu0 0.0
    %3283 = vmatpush.xpose.msra.mxu0 0.0
    %3284 = vmatpush.xpose.msra.mxu0 0.0
    %3285 = vmatpush.xpose.msra.mxu0 0.0
    %3286 = vmatpush.xpose.msra.mxu0 0.0
    %3287 = vmatpush.xpose.msra.mxu0 0.0
    %3288 = vmatpush.xpose.msra.mxu0 0.0
    %3289 = vmatpush.xpose.msra.mxu0 0.0
    %3290 = vmatpush.xpose.msra.mxu0 0.0
    %3291 = vmatpush.xpose.msra.mxu0 0.0
    %3292 = vmatpush.xpose.msra.mxu0 0.0
    %3293 = vmatpush.xpose.msra.mxu0 0.0
    %3294 = vmatpush.xpose.msra.mxu0 %v3280
    %3295 = vmatpush.xpose.msra.mxu0 %v3278
    %3296 = vmatpush.xpose.msra.mxu0 %v3276
    %3297 = vmatpush.xpose.msra.mxu0 %v3274
    %3298 = vmatmul.f32.gmra.mxu0 %v3269
    %v3299 = vpop.f32.mrf.mxu0
    %v3300 = vadd.f32 %v3254, %v3299
    %3301 = vmatmul.f32.gmra.mxu0 %v3272
    %v3302 = vpop.f32.mrf.mxu0
    %v3303 = vadd.f32 %v3254, %v3302
    %3304 = vdwg.mxu0
    %v3305 = vadd.f32 %v3300, %v3215
    %v3306 = vadd.f32 %v3303, %v3216
    %v3307 = vsel %vm102, %v3305, 0.0
    %3308 = vadd.xlane.f32.xlu0 %v3307
    %v3309 = vpop.xlane.xlu0 %3308
    %v3310 = vsel %vm102, %v3306, 0.0
    %3311 = vadd.xlane.f32.xlu0 %v3310
    %v3312 = vpop.xlane.xlu0 %3311
    %v3313 = vmul.f32 %v3309, %v1536
    %v3314 = vmul.f32 %v3312, %v1536
    %v3315 = vsub.f32 %v3305, %v3313
    %v3316 = vsub.f32 %v3306, %v3314
    %v3317 = vmul.f32 %v3315, %v3315
    %v3318 = vmul.f32 %v3316, %v3316
    %v3319 = vsel %vm102, %v3317, 0.0
    %3320 = vadd.xlane.f32.xlu0 %v3319
    %v3321 = vpop.xlane.xlu0 %3320
    %v3322 = vsel %vm102, %v3318, 0.0
    %3323 = vadd.xlane.f32.xlu0 %v3322
    %v3324 = vpop.xlane.xlu0 %3323
    %v3325 = vmul.f32 %v3321, %v1536
    %v3326 = vmul.f32 %v3324, %v1536
    %v3327 = vadd.f32 %v3325, 1e-05
    %v3328 = vadd.f32 %v3326, 1e-05
    %v3329 = vrsqrt.pop %v3327
    %v3330 = vmul.f32 %v3329, %v3327
    %v3331 = vmul.f32 %v3330, %v3329
    %v3332 = vmul.f32 0.5, %v3331
    %v3333 = vsub.f32 1.5, %v3332
    %v3334 = vmul.f32 %v3329, %v3333
    %vm3335 = vweird.f32 %v3327
    %vm3336 = vweird.f32 %v3329
    %vm3337 = vmor %vm3335, %vm3336
    %v3338 = vsel %vm3337, %v3329, %v3334
    %v3339 = vrsqrt.pop %v3328
    %v3340 = vmul.f32 %v3339, %v3328
    %v3341 = vmul.f32 %v3340, %v3339
    %v3342 = vmul.f32 0.5, %v3341
    %v3343 = vsub.f32 1.5, %v3342
    %v3344 = vmul.f32 %v3339, %v3343
    %vm3345 = vweird.f32 %v3328
    %vm3346 = vweird.f32 %v3339
    %vm3347 = vmor %vm3345, %vm3346
    %v3348 = vsel %vm3347, %v3339, %v3344
    %v3349 = vmul.f32 %v3315, %v3338
    %v3350 = vmul.f32 %v3316, %v3348
    %3351 = vrot.lane.b32.xlu0 %v3208, 64
    %v3352 = vpop.permute.xlu0 %3351
    %v3354 = vmul.f32 %v3349, %v3352
    %v3355 = vmul.f32 %v3350, %v3352
    %3356 = vrot.lane.b32.xlu0 %v3208, 32
    %v3357 = vpop.permute.xlu0 %3356
    %v3359 = vadd.f32 %v3354, %v3357
    %v3360 = vadd.f32 %v3355, %v3357
    %3361 = vst.msk [vmem:[#allocation10] sm:$0xff] %vm102, %v3359
    %3362 = vst.msk [vmem:[#allocation10 + $0x8] sm:$0xff] %vm102, %v3360
    %v3363 = vrot.slane %v1103, 4
    %v3364 = vsel %vm153, %v3363, %v1099
    %v3365 = vrot.slane %v1099, 4
    %v3366 = vsel %vm153, %v1103, %v3365
    %v3368 = vunpack.c.l.s4 1983009808
    %v3369 = vunpack.c.0.s8 %v3368
    %v3370 = vperm.slane %v3364, %v3369
    %v3372 = vunpack.c.l.s4 1983009808
    %v3373 = vunpack.c.0.s8 %v3372
    %v3374 = vperm.slane %v3366, %v3373
    %v3375 = vrot.slane %v1105, 4
    %v3376 = vsel %vm153, %v3375, %v1101
    %v3377 = vrot.slane %v1101, 4
    %v3378 = vsel %vm153, %v1105, %v3377
    %v3380 = vunpack.c.l.s4 1983009808
    %v3381 = vunpack.c.0.s8 %v3380
    %v3382 = vperm.slane %v3376, %v3381
    %v3384 = vunpack.c.l.s4 1983009808
    %v3385 = vunpack.c.0.s8 %v3384
    %v3386 = vperm.slane %v3378, %v3385
    %v3387 = vrot.slane %v3382, 4
    %v3388 = vsel %vm153, %v3387, %v3370
    %v3389 = vrot.slane %v3370, 4
    %v3390 = vsel %vm153, %v3382, %v3389
    %v3392 = vunpack.c.l.s4 1934713408
    %v3393 = vunpack.c.0.s8 %v3392
    %v3394 = vperm.slane %v3388, %v3393
    %v3396 = vunpack.c.l.s4 1934713408
    %v3397 = vunpack.c.0.s8 %v3396
    %v3398 = vperm.slane %v3390, %v3397
    %v3399 = vrot.slane %v3386, 4
    %v3400 = vsel %vm153, %v3399, %v3374
    %v3401 = vrot.slane %v3374, 4
    %v3402 = vsel %vm153, %v3386, %v3401
    %v3404 = vunpack.c.l.s4 1934713408
    %v3405 = vunpack.c.0.s8 %v3404
    %v3406 = vperm.slane %v3400, %v3405
    %v3408 = vunpack.c.l.s4 1934713408
    %v3409 = vunpack.c.0.s8 %v3408
    %v3410 = vperm.slane %v3402, %v3409
    %v3411 = vrot.slane %v3394, 4
    %v3412 = vsel %vm153, 0.0, %v3411
    %v3413 = vrot.slane %v3398, 4
    %v3414 = vsel %vm153, 0.0, %v3413
    %v3415 = vrot.slane %v3406, 4
    %v3416 = vsel %vm153, 0.0, %v3415
    %v3417 = vrot.slane %v3410, 4
    %v3418 = vsel %vm153, 0.0, %v3417
    %v3419 = vrot.slane %v1104, 4
    %v3420 = vsel %vm153, %v3419, %v1100
    %v3421 = vrot.slane %v1100, 4
    %v3422 = vsel %vm153, %v1104, %v3421
    %v3424 = vunpack.c.l.s4 1983009808
    %v3425 = vunpack.c.0.s8 %v3424
    %v3426 = vperm.slane %v3420, %v3425
    %v3428 = vunpack.c.l.s4 1983009808
    %v3429 = vunpack.c.0.s8 %v3428
    %v3430 = vperm.slane %v3422, %v3429
    %v3431 = vrot.slane %v1106, 4
    %v3432 = vsel %vm153, %v3431, %v1102
    %v3433 = vrot.slane %v1102, 4
    %v3434 = vsel %vm153, %v1106, %v3433
    %v3436 = vunpack.c.l.s4 1983009808
    %v3437 = vunpack.c.0.s8 %v3436
    %v3438 = vperm.slane %v3432, %v3437
    %v3440 = vunpack.c.l.s4 1983009808
    %v3441 = vunpack.c.0.s8 %v3440
    %v3442 = vperm.slane %v3434, %v3441
    %v3443 = vrot.slane %v3438, 4
    %v3444 = vsel %vm153, %v3443, %v3426
    %v3445 = vrot.slane %v3426, 4
    %v3446 = vsel %vm153, %v3438, %v3445
    %v3448 = vunpack.c.l.s4 1934713408
    %v3449 = vunpack.c.0.s8 %v3448
    %v3450 = vperm.slane %v3444, %v3449
    %v3452 = vunpack.c.l.s4 1934713408
    %v3453 = vunpack.c.0.s8 %v3452
    %v3454 = vperm.slane %v3446, %v3453
    %v3455 = vrot.slane %v3442, 4
    %v3456 = vsel %vm153, %v3455, %v3430
    %v3457 = vrot.slane %v3430, 4
    %v3458 = vsel %vm153, %v3442, %v3457
    %v3460 = vunpack.c.l.s4 1934713408
    %v3461 = vunpack.c.0.s8 %v3460
    %v3462 = vperm.slane %v3456, %v3461
    %v3464 = vunpack.c.l.s4 1934713408
    %v3465 = vunpack.c.0.s8 %v3464
    %v3466 = vperm.slane %v3458, %v3465
    %v3467 = vrot.slane %v3450, 4
    %v3468 = vsel %vm153, 0.0, %v3467
    %v3469 = vrot.slane %v3454, 4
    %v3470 = vsel %vm153, 0.0, %v3469
    %v3471 = vrot.slane %v3462, 4
    %v3472 = vsel %vm153, 0.0, %v3471
    %v3473 = vrot.slane %v3466, 4
    %v3474 = vsel %vm153, 0.0, %v3473
    %3476 = vrot.lane.b32.xlu0 %v3412, 16
    %v3477 = vpop.permute.xlu0 %3476
    %3480 = vrot.lane.b32.xlu0 %v3398, 32
    %v3481 = vpop.permute.xlu0 %3480
    %3484 = vrot.lane.b32.xlu0 %v3414, 48
    %v3485 = vpop.permute.xlu0 %3484
    %3488 = vrot.lane.b32.xlu0 %v3406, 64
    %v3489 = vpop.permute.xlu0 %3488
    %3492 = vrot.lane.b32.xlu0 %v3416, 80
    %v3493 = vpop.permute.xlu0 %3492
    %3496 = vrot.lane.b32.xlu0 %v3410, 96
    %v3497 = vpop.permute.xlu0 %3496
    %3500 = vrot.lane.b32.xlu0 %v3418, 112
    %v3501 = vpop.permute.xlu0 %3500
    %3504 = vrot.lane.b32.xlu0 %v3468, 16
    %v3505 = vpop.permute.xlu0 %3504
    %3508 = vrot.lane.b32.xlu0 %v3454, 32
    %v3509 = vpop.permute.xlu0 %3508
    %3512 = vrot.lane.b32.xlu0 %v3470, 48
    %v3513 = vpop.permute.xlu0 %3512
    %3516 = vrot.lane.b32.xlu0 %v3462, 64
    %v3517 = vpop.permute.xlu0 %3516
    %3520 = vrot.lane.b32.xlu0 %v3472, 80
    %v3521 = vpop.permute.xlu0 %3520
    %3524 = vrot.lane.b32.xlu0 %v3466, 96
    %v3525 = vpop.permute.xlu0 %3524
    %3528 = vrot.lane.b32.xlu0 %v3474, 112
    %v3529 = vpop.permute.xlu0 %3528
    %v3531 = vsel %vm1018, %v3394, %v3477
    %v3532 = vsel %vm102, %v3531, %v3481
    %vm3533 = vcmask 392192
    %v3534 = vsel %vm3533, %v3532, %v3485
    %v3535 = vsel %vm1636, %v3534, %v3489
    %vm3536 = vcmask 654336
    %v3537 = vsel %vm3536, %v3535, %v3493
    %vm3538 = vcmask 785408
    %v3539 = vsel %vm3538, %v3537, %v3497
    %vm3540 = vcmask 916480
    %v3541 = vsel %vm3540, %v3539, %v3501
    %v3542 = vsel %vm1018, %v3450, %v3505
    %v3543 = vsel %vm102, %v3542, %v3509
    %v3544 = vsel %vm3533, %v3543, %v3513
    %v3545 = vsel %vm1636, %v3544, %v3517
    %v3546 = vsel %vm3536, %v3545, %v3521
    %v3547 = vsel %vm3538, %v3546, %v3525
    %v3548 = vsel %vm3540, %v3547, %v3529
    %v3549 = vrot.slane %v2743, 4
    %v3550 = vsel %vm153, %v3549, %v2739
    %v3551 = vrot.slane %v2739, 4
    %v3552 = vsel %vm153, %v2743, %v3551
    %v3554 = vunpack.c.l.s4 1983009808
    %v3555 = vunpack.c.0.s8 %v3554
    %v3556 = vperm.slane %v3550, %v3555
    %v3558 = vunpack.c.l.s4 1983009808
    %v3559 = vunpack.c.0.s8 %v3558
    %v3560 = vperm.slane %v3552, %v3559
    %v3561 = vrot.slane %v2745, 4
    %v3562 = vsel %vm153, %v3561, %v2741
    %v3563 = vrot.slane %v2741, 4
    %v3564 = vsel %vm153, %v2745, %v3563
    %v3566 = vunpack.c.l.s4 1983009808
    %v3567 = vunpack.c.0.s8 %v3566
    %v3568 = vperm.slane %v3562, %v3567
    %v3570 = vunpack.c.l.s4 1983009808
    %v3571 = vunpack.c.0.s8 %v3570
    %v3572 = vperm.slane %v3564, %v3571
    %v3573 = vrot.slane %v3568, 4
    %v3574 = vsel %vm153, %v3573, %v3556
    %v3575 = vrot.slane %v3556, 4
    %v3576 = vsel %vm153, %v3568, %v3575
    %v3578 = vunpack.c.l.s4 1934713408
    %v3579 = vunpack.c.0.s8 %v3578
    %v3580 = vperm.slane %v3574, %v3579
    %v3582 = vunpack.c.l.s4 1934713408
    %v3583 = vunpack.c.0.s8 %v3582
    %v3584 = vperm.slane %v3576, %v3583
    %v3585 = vrot.slane %v3572, 4
    %v3586 = vsel %vm153, %v3585, %v3560
    %v3587 = vrot.slane %v3560, 4
    %v3588 = vsel %vm153, %v3572, %v3587
    %v3590 = vunpack.c.l.s4 1934713408
    %v3591 = vunpack.c.0.s8 %v3590
    %v3592 = vperm.slane %v3586, %v3591
    %v3594 = vunpack.c.l.s4 1934713408
    %v3595 = vunpack.c.0.s8 %v3594
    %v3596 = vperm.slane %v3588, %v3595
    %v3597 = vrot.slane %v3580, 4
    %v3598 = vsel %vm153, 0.0, %v3597
    %v3599 = vrot.slane %v3584, 4
    %v3600 = vsel %vm153, 0.0, %v3599
    %v3601 = vrot.slane %v3592, 4
    %v3602 = vsel %vm153, 0.0, %v3601
    %v3603 = vrot.slane %v3596, 4
    %v3604 = vsel %vm153, 0.0, %v3603
    %v3605 = vrot.slane %v2744, 4
    %v3606 = vsel %vm153, %v3605, %v2740
    %v3607 = vrot.slane %v2740, 4
    %v3608 = vsel %vm153, %v2744, %v3607
    %v3610 = vunpack.c.l.s4 1983009808
    %v3611 = vunpack.c.0.s8 %v3610
    %v3612 = vperm.slane %v3606, %v3611
    %v3614 = vunpack.c.l.s4 1983009808
    %v3615 = vunpack.c.0.s8 %v3614
    %v3616 = vperm.slane %v3608, %v3615
    %v3617 = vrot.slane %v2746, 4
    %v3618 = vsel %vm153, %v3617, %v2742
    %v3619 = vrot.slane %v2742, 4
    %v3620 = vsel %vm153, %v2746, %v3619
    %v3622 = vunpack.c.l.s4 1983009808
    %v3623 = vunpack.c.0.s8 %v3622
    %v3624 = vperm.slane %v3618, %v3623
    %v3626 = vunpack.c.l.s4 1983009808
    %v3627 = vunpack.c.0.s8 %v3626
    %v3628 = vperm.slane %v3620, %v3627
    %v3629 = vrot.slane %v3624, 4
    %v3630 = vsel %vm153, %v3629, %v3612
    %v3631 = vrot.slane %v3612, 4
    %v3632 = vsel %vm153, %v3624, %v3631
    %v3634 = vunpack.c.l.s4 1934713408
    %v3635 = vunpack.c.0.s8 %v3634
    %v3636 = vperm.slane %v3630, %v3635
    %v3638 = vunpack.c.l.s4 1934713408
    %v3639 = vunpack.c.0.s8 %v3638
    %v3640 = vperm.slane %v3632, %v3639
    %v3641 = vrot.slane %v3628, 4
    %v3642 = vsel %vm153, %v3641, %v3616
    %v3643 = vrot.slane %v3616, 4
    %v3644 = vsel %vm153, %v3628, %v3643
    %v3646 = vunpack.c.l.s4 1934713408
    %v3647 = vunpack.c.0.s8 %v3646
    %v3648 = vperm.slane %v3642, %v3647
    %v3650 = vunpack.c.l.s4 1934713408
    %v3651 = vunpack.c.0.s8 %v3650
    %v3652 = vperm.slane %v3644, %v3651
    %v3653 = vrot.slane %v3636, 4
    %v3654 = vsel %vm153, 0.0, %v3653
    %v3655 = vrot.slane %v3640, 4
    %v3656 = vsel %vm153, 0.0, %v3655
    %v3657 = vrot.slane %v3648, 4
    %v3658 = vsel %vm153, 0.0, %v3657
    %v3659 = vrot.slane %v3652, 4
    %v3660 = vsel %vm153, 0.0, %v3659
    %3662 = vrot.lane.b32.xlu0 %v3598, 16
    %v3663 = vpop.permute.xlu0 %3662
    %3666 = vrot.lane.b32.xlu0 %v3584, 32
    %v3667 = vpop.permute.xlu0 %3666
    %3670 = vrot.lane.b32.xlu0 %v3600, 48
    %v3671 = vpop.permute.xlu0 %3670
    %3674 = vrot.lane.b32.xlu0 %v3592, 64
    %v3675 = vpop.permute.xlu0 %3674
    %3678 = vrot.lane.b32.xlu0 %v3602, 80
    %v3679 = vpop.permute.xlu0 %3678
    %3682 = vrot.lane.b32.xlu0 %v3596, 96
    %v3683 = vpop.permute.xlu0 %3682
    %3686 = vrot.lane.b32.xlu0 %v3604, 112
    %v3687 = vpop.permute.xlu0 %3686
    %3690 = vrot.lane.b32.xlu0 %v3654, 16
    %v3691 = vpop.permute.xlu0 %3690
    %3694 = vrot.lane.b32.xlu0 %v3640, 32
    %v3695 = vpop.permute.xlu0 %3694
    %3698 = vrot.lane.b32.xlu0 %v3656, 48
    %v3699 = vpop.permute.xlu0 %3698
    %3702 = vrot.lane.b32.xlu0 %v3648, 64
    %v3703 = vpop.permute.xlu0 %3702
    %3706 = vrot.lane.b32.xlu0 %v3658, 80
    %v3707 = vpop.permute.xlu0 %3706
    %3710 = vrot.lane.b32.xlu0 %v3652, 96
    %v3711 = vpop.permute.xlu0 %3710
    %3714 = vrot.lane.b32.xlu0 %v3660, 112
    %v3715 = vpop.permute.xlu0 %3714
    %v3717 = vsel %vm1018, %v3580, %v3663
    %v3718 = vsel %vm102, %v3717, %v3667
    %v3719 = vsel %vm3533, %v3718, %v3671
    %v3720 = vsel %vm1636, %v3719, %v3675
    %v3721 = vsel %vm3536, %v3720, %v3679
    %v3722 = vsel %vm3538, %v3721, %v3683
    %v3723 = vsel %vm3540, %v3722, %v3687
    %v3724 = vsel %vm1018, %v3636, %v3691
    %v3725 = vsel %vm102, %v3724, %v3695
    %v3726 = vsel %vm3533, %v3725, %v3699
    %v3727 = vsel %vm1636, %v3726, %v3703
    %v3728 = vsel %vm3536, %v3727, %v3707
    %v3729 = vsel %vm3538, %v3728, %v3711
    %v3730 = vsel %vm3540, %v3729, %v3715
    %v3735 = vrot.slane %v3548, 4
    %v3736 = vrot.slane %v3730, 4
    %vm3737 = vcmask 1043456
    %v3738 = vsel %vm3737, %v3541, %v3735
    %v3739 = vsel %vm3737, %v3723, %v3736
    %3742 = vst [vmem:[#allocation11] sm:$0xff] %v3738
    %3743 = vst [vmem:[#allocation11 + $0x8] sm:$0xff] %v3739
    // Predicated region
    $region34: #{tpu_custom_call.1} parent=1 // pred_check
      _
    $region35: #{tpu_custom_call.1} parent=1 // pred_check_branch
      %3745 = sbr.rel (0) target = $region37
    $region36: #{tpu_custom_call.1} parent=1 // pred_region
      %3747 = vsyncadd [#allocation4], 0
      %s3748 = sshll.u32 [#allocation10], 4
      %s3749 = int_to_ptr.vmem [resolvable:$true] %s3748
      %s3750 = sshll.u32 %s4, 4
      %s3751 = int_to_ptr.hbm [resolvable:$true] %s3750
      %3756 = dma.vmem_to_hbm [thread:$0]  %s3749, 256, %s3751, [#allocation4], 128, 128, 8
    $region37: #{tpu_custom_call.1} parent=1 // pred_fallthru
      _
    // Predicated region
    $region38: #{tpu_custom_call.1} parent=1 // pred_check
      _
    $region39: #{tpu_custom_call.1} parent=1 // pred_check_branch
      %3758 = sbr.rel (0) target = $region41
    $region40: #{tpu_custom_call.1} parent=1 // pred_region
      %3760 = vsyncadd [#allocation12], 0
      %s3761 = sshll.u32 [#allocation11], 4
      %s3762 = int_to_ptr.vmem [resolvable:$true] %s3761
      %s3763 = sshll.u32 %s5, 4
      %s3764 = int_to_ptr.hbm [resolvable:$true] %s3763
      %3769 = dma.vmem_to_hbm [thread:$0]  %s3762, 256, %s3764, [#allocation12], 128, 128, 8
    $region41: #{tpu_custom_call.1} parent=1 // pred_fallthru
      _
    // Predicated region
    $region42: #{tpu_custom_call.1} parent=1 // pred_check
      _
    $region43: #{tpu_custom_call.1} parent=1 // pred_check_branch
      %3771 = sbr.rel (0) target = $region45
    $region44: #{tpu_custom_call.1} parent=1 // pred_region
      %3773 = dma.done [#allocation4], 256
    $region45: #{tpu_custom_call.1} parent=1 // pred_fallthru
      _
    // Predicated region
    $region46: #{tpu_custom_call.1} parent=1 // pred_check
      _
    $region47: #{tpu_custom_call.1} parent=1 // pred_check_branch
      %3775 = sbr.rel (0) target = $region49
    $region48: #{tpu_custom_call.1} parent=1 // pred_region
      %3777 = dma.done [#allocation12], 256
    $region49: #{tpu_custom_call.1} parent=1 // pred_fallthru
      _
    %3778 = vsyncpa [#allocation3], 1
    %3779 = vsyncpa [#allocation6], 1
    %3780 = vsyncpa [#allocation9], 1
    %3781 = vsyncpa [#allocation4], 1
    %3782 = vsyncpa [#allocation12], 1

</llo_original>
